<compile_context>
chip_gen: v7x
topology: tpu7x:2x2x1
jax: 0.10.0
libtpu: 0.0.40
codegen_flags: <defaults>
</compile_context>

<pallas_src>
import functools

import jax
import jax.numpy as jnp
from jax.experimental import pallas as pl
from jax.experimental.pallas import tpu as pltpu


# ----------------------------------------------------------------------------- target info

def _tpu_caps():
    """Per-generation tiling / VMEM budgets (review: no flat constant)."""
    kind = ""
    try:
        kind = jax.devices()[0].device_kind.lower()
    except Exception:
        pass
    if ("v5" in kind) or ("v6" in kind):
        # 128 MiB VMEM: larger row tiles amortize per-step overhead / deepen DMA overlap.
        return {"vmem_cap": 96 * 1024 * 1024, "conv_row_tile": 1024}
    # v7x (64 MiB VMEM per TensorCore) and unknown targets: conservative budget.
    return {"vmem_cap": 48 * 1024 * 1024, "conv_row_tile": 512}


def _round_up(x, m):
    return ((x + m - 1) // m) * m


def _clamp_vmem(request_bytes, cap):
    return int(min(cap, max(32 * 1024 * 1024, int(2.0 * request_bytes))))


# ----------------------------------------------------------------------------- conv kernel

def conv_bn_relu_pool_kernel(win_ref, w_ref, shift_ref, o_ref):
    """Fused Conv2d(3x3, pad=1) + BatchNorm(eval, scale folded into W) + ReLU + MaxPool2d(2,2).

    win_ref:   (TQ, 16*Cin)  bf16 -- per pooled output position, its 4x4 input window;
                                     window position k = 4*d + e (row-major), channels minor.
    w_ref:     (9*Cin, Cout) bf16 -- conv weights, tap (dy,dx) row-major, BN scale folded in.
    shift_ref: (1, Cout)     f32  -- folded BN shift = beta + (bias - mean) * gamma/sqrt(var+eps).
    o_ref:     (TQ, Cout)    bf16 -- pooled activations (native Cout, no lane padding).
    """
    cin = w_ref.shape[0] // 9
    tq = o_ref.shape[0]
    win = win_ref[...]

    # Exact 9-tap im2col slabs for the four 2x2 pool slots, built in VMEM from lane slices of
    # the already-loaded window tile (the activation is never im2col-expanded in HBM).
    slabs = []
    for dh in range(2):
        for dw in range(2):
            taps = [
                win[:, (4 * (dh + dy) + (dw + dx)) * cin:(4 * (dh + dy) + (dw + dx) + 1) * cin]
                for dy in range(3) for dx in range(3)
            ]
            slabs.append(jnp.concatenate(taps, axis=-1))            # (TQ, 9*Cin)

    # One MXU pass for all four pool slots (RHS staged once).
    lhs = jnp.concatenate(slabs, axis=0)                            # (4*TQ, 9*Cin)
    y = jnp.dot(lhs, w_ref[...], preferred_element_type=jnp.float32)

    # Max-pool first, then a single shift + ReLU: relu(max(a,b)+s) == max(relu(a+s), relu(b+s)).
    pooled = jnp.maximum(jnp.maximum(y[0:tq], y[tq:2 * tq]),
                         jnp.maximum(y[2 * tq:3 * tq], y[3 * tq:4 * tq]))
    o_ref[...] = jnp.maximum(pooled + shift_ref[...], 0.0).astype(o_ref.dtype)


def _conv_vmem_bytes(tq, cin, cout, cap):
    kdim = 9 * cin
    io = (2 * tq * 16 * cin * 2       # window tile, double-buffered, bf16
          + 2 * kdim * cout * 2       # folded weights
          + 2 * cout * 4              # folded shift
          + 2 * tq * cout * 2)        # pooled output tile
    temps = (2 * 4 * tq * kdim * 2    # in-VMEM im2col slabs (+ concat copy)
             + 4 * tq * cout * 4      # f32 pre-pool matmul result
             + 2 * tq * cout * 4)     # pooled f32 epilogue
    return _clamp_vmem(io + temps, cap)


def _fold_bn(w, b, gamma, beta, mean, var, eps):
    inv_std = gamma * jax.lax.rsqrt(var + eps)
    shift = beta + (b - mean) * inv_std
    return inv_std, shift


def conv_block_pallas(x_nhwc, w, b, gamma, beta, mean, var, *, row_tile, vmem_cap, eps=1e-5):
    """[Conv2d(3x3,p=1) -> BN(eval) -> ReLU -> MaxPool(2,2)] as one tiled Pallas GEMM kernel."""
    n, h, wd, cin = x_nhwc.shape
    cout = w.shape[0]
    hh, wh = h // 2, wd // 2
    q = n * hh * wh
    kdim = 9 * cin

    inv_std, shift = _fold_bn(w, b, gamma, beta, mean, var, eps)
    w_flat = (jnp.transpose(w, (2, 3, 1, 0)).reshape(kdim, cout)
              * inv_std[None, :]).astype(jnp.bfloat16)              # (dy,dx)-major, cin-minor
    shift = shift.reshape(1, cout).astype(jnp.float32)

    # 4x4 input window per pooled output position: q-th row holds x_pad[2i+d, 2j+e, :] at lane
    # group k = 4*d + e.  (4x footprint vs 9x for full im2col, and no transpose pass.)
    xp = jnp.pad(x_nhwc, ((0, 0), (1, 1), (1, 1), (0, 0)))
    wins = [xp[:, d:d + 2 * hh:2, e:e + 2 * wh:2, :] for d in range(4) for e in range(4)]
    xw = jnp.stack(wins, axis=3).reshape(q, 16 * cin).astype(jnp.bfloat16)

    # Fixed row tile; pad Q up (garbage rows sliced off) instead of divisor hunting.
    tq = min(row_tile, _round_up(q, 8))
    q_pad = _round_up(q, tq)
    if q_pad != q:
        xw = jnp.pad(xw, ((0, q_pad - q), (0, 0)))
    grid = (q_pad // tq,)

    flops = 2 * q_pad * 4 * kdim * cout
    bytes_accessed = xw.size * 2 + w_flat.size * 2 + shift.size * 4 + q_pad * cout * 2

    pooled = pl.pallas_call(
        conv_bn_relu_pool_kernel,
        out_shape=jax.ShapeDtypeStruct((q_pad, cout), jnp.bfloat16),
        grid_spec=pltpu.PrefetchScalarGridSpec(
            num_scalar_prefetch=0,
            grid=grid,
            in_specs=[
                pl.BlockSpec((tq, 16 * cin), lambda i: (i, 0)),     # streamed window rows
                pl.BlockSpec((kdim, cout), lambda i: (0, 0)),       # weights: VMEM-resident
                pl.BlockSpec((1, cout), lambda i: (0, 0)),          # shift:   VMEM-resident
            ],
            out_specs=pl.BlockSpec((tq, cout), lambda i: (i, 0)),   # native Cout (no padding)
        ),
        compiler_params=pltpu.CompilerParams(
            dimension_semantics=("parallel",),                      # megacore-shardable
            vmem_limit_bytes=_conv_vmem_bytes(tq, cin, cout, vmem_cap),
        ),
        cost_estimate=pl.CostEstimate(flops=flops, transcendentals=0,
                                      bytes_accessed=bytes_accessed),
    )(xw, w_flat, shift)

    if q_pad != q:
        pooled = pooled[:q]
    return pooled.reshape(n, hh, wh, cout)


def conv_block_xla(x_nhwc, w, b, gamma, beta, mean, var, eps=1e-5):
    """First conv block (tiny Cin): XLA native conv + fused BN/ReLU/pool (per perf review —
    K=9*Cin is too small for an efficient MXU GEMM formulation)."""
    n, h, wd, _ = x_nhwc.shape
    cout = w.shape[0]
    inv_std, shift = _fold_bn(w, b, gamma, beta, mean, var, eps)
    w_hwio = (jnp.transpose(w, (2, 3, 1, 0)) * inv_std[None, None, None, :]).astype(jnp.bfloat16)
    y = jax.lax.conv_general_dilated(
        x_nhwc.astype(jnp.bfloat16), w_hwio, window_strides=(1, 1), padding="SAME",
        dimension_numbers=("NHWC", "HWIO", "NHWC"),
        preferred_element_type=jnp.float32)
    y = jnp.maximum(y + shift[None, None, None, :].astype(jnp.float32), 0.0)
    y = y.reshape(n, h // 2, 2, wd // 2, 2, cout).max(axis=(2, 4))
    return y.astype(jnp.bfloat16)


# ----------------------------------------------------------------------------- FC head

def fc_kernel(x_ref, w1_ref, b1_ref, w2_ref, b2_ref, o_ref, h_acc, *, binary):
    """(M-parallel, K-tiled) Linear -> ReLU -> (Dropout=identity in eval) -> Linear
    [-> Sigmoid if binary]; hidden/accumulator/fc2 stay f32."""
    k = pl.program_id(1)

    @pl.when(k == 0)
    def _():
        h_acc[...] = jnp.zeros_like(h_acc)

    h_acc[...] += jnp.dot(x_ref[...], w1_ref[...], preferred_element_type=jnp.float32)

    @pl.when(k == pl.num_programs(1) - 1)
    def _():
        h = jnp.maximum(h_acc[...] + b1_ref[...], 0.0)
        out = jnp.dot(h, w2_ref[...], preferred_element_type=jnp.float32) + b2_ref[...]
        if binary:
            out = jax.nn.sigmoid(out)      # padded lanes see sigmoid(0)=0.5; sliced off outside
        o_ref[...] = out


def _pick_k_tile(fc_in):
    for t in (2048, 1024, 512, 256, 128):
        if fc_in >= t and fc_in % t == 0:
            return t
    return fc_in


def fc_forward(x2d, w1, b1, w2, b2, *, binary, vmem_cap):
    n, fc_in = x2d.shape
    hid = w1.shape[1]
    out_dim = w2.shape[1]
    out_pad = _round_up(max(out_dim, 128), 128)

    if n <= 256:
        tm = _round_up(n, 8)
        n_pad = tm
    else:
        tm = 256
        n_pad = _round_up(n, tm)
    m_steps = n_pad // tm
    tk = _pick_k_tile(fc_in)
    ksteps = fc_in // tk

    x_p = x2d.astype(jnp.bfloat16)
    if n_pad != n:
        x_p = jnp.pad(x_p, ((0, n_pad - n), (0, 0)))
    w1_bf = w1.astype(jnp.bfloat16)
    b1_r = b1.reshape(1, hid).astype(jnp.float32)
    w2_p = jnp.pad(w2, ((0, 0), (0, out_pad - out_dim))).astype(jnp.float32)
    b2_p = jnp.pad(b2, (0, out_pad - out_dim)).reshape(1, out_pad).astype(jnp.float32)

    w1_kwargs = {}
    n_w1_buf = 2
    if ksteps >= 3:
        w1_kwargs["pipeline_mode"] = pl.Buffered(3)     # deeper buffering of streamed w1 tiles
        n_w1_buf = 3

    vmem_req = (2 * tm * tk * 2 + n_w1_buf * tk * hid * 2 + 2 * hid * 4
                + 2 * hid * out_pad * 4 + 2 * out_pad * 4
                + 2 * tm * out_pad * 4 + 2 * tm * hid * 4)
    vmem_bytes = _clamp_vmem(vmem_req, vmem_cap)

    flops = 2 * n_pad * fc_in * hid + 2 * n_pad * hid * out_pad
    bytes_accessed = (n_pad * fc_in * 2 + m_steps * fc_in * hid * 2
                      + hid * out_pad * 4 + n_pad * out_pad * 4)

    out = pl.pallas_call(
        functools.partial(fc_kernel, binary=binary),
        out_shape=jax.ShapeDtypeStruct((n_pad, out_pad), jnp.float32),
        grid_spec=pltpu.PrefetchScalarGridSpec(
            num_scalar_prefetch=0,
            grid=(m_steps, ksteps),
            in_specs=[
                pl.BlockSpec((tm, tk), lambda m, k: (m, k)),
                pl.BlockSpec((tk, hid), lambda m, k: (k, 0), **w1_kwargs),
                pl.BlockSpec((1, hid), lambda m, k: (0, 0)),
                pl.BlockSpec((hid, out_pad), lambda m, k: (0, 0)),
                pl.BlockSpec((1, out_pad), lambda m, k: (0, 0)),
            ],
            out_specs=pl.BlockSpec((tm, out_pad), lambda m, k: (m, 0)),
            scratch_shapes=[pltpu.VMEM((tm, hid), jnp.float32)],     # f32 accumulator per M tile
        ),
        compiler_params=pltpu.CompilerParams(
            dimension_semantics=("parallel", "arbitrary"),           # M parallel, K reduction
            vmem_limit_bytes=vmem_bytes,
        ),
        cost_estimate=pl.CostEstimate(flops=flops,
                                      transcendentals=(n_pad * out_pad if binary else 0),
                                      bytes_accessed=bytes_accessed),
    )(x_p, w1_bf, b1_r, w2_p, b2_p)

    return out[:n, :out_dim]


# ----------------------------------------------------------------------------- model

CONV_CHANNELS = (32, 64, 128, 256)


def init_params(key, image_size, image_channels, num_classes):
    if image_size % 16 != 0:
        raise ValueError("image_size must be divisible by 16.")
    final = image_size // 16

    def nxt():
        nonlocal key
        key, sub = jax.random.split(key)
        return sub

    conv_params = []
    cin = image_channels
    for cout in CONV_CHANNELS:
        w = 0.1 * jax.random.normal(nxt(), (cout, cin, 3, 3), jnp.float32)
        b = 0.1 * jax.random.normal(nxt(), (cout,), jnp.float32)
        gamma = 1.0 + 0.1 * jax.random.normal(nxt(), (cout,), jnp.float32)
        beta = 0.1 * jax.random.normal(nxt(), (cout,), jnp.float32)
        mean = 0.05 * jax.random.normal(nxt(), (cout,), jnp.float32)
        var = 0.5 + jax.random.uniform(nxt(), (cout,), jnp.float32)
        conv_params.append((w, b, gamma, beta, mean, var))
        cin = cout

    fc_in = 256 * final * final
    fc_out = 1 if num_classes == 2 else num_classes
    return {
        "conv": conv_params,
        "fc1_w": 0.05 * jax.random.normal(nxt(), (fc_in, 1024), jnp.float32),
        "fc1_b": 0.05 * jax.random.normal(nxt(), (1024,), jnp.float32),
        "fc2_w": 0.05 * jax.random.normal(nxt(), (1024, fc_out), jnp.float32),
        "fc2_b": 0.05 * jax.random.normal(nxt(), (fc_out,), jnp.float32),
    }


def classifier_forward(params, x_nchw, *, num_classes):
    caps = _tpu_caps()
    x = jnp.transpose(x_nchw, (0, 2, 3, 1)).astype(jnp.bfloat16)     # NCHW -> NHWC
    for (w, b, g, be, m, v) in params["conv"]:
        cin = x.shape[-1]
        if cin >= 8 and (16 * cin) % 128 == 0:
            x = conv_block_pallas(x, w, b, g, be, m, v,
                                  row_tile=caps["conv_row_tile"], vmem_cap=caps["vmem_cap"])
        else:
            x = conv_block_xla(x, w, b, g, be, m, v)                 # Cin=3 first block
    n = x.shape[0]
    x = jnp.transpose(x, (0, 3, 1, 2)).reshape(n, -1)                # PyTorch Flatten (C,H,W) order
    return fc_forward(x, params["fc1_w"], params["fc1_b"],
                      params["fc2_w"], params["fc2_b"],
                      binary=(num_classes == 2), vmem_cap=caps["vmem_cap"])


def classifier_reference(params, x_nchw, *, num_classes, eps=1e-5):
    """Pure-XLA f32 reference (same eval-mode semantics) for a numerical sanity check."""
    x = jnp.transpose(x_nchw, (0, 2, 3, 1)).astype(jnp.float32)
    for (w, b, g, be, m, v) in params["conv"]:
        inv = g * jax.lax.rsqrt(v + eps)
        w_hwio = jnp.transpose(w, (2, 3, 1, 0)) * inv[None, None, None, :]
        shift = be + (b - m) * inv
        y = jax.lax.conv_general_dilated(x, w_hwio, (1, 1), "SAME",
                                         dimension_numbers=("NHWC", "HWIO", "NHWC"))
        y = jnp.maximum(y + shift, 0.0)
        n, h, wd, c = y.shape
        x = y.reshape(n, h // 2, 2, wd // 2, 2, c).max(axis=(2, 4))
    n = x.shape[0]
    x = jnp.transpose(x, (0, 3, 1, 2)).reshape(n, -1)
    h = jnp.maximum(x @ params["fc1_w"] + params["fc1_b"], 0.0)
    out = h @ params["fc2_w"] + params["fc2_b"]
    if num_classes == 2:
        out = jax.nn.sigmoid(out)
    return out


# ----------------------------------------------------------------------------- main

if __name__ == "__main__":
    image_size, image_channels, num_classes, batch = 16, 3, 10, 2

    root = jax.random.PRNGKey(0)
    k_params, k_x = jax.random.split(root)
    params = init_params(k_params, image_size, image_channels, num_classes)
    x = jax.random.normal(k_x, (batch, image_channels, image_size, image_size), jnp.float32)

    fwd = jax.jit(functools.partial(classifier_forward, num_classes=num_classes))
    logits = fwd(params, x)
    jax.block_until_ready(logits)

    assert logits.shape == (batch, num_classes)
    assert bool(jnp.all(jnp.isfinite(logits)))

    ref = jax.block_until_ready(classifier_reference(params, x, num_classes=num_classes))
    max_err = float(jnp.max(jnp.abs(logits.astype(jnp.float32) - ref)))
    tol = 0.15 * max(1.0, float(jnp.max(jnp.abs(ref))))   # bf16 GEMM path vs f32 reference
    assert max_err <= tol, f"mismatch vs reference: {max_err} > {tol}"

    print("KERNEL_OK")
</pallas_src>

<mosaic_0001>
module attributes {stable_mosaic.version = 11 : i64} {
  func.func @conv_bn_relu_pool_kernel(%arg0: i32, %arg1: memref<32x512xbf16, #tpu.memory_space<vmem>>, %arg2: memref<288x64xbf16, #tpu.memory_space<vmem>>, %arg3: memref<1x64xf32, #tpu.memory_space<vmem>>, %arg4: memref<32x64xbf16, #tpu.memory_space<vmem>>) attributes {dimension_semantics = [#tpu.dimension_semantics<parallel>], iteration_bounds = array<i64: 1>, scalar_prefetch = 0 : i64, scratch_operands = 0 : i64, tpu.core_type = #tpu.core_type<tc>, window_params = [{transform_indices = @transform_0, window_bounds = array<i64: 32, 512>}, {pipeline_mode = #tpu.pipeline_mode<synchronous>, transform_indices = @transform_1, window_bounds = array<i64: 288, 64>}, {pipeline_mode = #tpu.pipeline_mode<synchronous>, transform_indices = @transform_2, window_bounds = array<i64: 1, 64>}, {transform_indices = @transform_3, window_bounds = array<i64: 32, 64>}]} {
    %c0 = arith.constant 0 : index
    %c0_0 = arith.constant 0 : index
    %0 = vector.load %arg1[%c0, %c0_0] : memref<32x512xbf16, #tpu.memory_space<vmem>>, vector<32x512xbf16>
    %1 = vector.extract_strided_slice %0 {offsets = [0, 0], sizes = [32, 32], strides = [1, 1]} : vector<32x512xbf16> to vector<32x32xbf16>
    %2 = vector.extract_strided_slice %0 {offsets = [0, 32], sizes = [32, 32], strides = [1, 1]} : vector<32x512xbf16> to vector<32x32xbf16>
    %3 = vector.extract_strided_slice %0 {offsets = [0, 64], sizes = [32, 32], strides = [1, 1]} : vector<32x512xbf16> to vector<32x32xbf16>
    %4 = vector.extract_strided_slice %0 {offsets = [0, 128], sizes = [32, 32], strides = [1, 1]} : vector<32x512xbf16> to vector<32x32xbf16>
    %5 = vector.extract_strided_slice %0 {offsets = [0, 160], sizes = [32, 32], strides = [1, 1]} : vector<32x512xbf16> to vector<32x32xbf16>
    %6 = vector.extract_strided_slice %0 {offsets = [0, 192], sizes = [32, 32], strides = [1, 1]} : vector<32x512xbf16> to vector<32x32xbf16>
    %7 = vector.extract_strided_slice %0 {offsets = [0, 256], sizes = [32, 32], strides = [1, 1]} : vector<32x512xbf16> to vector<32x32xbf16>
    %8 = vector.extract_strided_slice %0 {offsets = [0, 288], sizes = [32, 32], strides = [1, 1]} : vector<32x512xbf16> to vector<32x32xbf16>
    %9 = vector.extract_strided_slice %0 {offsets = [0, 320], sizes = [32, 32], strides = [1, 1]} : vector<32x512xbf16> to vector<32x32xbf16>
    %10 = tpu.concatenate %1, %2, %3, %4, %5, %6, %7, %8, %9 in 1 : vector<32x32xbf16>, vector<32x32xbf16>, vector<32x32xbf16>, vector<32x32xbf16>, vector<32x32xbf16>, vector<32x32xbf16>, vector<32x32xbf16>, vector<32x32xbf16>, vector<32x32xbf16> -> vector<32x288xbf16>
    %11 = vector.extract_strided_slice %0 {offsets = [0, 32], sizes = [32, 32], strides = [1, 1]} : vector<32x512xbf16> to vector<32x32xbf16>
    %12 = vector.extract_strided_slice %0 {offsets = [0, 64], sizes = [32, 32], strides = [1, 1]} : vector<32x512xbf16> to vector<32x32xbf16>
    %13 = vector.extract_strided_slice %0 {offsets = [0, 96], sizes = [32, 32], strides = [1, 1]} : vector<32x512xbf16> to vector<32x32xbf16>
    %14 = vector.extract_strided_slice %0 {offsets = [0, 160], sizes = [32, 32], strides = [1, 1]} : vector<32x512xbf16> to vector<32x32xbf16>
    %15 = vector.extract_strided_slice %0 {offsets = [0, 192], sizes = [32, 32], strides = [1, 1]} : vector<32x512xbf16> to vector<32x32xbf16>
    %16 = vector.extract_strided_slice %0 {offsets = [0, 224], sizes = [32, 32], strides = [1, 1]} : vector<32x512xbf16> to vector<32x32xbf16>
    %17 = vector.extract_strided_slice %0 {offsets = [0, 288], sizes = [32, 32], strides = [1, 1]} : vector<32x512xbf16> to vector<32x32xbf16>
    %18 = vector.extract_strided_slice %0 {offsets = [0, 320], sizes = [32, 32], strides = [1, 1]} : vector<32x512xbf16> to vector<32x32xbf16>
    %19 = vector.extract_strided_slice %0 {offsets = [0, 352], sizes = [32, 32], strides = [1, 1]} : vector<32x512xbf16> to vector<32x32xbf16>
    %20 = tpu.concatenate %11, %12, %13, %14, %15, %16, %17, %18, %19 in 1 : vector<32x32xbf16>, vector<32x32xbf16>, vector<32x32xbf16>, vector<32x32xbf16>, vector<32x32xbf16>, vector<32x32xbf16>, vector<32x32xbf16>, vector<32x32xbf16>, vector<32x32xbf16> -> vector<32x288xbf16>
    %21 = vector.extract_strided_slice %0 {offsets = [0, 128], sizes = [32, 32], strides = [1, 1]} : vector<32x512xbf16> to vector<32x32xbf16>
    %22 = vector.extract_strided_slice %0 {offsets = [0, 160], sizes = [32, 32], strides = [1, 1]} : vector<32x512xbf16> to vector<32x32xbf16>
    %23 = vector.extract_strided_slice %0 {offsets = [0, 192], sizes = [32, 32], strides = [1, 1]} : vector<32x512xbf16> to vector<32x32xbf16>
    %24 = vector.extract_strided_slice %0 {offsets = [0, 256], sizes = [32, 32], strides = [1, 1]} : vector<32x512xbf16> to vector<32x32xbf16>
    %25 = vector.extract_strided_slice %0 {offsets = [0, 288], sizes = [32, 32], strides = [1, 1]} : vector<32x512xbf16> to vector<32x32xbf16>
    %26 = vector.extract_strided_slice %0 {offsets = [0, 320], sizes = [32, 32], strides = [1, 1]} : vector<32x512xbf16> to vector<32x32xbf16>
    %27 = vector.extract_strided_slice %0 {offsets = [0, 384], sizes = [32, 32], strides = [1, 1]} : vector<32x512xbf16> to vector<32x32xbf16>
    %28 = vector.extract_strided_slice %0 {offsets = [0, 416], sizes = [32, 32], strides = [1, 1]} : vector<32x512xbf16> to vector<32x32xbf16>
    %29 = vector.extract_strided_slice %0 {offsets = [0, 448], sizes = [32, 32], strides = [1, 1]} : vector<32x512xbf16> to vector<32x32xbf16>
    %30 = tpu.concatenate %21, %22, %23, %24, %25, %26, %27, %28, %29 in 1 : vector<32x32xbf16>, vector<32x32xbf16>, vector<32x32xbf16>, vector<32x32xbf16>, vector<32x32xbf16>, vector<32x32xbf16>, vector<32x32xbf16>, vector<32x32xbf16>, vector<32x32xbf16> -> vector<32x288xbf16>
    %31 = vector.extract_strided_slice %0 {offsets = [0, 160], sizes = [32, 32], strides = [1, 1]} : vector<32x512xbf16> to vector<32x32xbf16>
    %32 = vector.extract_strided_slice %0 {offsets = [0, 192], sizes = [32, 32], strides = [1, 1]} : vector<32x512xbf16> to vector<32x32xbf16>
    %33 = vector.extract_strided_slice %0 {offsets = [0, 224], sizes = [32, 32], strides = [1, 1]} : vector<32x512xbf16> to vector<32x32xbf16>
    %34 = vector.extract_strided_slice %0 {offsets = [0, 288], sizes = [32, 32], strides = [1, 1]} : vector<32x512xbf16> to vector<32x32xbf16>
    %35 = vector.extract_strided_slice %0 {offsets = [0, 320], sizes = [32, 32], strides = [1, 1]} : vector<32x512xbf16> to vector<32x32xbf16>
    %36 = vector.extract_strided_slice %0 {offsets = [0, 352], sizes = [32, 32], strides = [1, 1]} : vector<32x512xbf16> to vector<32x32xbf16>
    %37 = vector.extract_strided_slice %0 {offsets = [0, 416], sizes = [32, 32], strides = [1, 1]} : vector<32x512xbf16> to vector<32x32xbf16>
    %38 = vector.extract_strided_slice %0 {offsets = [0, 448], sizes = [32, 32], strides = [1, 1]} : vector<32x512xbf16> to vector<32x32xbf16>
    %39 = vector.extract_strided_slice %0 {offsets = [0, 480], sizes = [32, 32], strides = [1, 1]} : vector<32x512xbf16> to vector<32x32xbf16>
    %40 = tpu.concatenate %31, %32, %33, %34, %35, %36, %37, %38, %39 in 1 : vector<32x32xbf16>, vector<32x32xbf16>, vector<32x32xbf16>, vector<32x32xbf16>, vector<32x32xbf16>, vector<32x32xbf16>, vector<32x32xbf16>, vector<32x32xbf16>, vector<32x32xbf16> -> vector<32x288xbf16>
    %41 = tpu.concatenate %10, %20, %30, %40 in 0 : vector<32x288xbf16>, vector<32x288xbf16>, vector<32x288xbf16>, vector<32x288xbf16> -> vector<128x288xbf16>
    %c0_1 = arith.constant 0 : index
    %c0_2 = arith.constant 0 : index
    %42 = vector.load %arg2[%c0_1, %c0_2] : memref<288x64xbf16, #tpu.memory_space<vmem>>, vector<288x64xbf16>
    %cst = arith.constant dense<0.000000e+00> : vector<128x64xf32>
    %43 = tpu.matmul %41, %42, %cst {dimension_numbers = #tpu.dot_dimension_numbers<[1], [0], [0], [1], [0, 0, 1, 1], [], []>} : vector<128x288xbf16>, vector<288x64xbf16>, vector<128x64xf32> -> vector<128x64xf32>
    %44 = vector.extract_strided_slice %43 {offsets = [0, 0], sizes = [32, 64], strides = [1, 1]} : vector<128x64xf32> to vector<32x64xf32>
    %45 = vector.extract_strided_slice %43 {offsets = [32, 0], sizes = [32, 64], strides = [1, 1]} : vector<128x64xf32> to vector<32x64xf32>
    %46 = arith.maximumf %44, %45 : vector<32x64xf32>
    %47 = vector.extract_strided_slice %43 {offsets = [64, 0], sizes = [32, 64], strides = [1, 1]} : vector<128x64xf32> to vector<32x64xf32>
    %48 = vector.extract_strided_slice %43 {offsets = [96, 0], sizes = [32, 64], strides = [1, 1]} : vector<128x64xf32> to vector<32x64xf32>
    %49 = arith.maximumf %47, %48 : vector<32x64xf32>
    %50 = arith.maximumf %46, %49 : vector<32x64xf32>
    %c0_3 = arith.constant 0 : index
    %c0_4 = arith.constant 0 : index
    %51 = vector.load %arg3[%c0_3, %c0_4] : memref<1x64xf32, #tpu.memory_space<vmem>>, vector<1x64xf32>
    %52 = vector.broadcast %51 : vector<1x64xf32> to vector<32x64xf32>
    %53 = arith.addf %50, %52 : vector<32x64xf32>
    %cst_5 = arith.constant 0.000000e+00 : f32
    %54 = vector.broadcast %cst_5 : f32 to vector<32x64xf32>
    %55 = arith.maximumf %53, %54 : vector<32x64xf32>
    %56 = arith.truncf %55 : vector<32x64xf32> to vector<32x64xbf16>
    %c0_6 = arith.constant 0 : index
    %c0_7 = arith.constant 0 : index
    %57 = vector.load %arg4[%c0_6, %c0_7] : memref<32x64xbf16, #tpu.memory_space<vmem>>, vector<32x64xbf16>
    tpu.vector_store %arg4[%c0_6, %c0_7], %56 {strides = array<i32>} : memref<32x64xbf16, #tpu.memory_space<vmem>>, vector<32x64xbf16>,
    return
  }
  func.func @transform_0(%arg0: i32) -> (i32, i32) {
    %c0_i32 = arith.constant 0 : i32
    %c0_i32_0 = arith.constant 0 : i32
    return %arg0, %c0_i32 : i32, i32
  }
  func.func @transform_1(%arg0: i32) -> (i32, i32) {
    %c0_i32 = arith.constant 0 : i32
    %c0_i32_0 = arith.constant 0 : i32
    %c0_i32_1 = arith.constant 0 : i32
    return %c0_i32, %c0_i32_0 : i32, i32
  }
  func.func @transform_2(%arg0: i32) -> (i32, i32) {
    %c0_i32 = arith.constant 0 : i32
    %c0_i32_0 = arith.constant 0 : i32
    %c0_i32_1 = arith.constant 0 : i32
    return %c0_i32, %c0_i32_0 : i32, i32
  }
  func.func @transform_3(%arg0: i32) -> (i32, i32) {
    %c0_i32 = arith.constant 0 : i32
    %c0_i32_0 = arith.constant 0 : i32
    return %arg0, %c0_i32 : i32, i32
  }
}

module attributes {stable_mosaic.version = 11 : i64} {
  func.func @conv_bn_relu_pool_kernel(%arg0: i32, %arg1: memref<8x1024xbf16, #tpu.memory_space<vmem>>, %arg2: memref<576x128xbf16, #tpu.memory_space<vmem>>, %arg3: memref<1x128xf32, #tpu.memory_space<vmem>>, %arg4: memref<8x128xbf16, #tpu.memory_space<vmem>>) attributes {dimension_semantics = [#tpu.dimension_semantics<parallel>], iteration_bounds = array<i64: 1>, scalar_prefetch = 0 : i64, scratch_operands = 0 : i64, tpu.core_type = #tpu.core_type<tc>, window_params = [{transform_indices = @transform_0, window_bounds = array<i64: 8, 1024>}, {pipeline_mode = #tpu.pipeline_mode<synchronous>, transform_indices = @transform_1, window_bounds = array<i64: 576, 128>}, {pipeline_mode = #tpu.pipeline_mode<synchronous>, transform_indices = @transform_2, window_bounds = array<i64: 1, 128>}, {transform_indices = @transform_3, window_bounds = array<i64: 8, 128>}]} {
    %c0 = arith.constant 0 : index
    %c0_0 = arith.constant 0 : index
    %0 = vector.load %arg1[%c0, %c0_0] : memref<8x1024xbf16, #tpu.memory_space<vmem>>, vector<8x1024xbf16>
    %1 = vector.extract_strided_slice %0 {offsets = [0, 0], sizes = [8, 64], strides = [1, 1]} : vector<8x1024xbf16> to vector<8x64xbf16>
    %2 = vector.extract_strided_slice %0 {offsets = [0, 64], sizes = [8, 64], strides = [1, 1]} : vector<8x1024xbf16> to vector<8x64xbf16>
    %3 = vector.extract_strided_slice %0 {offsets = [0, 128], sizes = [8, 64], strides = [1, 1]} : vector<8x1024xbf16> to vector<8x64xbf16>
    %4 = vector.extract_strided_slice %0 {offsets = [0, 256], sizes = [8, 64], strides = [1, 1]} : vector<8x1024xbf16> to vector<8x64xbf16>
    %5 = vector.extract_strided_slice %0 {offsets = [0, 320], sizes = [8, 64], strides = [1, 1]} : vector<8x1024xbf16> to vector<8x64xbf16>
    %6 = vector.extract_strided_slice %0 {offsets = [0, 384], sizes = [8, 64], strides = [1, 1]} : vector<8x1024xbf16> to vector<8x64xbf16>
    %7 = vector.extract_strided_slice %0 {offsets = [0, 512], sizes = [8, 64], strides = [1, 1]} : vector<8x1024xbf16> to vector<8x64xbf16>
    %8 = vector.extract_strided_slice %0 {offsets = [0, 576], sizes = [8, 64], strides = [1, 1]} : vector<8x1024xbf16> to vector<8x64xbf16>
    %9 = vector.extract_strided_slice %0 {offsets = [0, 640], sizes = [8, 64], strides = [1, 1]} : vector<8x1024xbf16> to vector<8x64xbf16>
    %10 = tpu.concatenate %1, %2, %3, %4, %5, %6, %7, %8, %9 in 1 : vector<8x64xbf16>, vector<8x64xbf16>, vector<8x64xbf16>, vector<8x64xbf16>, vector<8x64xbf16>, vector<8x64xbf16>, vector<8x64xbf16>, vector<8x64xbf16>, vector<8x64xbf16> -> vector<8x576xbf16>
    %11 = vector.extract_strided_slice %0 {offsets = [0, 64], sizes = [8, 64], strides = [1, 1]} : vector<8x1024xbf16> to vector<8x64xbf16>
    %12 = vector.extract_strided_slice %0 {offsets = [0, 128], sizes = [8, 64], strides = [1, 1]} : vector<8x1024xbf16> to vector<8x64xbf16>
    %13 = vector.extract_strided_slice %0 {offsets = [0, 192], sizes = [8, 64], strides = [1, 1]} : vector<8x1024xbf16> to vector<8x64xbf16>
    %14 = vector.extract_strided_slice %0 {offsets = [0, 320], sizes = [8, 64], strides = [1, 1]} : vector<8x1024xbf16> to vector<8x64xbf16>
    %15 = vector.extract_strided_slice %0 {offsets = [0, 384], sizes = [8, 64], strides = [1, 1]} : vector<8x1024xbf16> to vector<8x64xbf16>
    %16 = vector.extract_strided_slice %0 {offsets = [0, 448], sizes = [8, 64], strides = [1, 1]} : vector<8x1024xbf16> to vector<8x64xbf16>
    %17 = vector.extract_strided_slice %0 {offsets = [0, 576], sizes = [8, 64], strides = [1, 1]} : vector<8x1024xbf16> to vector<8x64xbf16>
    %18 = vector.extract_strided_slice %0 {offsets = [0, 640], sizes = [8, 64], strides = [1, 1]} : vector<8x1024xbf16> to vector<8x64xbf16>
    %19 = vector.extract_strided_slice %0 {offsets = [0, 704], sizes = [8, 64], strides = [1, 1]} : vector<8x1024xbf16> to vector<8x64xbf16>
    %20 = tpu.concatenate %11, %12, %13, %14, %15, %16, %17, %18, %19 in 1 : vector<8x64xbf16>, vector<8x64xbf16>, vector<8x64xbf16>, vector<8x64xbf16>, vector<8x64xbf16>, vector<8x64xbf16>, vector<8x64xbf16>, vector<8x64xbf16>, vector<8x64xbf16> -> vector<8x576xbf16>
    %21 = vector.extract_strided_slice %0 {offsets = [0, 256], sizes = [8, 64], strides = [1, 1]} : vector<8x1024xbf16> to vector<8x64xbf16>
    %22 = vector.extract_strided_slice %0 {offsets = [0, 320], sizes = [8, 64], strides = [1, 1]} : vector<8x1024xbf16> to vector<8x64xbf16>
    %23 = vector.extract_strided_slice %0 {offsets = [0, 384], sizes = [8, 64], strides = [1, 1]} : vector<8x1024xbf16> to vector<8x64xbf16>
    %24 = vector.extract_strided_slice %0 {offsets = [0, 512], sizes = [8, 64], strides = [1, 1]} : vector<8x1024xbf16> to vector<8x64xbf16>
    %25 = vector.extract_strided_slice %0 {offsets = [0, 576], sizes = [8, 64], strides = [1, 1]} : vector<8x1024xbf16> to vector<8x64xbf16>
    %26 = vector.extract_strided_slice %0 {offsets = [0, 640], sizes = [8, 64], strides = [1, 1]} : vector<8x1024xbf16> to vector<8x64xbf16>
    %27 = vector.extract_strided_slice %0 {offsets = [0, 768], sizes = [8, 64], strides = [1, 1]} : vector<8x1024xbf16> to vector<8x64xbf16>
    %28 = vector.extract_strided_slice %0 {offsets = [0, 832], sizes = [8, 64], strides = [1, 1]} : vector<8x1024xbf16> to vector<8x64xbf16>
    %29 = vector.extract_strided_slice %0 {offsets = [0, 896], sizes = [8, 64], strides = [1, 1]} : vector<8x1024xbf16> to vector<8x64xbf16>
    %30 = tpu.concatenate %21, %22, %23, %24, %25, %26, %27, %28, %29 in 1 : vector<8x64xbf16>, vector<8x64xbf16>, vector<8x64xbf16>, vector<8x64xbf16>, vector<8x64xbf16>, vector<8x64xbf16>, vector<8x64xbf16>, vector<8x64xbf16>, vector<8x64xbf16> -> vector<8x576xbf16>
    %31 = vector.extract_strided_slice %0 {offsets = [0, 320], sizes = [8, 64], strides = [1, 1]} : vector<8x1024xbf16> to vector<8x64xbf16>
    %32 = vector.extract_strided_slice %0 {offsets = [0, 384], sizes = [8, 64], strides = [1, 1]} : vector<8x1024xbf16> to vector<8x64xbf16>
    %33 = vector.extract_strided_slice %0 {offsets = [0, 448], sizes = [8, 64], strides = [1, 1]} : vector<8x1024xbf16> to vector<8x64xbf16>
    %34 = vector.extract_strided_slice %0 {offsets = [0, 576], sizes = [8, 64], strides = [1, 1]} : vector<8x1024xbf16> to vector<8x64xbf16>
    %35 = vector.extract_strided_slice %0 {offsets = [0, 640], sizes = [8, 64], strides = [1, 1]} : vector<8x1024xbf16> to vector<8x64xbf16>
    %36 = vector.extract_strided_slice %0 {offsets = [0, 704], sizes = [8, 64], strides = [1, 1]} : vector<8x1024xbf16> to vector<8x64xbf16>
    %37 = vector.extract_strided_slice %0 {offsets = [0, 832], sizes = [8, 64], strides = [1, 1]} : vector<8x1024xbf16> to vector<8x64xbf16>
    %38 = vector.extract_strided_slice %0 {offsets = [0, 896], sizes = [8, 64], strides = [1, 1]} : vector<8x1024xbf16> to vector<8x64xbf16>
    %39 = vector.extract_strided_slice %0 {offsets = [0, 960], sizes = [8, 64], strides = [1, 1]} : vector<8x1024xbf16> to vector<8x64xbf16>
    %40 = tpu.concatenate %31, %32, %33, %34, %35, %36, %37, %38, %39 in 1 : vector<8x64xbf16>, vector<8x64xbf16>, vector<8x64xbf16>, vector<8x64xbf16>, vector<8x64xbf16>, vector<8x64xbf16>, vector<8x64xbf16>, vector<8x64xbf16>, vector<8x64xbf16> -> vector<8x576xbf16>
    %41 = tpu.concatenate %10, %20, %30, %40 in 0 : vector<8x576xbf16>, vector<8x576xbf16>, vector<8x576xbf16>, vector<8x576xbf16> -> vector<32x576xbf16>
    %c0_1 = arith.constant 0 : index
    %c0_2 = arith.constant 0 : index
    %42 = vector.load %arg2[%c0_1, %c0_2] : memref<576x128xbf16, #tpu.memory_space<vmem>>, vector<576x128xbf16>
    %cst = arith.constant dense<0.000000e+00> : vector<32x128xf32>
    %43 = tpu.matmul %41, %42, %cst {dimension_numbers = #tpu.dot_dimension_numbers<[1], [0], [0], [1], [0, 0, 1, 1], [], []>} : vector<32x576xbf16>, vector<576x128xbf16>, vector<32x128xf32> -> vector<32x128xf32>
    %44 = vector.extract_strided_slice %43 {offsets = [0, 0], sizes = [8, 128], strides = [1, 1]} : vector<32x128xf32> to vector<8x128xf32>
    %45 = vector.extract_strided_slice %43 {offsets = [8, 0], sizes = [8, 128], strides = [1, 1]} : vector<32x128xf32> to vector<8x128xf32>
    %46 = arith.maximumf %44, %45 : vector<8x128xf32>
    %47 = vector.extract_strided_slice %43 {offsets = [16, 0], sizes = [8, 128], strides = [1, 1]} : vector<32x128xf32> to vector<8x128xf32>
    %48 = vector.extract_strided_slice %43 {offsets = [24, 0], sizes = [8, 128], strides = [1, 1]} : vector<32x128xf32> to vector<8x128xf32>
    %49 = arith.maximumf %47, %48 : vector<8x128xf32>
    %50 = arith.maximumf %46, %49 : vector<8x128xf32>
    %c0_3 = arith.constant 0 : index
    %c0_4 = arith.constant 0 : index
    %51 = vector.load %arg3[%c0_3, %c0_4] : memref<1x128xf32, #tpu.memory_space<vmem>>, vector<1x128xf32>
    %52 = vector.broadcast %51 : vector<1x128xf32> to vector<8x128xf32>
    %53 = arith.addf %50, %52 : vector<8x128xf32>
    %cst_5 = arith.constant 0.000000e+00 : f32
    %54 = vector.broadcast %cst_5 : f32 to vector<8x128xf32>
    %55 = arith.maximumf %53, %54 : vector<8x128xf32>
    %56 = arith.truncf %55 : vector<8x128xf32> to vector<8x128xbf16>
    %c0_6 = arith.constant 0 : index
    %c0_7 = arith.constant 0 : index
    %57 = vector.load %arg4[%c0_6, %c0_7] : memref<8x128xbf16, #tpu.memory_space<vmem>>, vector<8x128xbf16>
    tpu.vector_store %arg4[%c0_6, %c0_7], %56 {strides = array<i32>} : memref<8x128xbf16, #tpu.memory_space<vmem>>, vector<8x128xbf16>,
    return
  }
  func.func @transform_0(%arg0: i32) -> (i32, i32) {
    %c0_i32 = arith.constant 0 : i32
    %c0_i32_0 = arith.constant 0 : i32
    return %arg0, %c0_i32 : i32, i32
  }
  func.func @transform_1(%arg0: i32) -> (i32, i32) {
    %c0_i32 = arith.constant 0 : i32
    %c0_i32_0 = arith.constant 0 : i32
    %c0_i32_1 = arith.constant 0 : i32
    return %c0_i32, %c0_i32_0 : i32, i32
  }
  func.func @transform_2(%arg0: i32) -> (i32, i32) {
    %c0_i32 = arith.constant 0 : i32
    %c0_i32_0 = arith.constant 0 : i32
    %c0_i32_1 = arith.constant 0 : i32
    return %c0_i32, %c0_i32_0 : i32, i32
  }
  func.func @transform_3(%arg0: i32) -> (i32, i32) {
    %c0_i32 = arith.constant 0 : i32
    %c0_i32_0 = arith.constant 0 : i32
    return %arg0, %c0_i32 : i32, i32
  }
}

module attributes {stable_mosaic.version = 11 : i64} {
  func.func @conv_bn_relu_pool_kernel(%arg0: i32, %arg1: memref<8x2048xbf16, #tpu.memory_space<vmem>>, %arg2: memref<1152x256xbf16, #tpu.memory_space<vmem>>, %arg3: memref<1x256xf32, #tpu.memory_space<vmem>>, %arg4: memref<8x256xbf16, #tpu.memory_space<vmem>>) attributes {dimension_semantics = [#tpu.dimension_semantics<parallel>], iteration_bounds = array<i64: 1>, scalar_prefetch = 0 : i64, scratch_operands = 0 : i64, tpu.core_type = #tpu.core_type<tc>, window_params = [{transform_indices = @transform_0, window_bounds = array<i64: 8, 2048>}, {pipeline_mode = #tpu.pipeline_mode<synchronous>, transform_indices = @transform_1, window_bounds = array<i64: 1152, 256>}, {pipeline_mode = #tpu.pipeline_mode<synchronous>, transform_indices = @transform_2, window_bounds = array<i64: 1, 256>}, {transform_indices = @transform_3, window_bounds = array<i64: 8, 256>}]} {
    %c0 = arith.constant 0 : index
    %c0_0 = arith.constant 0 : index
    %0 = vector.load %arg1[%c0, %c0_0] : memref<8x2048xbf16, #tpu.memory_space<vmem>>, vector<8x2048xbf16>
    %1 = vector.extract_strided_slice %0 {offsets = [0, 0], sizes = [8, 128], strides = [1, 1]} : vector<8x2048xbf16> to vector<8x128xbf16>
    %2 = vector.extract_strided_slice %0 {offsets = [0, 128], sizes = [8, 128], strides = [1, 1]} : vector<8x2048xbf16> to vector<8x128xbf16>
    %3 = vector.extract_strided_slice %0 {offsets = [0, 256], sizes = [8, 128], strides = [1, 1]} : vector<8x2048xbf16> to vector<8x128xbf16>
    %4 = vector.extract_strided_slice %0 {offsets = [0, 512], sizes = [8, 128], strides = [1, 1]} : vector<8x2048xbf16> to vector<8x128xbf16>
    %5 = vector.extract_strided_slice %0 {offsets = [0, 640], sizes = [8, 128], strides = [1, 1]} : vector<8x2048xbf16> to vector<8x128xbf16>
    %6 = vector.extract_strided_slice %0 {offsets = [0, 768], sizes = [8, 128], strides = [1, 1]} : vector<8x2048xbf16> to vector<8x128xbf16>
    %7 = vector.extract_strided_slice %0 {offsets = [0, 1024], sizes = [8, 128], strides = [1, 1]} : vector<8x2048xbf16> to vector<8x128xbf16>
    %8 = vector.extract_strided_slice %0 {offsets = [0, 1152], sizes = [8, 128], strides = [1, 1]} : vector<8x2048xbf16> to vector<8x128xbf16>
    %9 = vector.extract_strided_slice %0 {offsets = [0, 1280], sizes = [8, 128], strides = [1, 1]} : vector<8x2048xbf16> to vector<8x128xbf16>
    %10 = tpu.concatenate %1, %2, %3, %4, %5, %6, %7, %8, %9 in 1 : vector<8x128xbf16>, vector<8x128xbf16>, vector<8x128xbf16>, vector<8x128xbf16>, vector<8x128xbf16>, vector<8x128xbf16>, vector<8x128xbf16>, vector<8x128xbf16>, vector<8x128xbf16> -> vector<8x1152xbf16>
    %11 = vector.extract_strided_slice %0 {offsets = [0, 128], sizes = [8, 128], strides = [1, 1]} : vector<8x2048xbf16> to vector<8x128xbf16>
    %12 = vector.extract_strided_slice %0 {offsets = [0, 256], sizes = [8, 128], strides = [1, 1]} : vector<8x2048xbf16> to vector<8x128xbf16>
    %13 = vector.extract_strided_slice %0 {offsets = [0, 384], sizes = [8, 128], strides = [1, 1]} : vector<8x2048xbf16> to vector<8x128xbf16>
    %14 = vector.extract_strided_slice %0 {offsets = [0, 640], sizes = [8, 128], strides = [1, 1]} : vector<8x2048xbf16> to vector<8x128xbf16>
    %15 = vector.extract_strided_slice %0 {offsets = [0, 768], sizes = [8, 128], strides = [1, 1]} : vector<8x2048xbf16> to vector<8x128xbf16>
    %16 = vector.extract_strided_slice %0 {offsets = [0, 896], sizes = [8, 128], strides = [1, 1]} : vector<8x2048xbf16> to vector<8x128xbf16>
    %17 = vector.extract_strided_slice %0 {offsets = [0, 1152], sizes = [8, 128], strides = [1, 1]} : vector<8x2048xbf16> to vector<8x128xbf16>
    %18 = vector.extract_strided_slice %0 {offsets = [0, 1280], sizes = [8, 128], strides = [1, 1]} : vector<8x2048xbf16> to vector<8x128xbf16>
    %19 = vector.extract_strided_slice %0 {offsets = [0, 1408], sizes = [8, 128], strides = [1, 1]} : vector<8x2048xbf16> to vector<8x128xbf16>
    %20 = tpu.concatenate %11, %12, %13, %14, %15, %16, %17, %18, %19 in 1 : vector<8x128xbf16>, vector<8x128xbf16>, vector<8x128xbf16>, vector<8x128xbf16>, vector<8x128xbf16>, vector<8x128xbf16>, vector<8x128xbf16>, vector<8x128xbf16>, vector<8x128xbf16> -> vector<8x1152xbf16>
    %21 = vector.extract_strided_slice %0 {offsets = [0, 512], sizes = [8, 128], strides = [1, 1]} : vector<8x2048xbf16> to vector<8x128xbf16>
    %22 = vector.extract_strided_slice %0 {offsets = [0, 640], sizes = [8, 128], strides = [1, 1]} : vector<8x2048xbf16> to vector<8x128xbf16>
    %23 = vector.extract_strided_slice %0 {offsets = [0, 768], sizes = [8, 128], strides = [1, 1]} : vector<8x2048xbf16> to vector<8x128xbf16>
    %24 = vector.extract_strided_slice %0 {offsets = [0, 1024], sizes = [8, 128], strides = [1, 1]} : vector<8x2048xbf16> to vector<8x128xbf16>
    %25 = vector.extract_strided_slice %0 {offsets = [0, 1152], sizes = [8, 128], strides = [1, 1]} : vector<8x2048xbf16> to vector<8x128xbf16>
    %26 = vector.extract_strided_slice %0 {offsets = [0, 1280], sizes = [8, 128], strides = [1, 1]} : vector<8x2048xbf16> to vector<8x128xbf16>
    %27 = vector.extract_strided_slice %0 {offsets = [0, 1536], sizes = [8, 128], strides = [1, 1]} : vector<8x2048xbf16> to vector<8x128xbf16>
    %28 = vector.extract_strided_slice %0 {offsets = [0, 1664], sizes = [8, 128], strides = [1, 1]} : vector<8x2048xbf16> to vector<8x128xbf16>
    %29 = vector.extract_strided_slice %0 {offsets = [0, 1792], sizes = [8, 128], strides = [1, 1]} : vector<8x2048xbf16> to vector<8x128xbf16>
    %30 = tpu.concatenate %21, %22, %23, %24, %25, %26, %27, %28, %29 in 1 : vector<8x128xbf16>, vector<8x128xbf16>, vector<8x128xbf16>, vector<8x128xbf16>, vector<8x128xbf16>, vector<8x128xbf16>, vector<8x128xbf16>, vector<8x128xbf16>, vector<8x128xbf16> -> vector<8x1152xbf16>
    %31 = vector.extract_strided_slice %0 {offsets = [0, 640], sizes = [8, 128], strides = [1, 1]} : vector<8x2048xbf16> to vector<8x128xbf16>
    %32 = vector.extract_strided_slice %0 {offsets = [0, 768], sizes = [8, 128], strides = [1, 1]} : vector<8x2048xbf16> to vector<8x128xbf16>
    %33 = vector.extract_strided_slice %0 {offsets = [0, 896], sizes = [8, 128], strides = [1, 1]} : vector<8x2048xbf16> to vector<8x128xbf16>
    %34 = vector.extract_strided_slice %0 {offsets = [0, 1152], sizes = [8, 128], strides = [1, 1]} : vector<8x2048xbf16> to vector<8x128xbf16>
    %35 = vector.extract_strided_slice %0 {offsets = [0, 1280], sizes = [8, 128], strides = [1, 1]} : vector<8x2048xbf16> to vector<8x128xbf16>
    %36 = vector.extract_strided_slice %0 {offsets = [0, 1408], sizes = [8, 128], strides = [1, 1]} : vector<8x2048xbf16> to vector<8x128xbf16>
    %37 = vector.extract_strided_slice %0 {offsets = [0, 1664], sizes = [8, 128], strides = [1, 1]} : vector<8x2048xbf16> to vector<8x128xbf16>
    %38 = vector.extract_strided_slice %0 {offsets = [0, 1792], sizes = [8, 128], strides = [1, 1]} : vector<8x2048xbf16> to vector<8x128xbf16>
    %39 = vector.extract_strided_slice %0 {offsets = [0, 1920], sizes = [8, 128], strides = [1, 1]} : vector<8x2048xbf16> to vector<8x128xbf16>
    %40 = tpu.concatenate %31, %32, %33, %34, %35, %36, %37, %38, %39 in 1 : vector<8x128xbf16>, vector<8x128xbf16>, vector<8x128xbf16>, vector<8x128xbf16>, vector<8x128xbf16>, vector<8x128xbf16>, vector<8x128xbf16>, vector<8x128xbf16>, vector<8x128xbf16> -> vector<8x1152xbf16>
    %41 = tpu.concatenate %10, %20, %30, %40 in 0 : vector<8x1152xbf16>, vector<8x1152xbf16>, vector<8x1152xbf16>, vector<8x1152xbf16> -> vector<32x1152xbf16>
    %c0_1 = arith.constant 0 : index
    %c0_2 = arith.constant 0 : index
    %42 = vector.load %arg2[%c0_1, %c0_2] : memref<1152x256xbf16, #tpu.memory_space<vmem>>, vector<1152x256xbf16>
    %cst = arith.constant dense<0.000000e+00> : vector<32x256xf32>
    %43 = tpu.matmul %41, %42, %cst {dimension_numbers = #tpu.dot_dimension_numbers<[1], [0], [0], [1], [0, 0, 1, 1], [], []>} : vector<32x1152xbf16>, vector<1152x256xbf16>, vector<32x256xf32> -> vector<32x256xf32>
    %44 = vector.extract_strided_slice %43 {offsets = [0, 0], sizes = [8, 256], strides = [1, 1]} : vector<32x256xf32> to vector<8x256xf32>
    %45 = vector.extract_strided_slice %43 {offsets = [8, 0], sizes = [8, 256], strides = [1, 1]} : vector<32x256xf32> to vector<8x256xf32>
    %46 = arith.maximumf %44, %45 : vector<8x256xf32>
    %47 = vector.extract_strided_slice %43 {offsets = [16, 0], sizes = [8, 256], strides = [1, 1]} : vector<32x256xf32> to vector<8x256xf32>
    %48 = vector.extract_strided_slice %43 {offsets = [24, 0], sizes = [8, 256], strides = [1, 1]} : vector<32x256xf32> to vector<8x256xf32>
    %49 = arith.maximumf %47, %48 : vector<8x256xf32>
    %50 = arith.maximumf %46, %49 : vector<8x256xf32>
    %c0_3 = arith.constant 0 : index
    %c0_4 = arith.constant 0 : index
    %51 = vector.load %arg3[%c0_3, %c0_4] : memref<1x256xf32, #tpu.memory_space<vmem>>, vector<1x256xf32>
    %52 = vector.broadcast %51 : vector<1x256xf32> to vector<8x256xf32>
    %53 = arith.addf %50, %52 : vector<8x256xf32>
    %cst_5 = arith.constant 0.000000e+00 : f32
    %54 = vector.broadcast %cst_5 : f32 to vector<8x256xf32>
    %55 = arith.maximumf %53, %54 : vector<8x256xf32>
    %56 = arith.truncf %55 : vector<8x256xf32> to vector<8x256xbf16>
    %c0_6 = arith.constant 0 : index
    %c0_7 = arith.constant 0 : index
    %57 = vector.load %arg4[%c0_6, %c0_7] : memref<8x256xbf16, #tpu.memory_space<vmem>>, vector<8x256xbf16>
    tpu.vector_store %arg4[%c0_6, %c0_7], %56 {strides = array<i32>} : memref<8x256xbf16, #tpu.memory_space<vmem>>, vector<8x256xbf16>,
    return
  }
  func.func @transform_0(%arg0: i32) -> (i32, i32) {
    %c0_i32 = arith.constant 0 : i32
    %c0_i32_0 = arith.constant 0 : i32
    return %arg0, %c0_i32 : i32, i32
  }
  func.func @transform_1(%arg0: i32) -> (i32, i32) {
    %c0_i32 = arith.constant 0 : i32
    %c0_i32_0 = arith.constant 0 : i32
    %c0_i32_1 = arith.constant 0 : i32
    return %c0_i32, %c0_i32_0 : i32, i32
  }
  func.func @transform_2(%arg0: i32) -> (i32, i32) {
    %c0_i32 = arith.constant 0 : i32
    %c0_i32_0 = arith.constant 0 : i32
    %c0_i32_1 = arith.constant 0 : i32
    return %c0_i32, %c0_i32_0 : i32, i32
  }
  func.func @transform_3(%arg0: i32) -> (i32, i32) {
    %c0_i32 = arith.constant 0 : i32
    %c0_i32_0 = arith.constant 0 : i32
    return %arg0, %c0_i32 : i32, i32
  }
}

module attributes {stable_mosaic.version = 11 : i64} {
  func.func @fc_kernel(%arg0: i32, %arg1: i32, %arg2: memref<8x256xbf16, #tpu.memory_space<vmem>>, %arg3: memref<256x1024xbf16, #tpu.memory_space<vmem>>, %arg4: memref<1x1024xf32, #tpu.memory_space<vmem>>, %arg5: memref<1024x128xf32, #tpu.memory_space<vmem>>, %arg6: memref<1x128xf32, #tpu.memory_space<vmem>>, %arg7: memref<8x128xf32, #tpu.memory_space<vmem>>, %arg8: memref<8x1024xf32, #tpu.memory_space<vmem>>) attributes {dimension_semantics = [#tpu.dimension_semantics<parallel>, #tpu.dimension_semantics<arbitrary>], iteration_bounds = array<i64: 1, 1>, scalar_prefetch = 0 : i64, scratch_operands = 1 : i64, tpu.core_type = #tpu.core_type<tc>, window_params = [{transform_indices = @transform_0, window_bounds = array<i64: 8, 256>}, {transform_indices = @transform_1, window_bounds = array<i64: 256, 1024>}, {pipeline_mode = #tpu.pipeline_mode<synchronous>, transform_indices = @transform_2, window_bounds = array<i64: 1, 1024>}, {pipeline_mode = #tpu.pipeline_mode<synchronous>, transform_indices = @transform_3, window_bounds = array<i64: 1024, 128>}, {pipeline_mode = #tpu.pipeline_mode<synchronous>, transform_indices = @transform_4, window_bounds = array<i64: 1, 128>}, {transform_indices = @transform_5, window_bounds = array<i64: 8, 128>}]} {
    %c0_i32 = arith.constant 0 : i32
    %0 = arith.cmpi eq, %arg1, %c0_i32 : i32
    %1 = arith.extui %0 : i1 to i32
    %c0_i32_0 = arith.constant 0 : i32
    %2 = arith.cmpi ne, %1, %c0_i32_0 : i32
    scf.if %2 {
      %cst_10 = arith.constant 0.000000e+00 : f32
      %12 = vector.broadcast %cst_10 : f32 to vector<8x1024xf32>
      %c0_11 = arith.constant 0 : index
      %c0_12 = arith.constant 0 : index
      %13 = vector.load %arg8[%c0_11, %c0_12] : memref<8x1024xf32, #tpu.memory_space<vmem>>, vector<8x1024xf32>
      tpu.vector_store %arg8[%c0_11, %c0_12], %12 {strides = array<i32>} : memref<8x1024xf32, #tpu.memory_space<vmem>>, vector<8x1024xf32>,
    } else {
    }
    %c0 = arith.constant 0 : index
    %c0_1 = arith.constant 0 : index
    %3 = vector.load %arg8[%c0, %c0_1] : memref<8x1024xf32, #tpu.memory_space<vmem>>, vector<8x1024xf32>
    %c0_2 = arith.constant 0 : index
    %c0_3 = arith.constant 0 : index
    %4 = vector.load %arg2[%c0_2, %c0_3] : memref<8x256xbf16, #tpu.memory_space<vmem>>, vector<8x256xbf16>
    %c0_4 = arith.constant 0 : index
    %c0_5 = arith.constant 0 : index
    %5 = vector.load %arg3[%c0_4, %c0_5] : memref<256x1024xbf16, #tpu.memory_space<vmem>>, vector<256x1024xbf16>
    %cst = arith.constant dense<0.000000e+00> : vector<8x1024xf32>
    %6 = tpu.matmul %4, %5, %cst {dimension_numbers = #tpu.dot_dimension_numbers<[1], [0], [0], [1], [0, 0, 1, 1], [], []>} : vector<8x256xbf16>, vector<256x1024xbf16>, vector<8x1024xf32> -> vector<8x1024xf32>
    %7 = arith.addf %3, %6 : vector<8x1024xf32>
    %c0_6 = arith.constant 0 : index
    %c0_7 = arith.constant 0 : index
    %8 = vector.load %arg8[%c0_6, %c0_7] : memref<8x1024xf32, #tpu.memory_space<vmem>>, vector<8x1024xf32>
    tpu.vector_store %arg8[%c0_6, %c0_7], %7 {strides = array<i32>} : memref<8x1024xf32, #tpu.memory_space<vmem>>, vector<8x1024xf32>,
    %c0_i32_8 = arith.constant 0 : i32
    %9 = arith.cmpi eq, %arg1, %c0_i32_8 : i32
    %10 = arith.extui %9 : i1 to i32
    %c0_i32_9 = arith.constant 0 : i32
    %11 = arith.cmpi ne, %10, %c0_i32_9 : i32
    scf.if %11 {
      %c0_10 = arith.constant 0 : index
      %c0_11 = arith.constant 0 : index
      %12 = vector.load %arg8[%c0_10, %c0_11] : memref<8x1024xf32, #tpu.memory_space<vmem>>, vector<8x1024xf32>
      %c0_12 = arith.constant 0 : index
      %c0_13 = arith.constant 0 : index
      %13 = vector.load %arg4[%c0_12, %c0_13] : memref<1x1024xf32, #tpu.memory_space<vmem>>, vector<1x1024xf32>
      %14 = vector.broadcast %13 : vector<1x1024xf32> to vector<8x1024xf32>
      %15 = arith.addf %12, %14 : vector<8x1024xf32>
      %cst_14 = arith.constant 0.000000e+00 : f32
      %16 = vector.broadcast %cst_14 : f32 to vector<8x1024xf32>
      %17 = arith.maximumf %15, %16 : vector<8x1024xf32>
      %c0_15 = arith.constant 0 : index
      %c0_16 = arith.constant 0 : index
      %18 = vector.load %arg5[%c0_15, %c0_16] : memref<1024x128xf32, #tpu.memory_space<vmem>>, vector<1024x128xf32>
      %cst_17 = arith.constant dense<0.000000e+00> : vector<8x128xf32>
      %19 = tpu.matmul %17, %18, %cst_17 {dimension_numbers = #tpu.dot_dimension_numbers<[1], [0], [0], [1], [0, 0, 1, 1], [], []>} : vector<8x1024xf32>, vector<1024x128xf32>, vector<8x128xf32> -> vector<8x128xf32>
      %c0_18 = arith.constant 0 : index
      %c0_19 = arith.constant 0 : index
      %20 = vector.load %arg6[%c0_18, %c0_19] : memref<1x128xf32, #tpu.memory_space<vmem>>, vector<1x128xf32>
      %21 = vector.broadcast %20 : vector<1x128xf32> to vector<8x128xf32>
      %22 = arith.addf %19, %21 : vector<8x128xf32>
      %c0_20 = arith.constant 0 : index
      %c0_21 = arith.constant 0 : index
      %23 = vector.load %arg7[%c0_20, %c0_21] : memref<8x128xf32, #tpu.memory_space<vmem>>, vector<8x128xf32>
      tpu.vector_store %arg7[%c0_20, %c0_21], %22 {strides = array<i32>} : memref<8x128xf32, #tpu.memory_space<vmem>>, vector<8x128xf32>,
    } else {
    }
    return
  }
  func.func @transform_0(%arg0: i32, %arg1: i32) -> (i32, i32) {
    %c0_i32 = arith.constant 0 : i32
    return %arg0, %arg1 : i32, i32
  }
  func.func @transform_1(%arg0: i32, %arg1: i32) -> (i32, i32) {
    %c0_i32 = arith.constant 0 : i32
    %c0_i32_0 = arith.constant 0 : i32
    return %arg1, %c0_i32 : i32, i32
  }
  func.func @transform_2(%arg0: i32, %arg1: i32) -> (i32, i32) {
    %c0_i32 = arith.constant 0 : i32
    %c0_i32_0 = arith.constant 0 : i32
    %c0_i32_1 = arith.constant 0 : i32
    return %c0_i32, %c0_i32_0 : i32, i32
  }
  func.func @transform_3(%arg0: i32, %arg1: i32) -> (i32, i32) {
    %c0_i32 = arith.constant 0 : i32
    %c0_i32_0 = arith.constant 0 : i32
    %c0_i32_1 = arith.constant 0 : i32
    return %c0_i32, %c0_i32_0 : i32, i32
  }
  func.func @transform_4(%arg0: i32, %arg1: i32) -> (i32, i32) {
    %c0_i32 = arith.constant 0 : i32
    %c0_i32_0 = arith.constant 0 : i32
    %c0_i32_1 = arith.constant 0 : i32
    return %c0_i32, %c0_i32_0 : i32, i32
  }
  func.func @transform_5(%arg0: i32, %arg1: i32) -> (i32, i32) {
    %c0_i32 = arith.constant 0 : i32
    %c0_i32_0 = arith.constant 0 : i32
    return %arg0, %c0_i32 : i32, i32
  }
}

</mosaic_0001>

<llo_original>
// kernel: classifier_forward.4
$region0: #{classifier_forward.4}
  #allocation0 [shape = 'u32[]', space=smem, size = 0x4, offset = 0x4, fixed_abs, tag = 'smem constant byte address 0x4 - core index']
  #allocation1 [shape = 'u32[144,128]{1,0:T(1,128)}', space=vmem, size = 0x12000, scoped, tag = 'internal scratch']
  %s0 = inlined_call_operand.vmem [shape: bf16[32,512], index: 0, kind: input, shape index: {}]
  %s1 = inlined_call_operand.vmem [shape: bf16[288,64], index: 1, kind: input, shape index: {}]
  %s2 = inlined_call_operand.vmem [shape: f32[1,64], index: 2, kind: input, shape index: {}]
  %s3 = inlined_call_operand.vmem [shape: bf16[32,64], index: 3, kind: output, shape index: {}]
  %s4 = sld [smem:[#allocation0]]
  $region22: #{classifier_forward.4} parent=0
    _
  %s6 = ssub.s32 1, %s4
  %s7 = scalar_select 0, %s6, %s4
  // Predicated region
  $region2: #{classifier_forward.4} parent=0 // pred_check
    _
  $region3: #{classifier_forward.4} parent=0 // pred_check_branch
    %9 = sbr.rel (0) target = $region5
  $region4: #{classifier_forward.4} parent=0 // pred_region
    _
  $region5: #{classifier_forward.4} parent=0 // pred_fallthru
    _
  // Predicated region
  $region6: #{classifier_forward.4} parent=0 // pred_check
    _
  $region7: #{classifier_forward.4} parent=0 // pred_check_branch
    %11 = sbr.rel (0) target = $region9
  $region8: #{classifier_forward.4} parent=0 // pred_region
    _
  $region9: #{classifier_forward.4} parent=0 // pred_fallthru
    _
  // Predicated region
  $region10: #{classifier_forward.4} parent=0 // pred_check
    _
  $region11: #{classifier_forward.4} parent=0 // pred_check_branch
    %13 = sbr.rel (0) target = $region13
  $region12: #{classifier_forward.4} parent=0 // pred_region
    _
  $region13: #{classifier_forward.4} parent=0 // pred_fallthru
    _
  %v15 = vld [vmem:[%s0] sm:$0xff]
  %v16 = vld [vmem:[%s0 + $0x8] sm:$0xff]
  %v17 = vld [vmem:[%s0 + $0x10] sm:$0xff]
  %v18 = vld [vmem:[%s0 + $0x18] sm:$0xff]
  %v19 = vld [vmem:[%s0 + $0x20] sm:$0xff]
  %v20 = vld [vmem:[%s0 + $0x28] sm:$0xff]
  %v21 = vld [vmem:[%s0 + $0x30] sm:$0xff]
  %v22 = vld [vmem:[%s0 + $0x38] sm:$0xff]
  %v27 = vunpack.c.l.b16 %v15
  %v28 = vunpack.c.l.b16 %v17
  %v29 = vunpack.c.l.b16 %v19
  %v30 = vunpack.c.l.b16 %v21
  %v31 = vpack.c.b16 %v28, %v27
  %v32 = vpack.c.b16 %v30, %v29
  %v33 = vunpack.c.h.b16 %v15
  %v34 = vunpack.c.h.b16 %v17
  %v35 = vunpack.c.h.b16 %v19
  %v36 = vunpack.c.h.b16 %v21
  %v37 = vpack.c.b16 %v34, %v33
  %v38 = vpack.c.b16 %v36, %v35
  %39 = vrot.lane.b32.xlu0 %v37, 96
  %v40 = vpop.permute.xlu0 %39
  %41 = vrot.lane.b32.xlu0 %v38, 96
  %v42 = vpop.permute.xlu0 %41
  %v47 = vunpack.c.l.b16 %v16
  %v48 = vunpack.c.l.b16 %v18
  %v49 = vunpack.c.l.b16 %v20
  %v50 = vunpack.c.l.b16 %v22
  %v51 = vpack.c.b16 %v48, %v47
  %v52 = vpack.c.b16 %v50, %v49
  %53 = vrot.lane.b32.xlu0 %v51, 64
  %v54 = vpop.permute.xlu0 %53
  %55 = vrot.lane.b32.xlu0 %v52, 64
  %v56 = vpop.permute.xlu0 %55
  %vm57 = vcmask 261120
  %vm60 = vcmask 523264
  %v61 = vsel %vm60, %v31, %v31
  %v62 = vsel %vm60, %v32, %v32
  %vm63 = vcmask 785408
  %v65 = vsel %vm63, %v61, %v40
  %v68 = vsel %vm63, %v62, %v42
  %v71 = vsel %vm60, %v40, %v54
  %v73 = vsel %vm60, %v42, %v56
  %v74 = vsel %vm63, %v71, %v54
  %v76 = vsel %vm63, %v73, %v56
  %78 = vrot.lane.b32.xlu0 %v31, 96
  %v79 = vpop.permute.xlu0 %78
  %80 = vrot.lane.b32.xlu0 %v32, 96
  %v81 = vpop.permute.xlu0 %80
  %82 = vrot.lane.b32.xlu0 %v37, 64
  %v83 = vpop.permute.xlu0 %82
  %84 = vrot.lane.b32.xlu0 %v38, 64
  %v85 = vpop.permute.xlu0 %84
  %86 = vrot.lane.b32.xlu0 %v51, 32
  %v87 = vpop.permute.xlu0 %86
  %88 = vrot.lane.b32.xlu0 %v52, 32
  %v89 = vpop.permute.xlu0 %88
  %v92 = vsel %vm60, %v79, %v79
  %v93 = vsel %vm60, %v81, %v81
  %v95 = vsel %vm63, %v92, %v83
  %v98 = vsel %vm63, %v93, %v85
  %v101 = vsel %vm60, %v83, %v87
  %v103 = vsel %vm60, %v85, %v89
  %v104 = vsel %vm63, %v101, %v87
  %v106 = vsel %vm63, %v103, %v89
  %108 = vrot.lane.b32.xlu0 %v51, 96
  %v109 = vpop.permute.xlu0 %108
  %110 = vrot.lane.b32.xlu0 %v52, 96
  %v111 = vpop.permute.xlu0 %110
  %v112 = vunpack.c.h.b16 %v16
  %v113 = vunpack.c.h.b16 %v18
  %v114 = vunpack.c.h.b16 %v20
  %v115 = vunpack.c.h.b16 %v22
  %v116 = vpack.c.b16 %v113, %v112
  %v117 = vpack.c.b16 %v115, %v114
  %118 = vrot.lane.b32.xlu0 %v116, 64
  %v119 = vpop.permute.xlu0 %118
  %120 = vrot.lane.b32.xlu0 %v117, 64
  %v121 = vpop.permute.xlu0 %120
  %v124 = vsel %vm60, %v37, %v37
  %v125 = vsel %vm60, %v38, %v38
  %v127 = vsel %vm63, %v124, %v109
  %v130 = vsel %vm63, %v125, %v111
  %v133 = vsel %vm60, %v109, %v119
  %v135 = vsel %vm60, %v111, %v121
  %v136 = vsel %vm63, %v133, %v119
  %v138 = vsel %vm63, %v135, %v121
  %140 = vrot.lane.b32.xlu0 %v116, 32
  %v141 = vpop.permute.xlu0 %140
  %142 = vrot.lane.b32.xlu0 %v117, 32
  %v143 = vpop.permute.xlu0 %142
  %v144 = vsel %vm60, %v40, %v40
  %v145 = vsel %vm60, %v42, %v42
  %v146 = vsel %vm63, %v144, %v54
  %v148 = vsel %vm63, %v145, %v56
  %v151 = vsel %vm60, %v54, %v141
  %v153 = vsel %vm60, %v56, %v143
  %v154 = vsel %vm63, %v151, %v141
  %v156 = vsel %vm63, %v153, %v143
  %v158 = vld [vmem:[%s1] sm:$0xf]
  %v159 = vld [vmem:[%s1 + $0x4] sm:$0xf]
  %v160 = vld [vmem:[%s1 + $0x8] sm:$0xf]
  %v161 = vld [vmem:[%s1 + $0xc] sm:$0xf]
  %v162 = vld [vmem:[%s1 + $0x10] sm:$0xf]
  %v163 = vld [vmem:[%s1 + $0x14] sm:$0xf]
  %v164 = vld [vmem:[%s1 + $0x18] sm:$0xf]
  %v165 = vld [vmem:[%s1 + $0x1c] sm:$0xf]
  %v166 = vld [vmem:[%s1 + $0x20] sm:$0xf]
  %v167 = vld [vmem:[%s1 + $0x24] sm:$0xf]
  %v168 = vld [vmem:[%s1 + $0x28] sm:$0xf]
  %v169 = vld [vmem:[%s1 + $0x2c] sm:$0xf]
  %v170 = vld [vmem:[%s1 + $0x30] sm:$0xf]
  %v171 = vld [vmem:[%s1 + $0x34] sm:$0xf]
  %v172 = vld [vmem:[%s1 + $0x38] sm:$0xf]
  %v173 = vld [vmem:[%s1 + $0x3c] sm:$0xf]
  %v174 = vld [vmem:[%s1 + $0x40] sm:$0xf]
  %v175 = vld [vmem:[%s1 + $0x44] sm:$0xf]
  %v176 = vld [vmem:[%s1 + $0x48] sm:$0xf]
  %v177 = vld [vmem:[%s1 + $0x4c] sm:$0xf]
  %v178 = vld [vmem:[%s1 + $0x50] sm:$0xf]
  %v179 = vld [vmem:[%s1 + $0x54] sm:$0xf]
  %v180 = vld [vmem:[%s1 + $0x58] sm:$0xf]
  %v181 = vld [vmem:[%s1 + $0x5c] sm:$0xf]
  %v182 = vld [vmem:[%s1 + $0x60] sm:$0xf]
  %v183 = vld [vmem:[%s1 + $0x64] sm:$0xf]
  %v184 = vld [vmem:[%s1 + $0x68] sm:$0xf]
  %v185 = vld [vmem:[%s1 + $0x6c] sm:$0xf]
  %v186 = vld [vmem:[%s1 + $0x70] sm:$0xf]
  %v187 = vld [vmem:[%s1 + $0x74] sm:$0xf]
  %v188 = vld [vmem:[%s1 + $0x78] sm:$0xf]
  %v189 = vld [vmem:[%s1 + $0x7c] sm:$0xf]
  %v190 = vld [vmem:[%s1 + $0x80] sm:$0xf]
  %v191 = vld [vmem:[%s1 + $0x84] sm:$0xf]
  %v192 = vld [vmem:[%s1 + $0x88] sm:$0xf]
  %v193 = vld [vmem:[%s1 + $0x8c] sm:$0xf]
  %v230 = vunpack.c.l.b16 %v158
  %v231 = vunpack.c.l.b16 %v159
  %v232 = vunpack.c.l.b16 %v160
  %v233 = vunpack.c.l.b16 %v161
  %v234 = vunpack.c.l.b16 %v162
  %v235 = vunpack.c.l.b16 %v163
  %v236 = vunpack.c.l.b16 %v164
  %v237 = vunpack.c.l.b16 %v165
  %v238 = vunpack.c.l.b16 %v166
  %v239 = vunpack.c.l.b16 %v167
  %v240 = vunpack.c.l.b16 %v168
  %v241 = vunpack.c.l.b16 %v169
  %v242 = vunpack.c.l.b16 %v170
  %v243 = vunpack.c.l.b16 %v171
  %v244 = vunpack.c.l.b16 %v172
  %v245 = vunpack.c.l.b16 %v173
  %v246 = vunpack.c.l.b16 %v174
  %v247 = vunpack.c.l.b16 %v175
  %v248 = vunpack.c.l.b16 %v176
  %v249 = vunpack.c.l.b16 %v177
  %v250 = vunpack.c.l.b16 %v178
  %v251 = vunpack.c.l.b16 %v179
  %v252 = vunpack.c.l.b16 %v180
  %v253 = vunpack.c.l.b16 %v181
  %v254 = vunpack.c.l.b16 %v182
  %v255 = vunpack.c.l.b16 %v183
  %v256 = vunpack.c.l.b16 %v184
  %v257 = vunpack.c.l.b16 %v185
  %v258 = vunpack.c.l.b16 %v186
  %v259 = vunpack.c.l.b16 %v187
  %v260 = vunpack.c.l.b16 %v188
  %v261 = vunpack.c.l.b16 %v189
  %v262 = vunpack.c.l.b16 %v190
  %v263 = vunpack.c.l.b16 %v191
  %v264 = vunpack.c.l.b16 %v192
  %v265 = vunpack.c.l.b16 %v193
  %v266 = vpack.c.b16 %v231, %v230
  %v267 = vpack.c.b16 %v233, %v232
  %v268 = vpack.c.b16 %v235, %v234
  %v269 = vpack.c.b16 %v237, %v236
  %v270 = vpack.c.b16 %v239, %v238
  %v271 = vpack.c.b16 %v241, %v240
  %v272 = vpack.c.b16 %v243, %v242
  %v273 = vpack.c.b16 %v245, %v244
  %v274 = vpack.c.b16 %v247, %v246
  %v275 = vpack.c.b16 %v249, %v248
  %v276 = vpack.c.b16 %v251, %v250
  %v277 = vpack.c.b16 %v253, %v252
  %v278 = vpack.c.b16 %v255, %v254
  %v279 = vpack.c.b16 %v257, %v256
  %v280 = vpack.c.b16 %v259, %v258
  %v281 = vpack.c.b16 %v261, %v260
  %v282 = vpack.c.b16 %v263, %v262
  %v283 = vpack.c.b16 %v265, %v264
  %v302 = vsel %vm57, %v54, 0
  %v304 = vsel %vm57, %v56, 0
  %v306 = vsel %vm57, %v87, 0
  %v308 = vsel %vm57, %v89, 0
  %v310 = vsel %vm57, %v119, 0
  %v312 = vsel %vm57, %v121, 0
  %v314 = vsel %vm57, %v141, 0
  %v316 = vsel %vm57, %v143, 0
  %318 = vmatprep.subr.bf16.mxu0 0
  %319 = vmatpush1.bf16.msra.mxu0 %v266
  %320 = vmatprep.subr.bf16.mxu0 0
  %321 = vmatpush1.bf16.msra.mxu0 %v267
  %322 = vmatprep.subr.bf16.mxu0 0
  %323 = vmatpush1.bf16.msra.mxu0 %v268
  %324 = vmatprep.subr.bf16.mxu0 0
  %325 = vmatpush1.bf16.msra.mxu0 %v269
  %326 = vmatprep.subr.bf16.mxu0 0
  %327 = vmatpush1.bf16.msra.mxu0 %v270
  %328 = vmatprep.subr.bf16.mxu0 0
  %329 = vmatpush1.bf16.msra.mxu0 %v271
  %330 = vmatprep.subr.bf16.mxu0 0
  %331 = vmatpush1.bf16.msra.mxu0 %v272
  %332 = vmatprep.subr.bf16.mxu0 0
  %333 = vmatpush1.bf16.msra.mxu0 %v273
  %334 = vmatprep.subr.bf16.mxu0 0
  %335 = vmatpush1.bf16.msra.mxu0 %v274
  %336 = vmatprep.subr.bf16.mxu0 0
  %337 = vmatpush1.bf16.msra.mxu0 %v275
  %338 = vmatprep.subr.bf16.mxu0 0
  %339 = vmatpush1.bf16.msra.mxu0 %v276
  %340 = vmatprep.subr.bf16.mxu0 0
  %341 = vmatpush1.bf16.msra.mxu0 %v277
  %342 = vmatprep.subr.bf16.mxu0 0
  %343 = vmatpush1.bf16.msra.mxu0 %v278
  %344 = vmatprep.subr.bf16.mxu0 0
  %345 = vmatpush1.bf16.msra.mxu0 %v279
  %346 = vmatprep.subr.bf16.mxu0 0
  %347 = vmatpush1.bf16.msra.mxu0 %v280
  %348 = vmatprep.subr.bf16.mxu0 0
  %349 = vmatpush1.bf16.msra.mxu0 %v281
  %350 = vmatprep.mubr.bf16.mxu0 %v74
  %351 = vmatmul.mubr.bf16.gmra.mrb[0].mxu0 %v65
  %v352 = vpop.f32.mrb[0].mxu0
  %v353 = vadd.f32 0.0, %v352
  %v354 = vpop.f32.mrb[0].mxu0
  %v355 = vpop.f32.mrb[0].mxu0
  %v356 = vadd.f32 0.0, %v355
  %v357 = vpop.f32.mrb[0].mxu0
  %358 = vmatprep.mubr.bf16.mxu0 %v76
  %359 = vmatmul.mubr.bf16.gmra.mrb[0].mxu0 %v68
  %v360 = vpop.f32.mrb[0].mxu0
  %v361 = vadd.f32 0.0, %v360
  %v362 = vpop.f32.mrb[0].mxu0
  %v363 = vpop.f32.mrb[0].mxu0
  %v364 = vadd.f32 0.0, %v363
  %v365 = vpop.f32.mrb[0].mxu0
  %366 = vmatprep.mubr.bf16.mxu0 %v104
  %367 = vmatmul.mubr.bf16.gmra.mrb[0].mxu0 %v95
  %v368 = vpop.f32.mrb[0].mxu0
  %v369 = vadd.f32 0.0, %v368
  %v370 = vpop.f32.mrb[0].mxu0
  %v371 = vpop.f32.mrb[0].mxu0
  %v372 = vadd.f32 0.0, %v371
  %v373 = vpop.f32.mrb[0].mxu0
  %374 = vmatprep.mubr.bf16.mxu0 %v106
  %375 = vmatmul.mubr.bf16.gmra.mrb[0].mxu0 %v98
  %v376 = vpop.f32.mrb[0].mxu0
  %v377 = vadd.f32 0.0, %v376
  %v378 = vpop.f32.mrb[0].mxu0
  %v379 = vpop.f32.mrb[0].mxu0
  %v380 = vadd.f32 0.0, %v379
  %v381 = vpop.f32.mrb[0].mxu0
  %382 = vmatprep.mubr.bf16.mxu0 %v136
  %383 = vmatmul.mubr.bf16.gmra.mrb[0].mxu0 %v127
  %v384 = vpop.f32.mrb[0].mxu0
  %v385 = vadd.f32 0.0, %v384
  %v386 = vpop.f32.mrb[0].mxu0
  %v387 = vpop.f32.mrb[0].mxu0
  %v388 = vadd.f32 0.0, %v387
  %v389 = vpop.f32.mrb[0].mxu0
  %390 = vmatprep.mubr.bf16.mxu0 %v138
  %391 = vmatmul.mubr.bf16.gmra.mrb[0].mxu0 %v130
  %v392 = vpop.f32.mrb[0].mxu0
  %v393 = vadd.f32 0.0, %v392
  %v394 = vpop.f32.mrb[0].mxu0
  %v395 = vpop.f32.mrb[0].mxu0
  %v396 = vadd.f32 0.0, %v395
  %v397 = vpop.f32.mrb[0].mxu0
  %398 = vmatprep.mubr.bf16.mxu0 %v154
  %399 = vmatmul.mubr.bf16.gmra.mrb[0].mxu0 %v146
  %v400 = vpop.f32.mrb[0].mxu0
  %v401 = vadd.f32 0.0, %v400
  %v402 = vpop.f32.mrb[0].mxu0
  %v403 = vpop.f32.mrb[0].mxu0
  %v404 = vadd.f32 0.0, %v403
  %v405 = vpop.f32.mrb[0].mxu0
  %406 = vmatprep.mubr.bf16.mxu0 %v156
  %407 = vmatmul.mubr.bf16.gmra.mrb[0].mxu0 %v148
  %v408 = vpop.f32.mrb[0].mxu0
  %v409 = vadd.f32 0.0, %v408
  %v410 = vpop.f32.mrb[0].mxu0
  %v411 = vpop.f32.mrb[0].mxu0
  %v412 = vadd.f32 0.0, %v411
  %v413 = vpop.f32.mrb[0].mxu0
  %414 = vdwg.mxu0
  %415 = vmatprep.subr.bf16.mxu0 0
  %416 = vmatpush1.bf16.msra.mxu0 %v282
  %417 = vmatprep.subr.bf16.mxu0 0
  %418 = vmatpush1.bf16.msra.mxu0 %v283
  %419 = vmatprep.subr.bf16.mxu0 0
  %420 = vmatpush1.bf16.msra.mxu0 0
  %421 = vmatprep.subr.bf16.mxu0 0
  %422 = vmatpush1.bf16.msra.mxu0 0
  %423 = vmatprep.subr.bf16.mxu0 0
  %424 = vmatpush1.bf16.msra.mxu0 0
  %425 = vmatprep.subr.bf16.mxu0 0
  %426 = vmatpush1.bf16.msra.mxu0 0
  %427 = vmatprep.subr.bf16.mxu0 0
  %428 = vmatpush1.bf16.msra.mxu0 0
  %429 = vmatprep.subr.bf16.mxu0 0
  %430 = vmatpush1.bf16.msra.mxu0 0
  %431 = vmatprep.subr.bf16.mxu0 0
  %432 = vmatpush1.bf16.msra.mxu0 0
  %433 = vmatprep.subr.bf16.mxu0 0
  %434 = vmatpush1.bf16.msra.mxu0 0
  %435 = vmatprep.subr.bf16.mxu0 0
  %436 = vmatpush1.bf16.msra.mxu0 0
  %437 = vmatprep.subr.bf16.mxu0 0
  %438 = vmatpush1.bf16.msra.mxu0 0
  %439 = vmatprep.subr.bf16.mxu0 0
  %440 = vmatpush1.bf16.msra.mxu0 0
  %441 = vmatprep.subr.bf16.mxu0 0
  %442 = vmatpush1.bf16.msra.mxu0 0
  %443 = vmatprep.subr.bf16.mxu0 0
  %444 = vmatpush1.bf16.msra.mxu0 0
  %445 = vmatprep.subr.bf16.mxu0 0
  %446 = vmatpush1.bf16.msra.mxu0 0
  %447 = vmatprep.mubr.bf16.mxu0 0
  %448 = vmatmul.mubr.bf16.gmra.mrb[0].mxu0 %v302
  %v449 = vpop.f32.mrb[0].mxu0
  %v450 = vadd.f32 %v353, %v449
  %v451 = vpop.f32.mrb[0].mxu0
  %v452 = vpop.f32.mrb[0].mxu0
  %v453 = vadd.f32 %v356, %v452
  %v454 = vpop.f32.mrb[0].mxu0
  %455 = vmatprep.mubr.bf16.mxu0 0
  %456 = vmatmul.mubr.bf16.gmra.mrb[0].mxu0 %v304
  %v457 = vpop.f32.mrb[0].mxu0
  %v458 = vadd.f32 %v361, %v457
  %v459 = vpop.f32.mrb[0].mxu0
  %v460 = vpop.f32.mrb[0].mxu0
  %v461 = vadd.f32 %v364, %v460
  %v462 = vpop.f32.mrb[0].mxu0
  %463 = vmatprep.mubr.bf16.mxu0 0
  %464 = vmatmul.mubr.bf16.gmra.mrb[0].mxu0 %v306
  %v465 = vpop.f32.mrb[0].mxu0
  %v466 = vadd.f32 %v369, %v465
  %v467 = vpop.f32.mrb[0].mxu0
  %v468 = vpop.f32.mrb[0].mxu0
  %v469 = vadd.f32 %v372, %v468
  %v470 = vpop.f32.mrb[0].mxu0
  %471 = vmatprep.mubr.bf16.mxu0 0
  %472 = vmatmul.mubr.bf16.gmra.mrb[0].mxu0 %v308
  %v473 = vpop.f32.mrb[0].mxu0
  %v474 = vadd.f32 %v377, %v473
  %v475 = vpop.f32.mrb[0].mxu0
  %v476 = vpop.f32.mrb[0].mxu0
  %v477 = vadd.f32 %v380, %v476
  %v478 = vpop.f32.mrb[0].mxu0
  %479 = vmatprep.mubr.bf16.mxu0 0
  %480 = vmatmul.mubr.bf16.gmra.mrb[0].mxu0 %v310
  %v481 = vpop.f32.mrb[0].mxu0
  %v482 = vadd.f32 %v385, %v481
  %v483 = vpop.f32.mrb[0].mxu0
  %v484 = vpop.f32.mrb[0].mxu0
  %v485 = vadd.f32 %v388, %v484
  %v486 = vpop.f32.mrb[0].mxu0
  %487 = vmatprep.mubr.bf16.mxu0 0
  %488 = vmatmul.mubr.bf16.gmra.mrb[0].mxu0 %v312
  %v489 = vpop.f32.mrb[0].mxu0
  %v490 = vadd.f32 %v393, %v489
  %v491 = vpop.f32.mrb[0].mxu0
  %v492 = vpop.f32.mrb[0].mxu0
  %v493 = vadd.f32 %v396, %v492
  %v494 = vpop.f32.mrb[0].mxu0
  %495 = vmatprep.mubr.bf16.mxu0 0
  %496 = vmatmul.mubr.bf16.gmra.mrb[0].mxu0 %v314
  %v497 = vpop.f32.mrb[0].mxu0
  %v498 = vadd.f32 %v401, %v497
  %v499 = vpop.f32.mrb[0].mxu0
  %v500 = vpop.f32.mrb[0].mxu0
  %v501 = vadd.f32 %v404, %v500
  %v502 = vpop.f32.mrb[0].mxu0
  %503 = vmatprep.mubr.bf16.mxu0 0
  %504 = vmatmul.mubr.bf16.gmra.mrb[0].mxu0 %v316
  %v505 = vpop.f32.mrb[0].mxu0
  %v506 = vadd.f32 %v409, %v505
  %v507 = vpop.f32.mrb[0].mxu0
  %v508 = vpop.f32.mrb[0].mxu0
  %v509 = vadd.f32 %v412, %v508
  %v510 = vpop.f32.mrb[0].mxu0
  %511 = vdwg.mxu0
  %v512 = vmax.f32 %v450, %v466
  %v513 = vmax.f32 %v453, %v469
  %v514 = vmax.f32 %v458, %v474
  %v515 = vmax.f32 %v461, %v477
  %v516 = vmax.f32 %v482, %v498
  %v517 = vmax.f32 %v485, %v501
  %v518 = vmax.f32 %v490, %v506
  %v519 = vmax.f32 %v493, %v509
  %v520 = vmax.f32 %v512, %v516
  %v521 = vmax.f32 %v513, %v517
  %v522 = vmax.f32 %v514, %v518
  %v523 = vmax.f32 %v515, %v519
  %v524 = vld [vmem:[%s2] sm:$0x1]
  %v526 = vlaneseq
  %v527 = vshrl.u32 %v526, 7
  %v528 = vsub.s32 0, %v527
  %v529 = vrot.slane %v524, %v528
  %v531 = vadd.f32 %v520, %v529
  %v532 = vadd.f32 %v521, %v529
  %v533 = vadd.f32 %v522, %v529
  %v534 = vadd.f32 %v523, %v529
  %v535 = vmax.f32 %v531, 0.0
  %v536 = vmax.f32 %v532, 0.0
  %v537 = vmax.f32 %v533, 0.0
  %v538 = vmax.f32 %v534, 0.0
  %v539 = vpack.c.bf16 %v536, %v535
  %v540 = vpack.c.bf16 %v538, %v537
  %v543 = vunpack.c.l.b16 %v539
  %v544 = vunpack.c.h.b16 %v539
  %v545 = vunpack.c.l.b16 %v540
  %v546 = vunpack.c.h.b16 %v540
  %v547 = vpack.c.b16 %v543, %v543
  %v548 = vpack.c.b16 %v544, %v544
  %v549 = vpack.c.b16 %v545, %v545
  %v550 = vpack.c.b16 %v546, %v546
  %vm555 = vcmask 519168
  %556 = vst.msk [vmem:[%s3] sm:$0xf] %vm555, %v547
  %557 = vst.msk [vmem:[%s3 + $0x4] sm:$0xf] %vm555, %v548
  %558 = vst.msk [vmem:[%s3 + $0x8] sm:$0xf] %vm555, %v549
  %559 = vst.msk [vmem:[%s3 + $0xc] sm:$0xf] %vm555, %v550
  // Predicated region
  $region14: #{classifier_forward.4} parent=0 // pred_check
    _
  $region15: #{classifier_forward.4} parent=0 // pred_check_branch
    %561 = sbr.rel (0) target = $region17
  $region16: #{classifier_forward.4} parent=0 // pred_region
    _
  $region17: #{classifier_forward.4} parent=0 // pred_fallthru
    _
  // Predicated region
  $region18: #{classifier_forward.4} parent=0 // pred_check
    _
  $region19: #{classifier_forward.4} parent=0 // pred_check_branch
    %563 = sbr.rel (0) target = $region21
  $region20: #{classifier_forward.4} parent=0 // pred_region
    _
  $region21: #{classifier_forward.4} parent=0 // pred_fallthru
    _

// kernel: classifier_forward.5
$region0: #{classifier_forward.5}
  #allocation0 [shape = 'u32[]', space=smem, size = 0x4, offset = 0x4, fixed_abs, tag = 'smem constant byte address 0x4 - core index']
  #allocation1 [shape = 'u32[144,128]{1,0:T(1,128)}', space=vmem, size = 0x12000, scoped, tag = 'internal scratch']
  %s0 = inlined_call_operand.vmem [shape: bf16[8,1024], index: 0, kind: input, shape index: {}]
  %s1 = inlined_call_operand.vmem [shape: bf16[576,128], index: 1, kind: input, shape index: {}]
  %s2 = inlined_call_operand.vmem [shape: f32[1,128], index: 2, kind: input, shape index: {}]
  %s3 = inlined_call_operand.vmem [shape: bf16[8,128], index: 3, kind: output, shape index: {}]
  %s4 = sld [smem:[#allocation0]]
  $region22: #{classifier_forward.5} parent=0
    _
  %s6 = ssub.s32 1, %s4
  %s7 = scalar_select 0, %s6, %s4
  // Predicated region
  $region2: #{classifier_forward.5} parent=0 // pred_check
    _
  $region3: #{classifier_forward.5} parent=0 // pred_check_branch
    %9 = sbr.rel (0) target = $region5
  $region4: #{classifier_forward.5} parent=0 // pred_region
    _
  $region5: #{classifier_forward.5} parent=0 // pred_fallthru
    _
  // Predicated region
  $region6: #{classifier_forward.5} parent=0 // pred_check
    _
  $region7: #{classifier_forward.5} parent=0 // pred_check_branch
    %11 = sbr.rel (0) target = $region9
  $region8: #{classifier_forward.5} parent=0 // pred_region
    _
  $region9: #{classifier_forward.5} parent=0 // pred_fallthru
    _
  // Predicated region
  $region10: #{classifier_forward.5} parent=0 // pred_check
    _
  $region11: #{classifier_forward.5} parent=0 // pred_check_branch
    %13 = sbr.rel (0) target = $region13
  $region12: #{classifier_forward.5} parent=0 // pred_region
    _
  $region13: #{classifier_forward.5} parent=0 // pred_fallthru
    _
  %v15 = vld [vmem:[%s0] sm:$0xff]
  %v16 = vld [vmem:[%s0 + $0x8] sm:$0xff]
  %v17 = vld [vmem:[%s0 + $0x10] sm:$0xff]
  %v18 = vld [vmem:[%s0 + $0x18] sm:$0xff]
  %v20 = vunpack.c.h.b16 %v15
  %v21 = vpack.c.b16 %v20, %v20
  %v23 = vunpack.c.l.b16 %v16
  %v24 = vpack.c.b16 %v23, %v23
  %25 = vrot.lane.b32.xlu0 %v24, 64
  %v26 = vpop.permute.xlu0 %25
  %v27 = vunpack.c.h.b16 %v16
  %v28 = vpack.c.b16 %v27, %v27
  %29 = vrot.lane.b32.xlu0 %v28, 64
  %v30 = vpop.permute.xlu0 %29
  %v32 = vunpack.c.h.b16 %v17
  %v33 = vpack.c.b16 %v32, %v32
  %vm34 = vcmask 523264
  %v38 = vsel %vm34, %v21, %v26
  %v40 = vsel %vm34, %v26, %v30
  %v42 = vunpack.c.l.b16 %v15
  %v43 = vpack.c.b16 %v42, %v42
  %44 = vrot.lane.b32.xlu0 %v43, 64
  %v45 = vpop.permute.xlu0 %44
  %46 = vrot.lane.b32.xlu0 %v21, 64
  %v47 = vpop.permute.xlu0 %46
  %v48 = vunpack.c.l.b16 %v17
  %v49 = vpack.c.b16 %v48, %v48
  %50 = vrot.lane.b32.xlu0 %v49, 64
  %v51 = vpop.permute.xlu0 %50
  %52 = vrot.lane.b32.xlu0 %v33, 64
  %v53 = vpop.permute.xlu0 %52
  %v56 = vsel %vm34, %v45, %v47
  %v58 = vsel %vm34, %v47, %v16
  %v62 = vsel %vm34, %v51, %v53
  %v64 = vunpack.c.h.b16 %v18
  %v65 = vpack.c.b16 %v64, %v64
  %v66 = vsel %vm34, %v28, %v51
  %v68 = vunpack.c.l.b16 %v18
  %v69 = vpack.c.b16 %v68, %v68
  %70 = vrot.lane.b32.xlu0 %v69, 64
  %v71 = vpop.permute.xlu0 %70
  %72 = vrot.lane.b32.xlu0 %v65, 64
  %v73 = vpop.permute.xlu0 %72
  %v74 = vsel %vm34, %v30, %v17
  %v78 = vsel %vm34, %v71, %v73
  %v83 = vrot.slane %v56, 4
  %v84 = vrot.slane %v58, 4
  %v85 = vrot.slane %v28, 4
  %v86 = vrot.slane %v62, 4
  %v87 = vrot.slane %v53, 4
  %v92 = vrot.slane %v40, 4
  %v93 = vrot.slane %v74, 4
  %v94 = vrot.slane %v33, 4
  %v95 = vrot.slane %v78, 4
  %v96 = vrot.slane %v73, 4
  %vm97 = vcmask 1043456
  %v99 = vsel %vm97, %v15, %v83
  %v102 = vsel %vm97, %v38, %v84
  %v105 = vsel %vm97, %v40, %v85
  %v108 = vsel %vm97, %v17, %v86
  %v111 = vsel %vm97, %v33, %v87
  %v113 = vsel %vm97, %v16, %v92
  %v116 = vsel %vm97, %v66, %v93
  %v119 = vsel %vm97, %v62, %v94
  %v122 = vsel %vm97, %v18, %v95
  %v126 = vsel %vm97, %v65, %v96
  %v127 = vld [vmem:[%s1] sm:$0xf]
  %v128 = vld [vmem:[%s1 + $0x4] sm:$0xf]
  %v129 = vld [vmem:[%s1 + $0x8] sm:$0xf]
  %v130 = vld [vmem:[%s1 + $0xc] sm:$0xf]
  %v131 = vld [vmem:[%s1 + $0x10] sm:$0xf]
  %v132 = vld [vmem:[%s1 + $0x14] sm:$0xf]
  %v133 = vld [vmem:[%s1 + $0x18] sm:$0xf]
  %v134 = vld [vmem:[%s1 + $0x1c] sm:$0xf]
  %v135 = vld [vmem:[%s1 + $0x20] sm:$0xf]
  %v136 = vld [vmem:[%s1 + $0x24] sm:$0xf]
  %v137 = vld [vmem:[%s1 + $0x28] sm:$0xf]
  %v138 = vld [vmem:[%s1 + $0x2c] sm:$0xf]
  %v139 = vld [vmem:[%s1 + $0x30] sm:$0xf]
  %v140 = vld [vmem:[%s1 + $0x34] sm:$0xf]
  %v141 = vld [vmem:[%s1 + $0x38] sm:$0xf]
  %v142 = vld [vmem:[%s1 + $0x3c] sm:$0xf]
  %v143 = vld [vmem:[%s1 + $0x40] sm:$0xf]
  %v144 = vld [vmem:[%s1 + $0x44] sm:$0xf]
  %v145 = vld [vmem:[%s1 + $0x48] sm:$0xf]
  %v146 = vld [vmem:[%s1 + $0x4c] sm:$0xf]
  %v147 = vld [vmem:[%s1 + $0x50] sm:$0xf]
  %v148 = vld [vmem:[%s1 + $0x54] sm:$0xf]
  %v149 = vld [vmem:[%s1 + $0x58] sm:$0xf]
  %v150 = vld [vmem:[%s1 + $0x5c] sm:$0xf]
  %v151 = vld [vmem:[%s1 + $0x60] sm:$0xf]
  %v152 = vld [vmem:[%s1 + $0x64] sm:$0xf]
  %v153 = vld [vmem:[%s1 + $0x68] sm:$0xf]
  %v154 = vld [vmem:[%s1 + $0x6c] sm:$0xf]
  %v155 = vld [vmem:[%s1 + $0x70] sm:$0xf]
  %v156 = vld [vmem:[%s1 + $0x74] sm:$0xf]
  %v157 = vld [vmem:[%s1 + $0x78] sm:$0xf]
  %v158 = vld [vmem:[%s1 + $0x7c] sm:$0xf]
  %v159 = vld [vmem:[%s1 + $0x80] sm:$0xf]
  %v160 = vld [vmem:[%s1 + $0x84] sm:$0xf]
  %v161 = vld [vmem:[%s1 + $0x88] sm:$0xf]
  %v162 = vld [vmem:[%s1 + $0x8c] sm:$0xf]
  %v163 = vld [vmem:[%s1 + $0x90] sm:$0xf]
  %v164 = vld [vmem:[%s1 + $0x94] sm:$0xf]
  %v165 = vld [vmem:[%s1 + $0x98] sm:$0xf]
  %v166 = vld [vmem:[%s1 + $0x9c] sm:$0xf]
  %v167 = vld [vmem:[%s1 + $0xa0] sm:$0xf]
  %v168 = vld [vmem:[%s1 + $0xa4] sm:$0xf]
  %v169 = vld [vmem:[%s1 + $0xa8] sm:$0xf]
  %v170 = vld [vmem:[%s1 + $0xac] sm:$0xf]
  %v171 = vld [vmem:[%s1 + $0xb0] sm:$0xf]
  %v172 = vld [vmem:[%s1 + $0xb4] sm:$0xf]
  %v173 = vld [vmem:[%s1 + $0xb8] sm:$0xf]
  %v174 = vld [vmem:[%s1 + $0xbc] sm:$0xf]
  %v175 = vld [vmem:[%s1 + $0xc0] sm:$0xf]
  %v176 = vld [vmem:[%s1 + $0xc4] sm:$0xf]
  %v177 = vld [vmem:[%s1 + $0xc8] sm:$0xf]
  %v178 = vld [vmem:[%s1 + $0xcc] sm:$0xf]
  %v179 = vld [vmem:[%s1 + $0xd0] sm:$0xf]
  %v180 = vld [vmem:[%s1 + $0xd4] sm:$0xf]
  %v181 = vld [vmem:[%s1 + $0xd8] sm:$0xf]
  %v182 = vld [vmem:[%s1 + $0xdc] sm:$0xf]
  %v183 = vld [vmem:[%s1 + $0xe0] sm:$0xf]
  %v184 = vld [vmem:[%s1 + $0xe4] sm:$0xf]
  %v185 = vld [vmem:[%s1 + $0xe8] sm:$0xf]
  %v186 = vld [vmem:[%s1 + $0xec] sm:$0xf]
  %v187 = vld [vmem:[%s1 + $0xf0] sm:$0xf]
  %v188 = vld [vmem:[%s1 + $0xf4] sm:$0xf]
  %v189 = vld [vmem:[%s1 + $0xf8] sm:$0xf]
  %v190 = vld [vmem:[%s1 + $0xfc] sm:$0xf]
  %v191 = vld [vmem:[%s1 + $0x100] sm:$0xf]
  %v192 = vld [vmem:[%s1 + $0x104] sm:$0xf]
  %v193 = vld [vmem:[%s1 + $0x108] sm:$0xf]
  %v194 = vld [vmem:[%s1 + $0x10c] sm:$0xf]
  %v195 = vld [vmem:[%s1 + $0x110] sm:$0xf]
  %v196 = vld [vmem:[%s1 + $0x114] sm:$0xf]
  %v197 = vld [vmem:[%s1 + $0x118] sm:$0xf]
  %v198 = vld [vmem:[%s1 + $0x11c] sm:$0xf]
  %v271 = vunpack.c.l.b16 %v127
  %v272 = vunpack.c.l.b16 %v128
  %v273 = vunpack.c.l.b16 %v129
  %v274 = vunpack.c.l.b16 %v130
  %v275 = vunpack.c.l.b16 %v131
  %v276 = vunpack.c.l.b16 %v132
  %v277 = vunpack.c.l.b16 %v133
  %v278 = vunpack.c.l.b16 %v134
  %v279 = vunpack.c.l.b16 %v135
  %v280 = vunpack.c.l.b16 %v136
  %v281 = vunpack.c.l.b16 %v137
  %v282 = vunpack.c.l.b16 %v138
  %v283 = vunpack.c.l.b16 %v139
  %v284 = vunpack.c.l.b16 %v140
  %v285 = vunpack.c.l.b16 %v141
  %v286 = vunpack.c.l.b16 %v142
  %v287 = vunpack.c.l.b16 %v143
  %v288 = vunpack.c.l.b16 %v144
  %v289 = vunpack.c.l.b16 %v145
  %v290 = vunpack.c.l.b16 %v146
  %v291 = vunpack.c.l.b16 %v147
  %v292 = vunpack.c.l.b16 %v148
  %v293 = vunpack.c.l.b16 %v149
  %v294 = vunpack.c.l.b16 %v150
  %v295 = vunpack.c.l.b16 %v151
  %v296 = vunpack.c.l.b16 %v152
  %v297 = vunpack.c.l.b16 %v153
  %v298 = vunpack.c.l.b16 %v154
  %v299 = vunpack.c.l.b16 %v155
  %v300 = vunpack.c.l.b16 %v156
  %v301 = vunpack.c.l.b16 %v157
  %v302 = vunpack.c.l.b16 %v158
  %v303 = vunpack.c.l.b16 %v159
  %v304 = vunpack.c.l.b16 %v160
  %v305 = vunpack.c.l.b16 %v161
  %v306 = vunpack.c.l.b16 %v162
  %v307 = vunpack.c.l.b16 %v163
  %v308 = vunpack.c.l.b16 %v164
  %v309 = vunpack.c.l.b16 %v165
  %v310 = vunpack.c.l.b16 %v166
  %v311 = vunpack.c.l.b16 %v167
  %v312 = vunpack.c.l.b16 %v168
  %v313 = vunpack.c.l.b16 %v169
  %v314 = vunpack.c.l.b16 %v170
  %v315 = vunpack.c.l.b16 %v171
  %v316 = vunpack.c.l.b16 %v172
  %v317 = vunpack.c.l.b16 %v173
  %v318 = vunpack.c.l.b16 %v174
  %v319 = vunpack.c.l.b16 %v175
  %v320 = vunpack.c.l.b16 %v176
  %v321 = vunpack.c.l.b16 %v177
  %v322 = vunpack.c.l.b16 %v178
  %v323 = vunpack.c.l.b16 %v179
  %v324 = vunpack.c.l.b16 %v180
  %v325 = vunpack.c.l.b16 %v181
  %v326 = vunpack.c.l.b16 %v182
  %v327 = vunpack.c.l.b16 %v183
  %v328 = vunpack.c.l.b16 %v184
  %v329 = vunpack.c.l.b16 %v185
  %v330 = vunpack.c.l.b16 %v186
  %v331 = vunpack.c.l.b16 %v187
  %v332 = vunpack.c.l.b16 %v188
  %v333 = vunpack.c.l.b16 %v189
  %v334 = vunpack.c.l.b16 %v190
  %v335 = vunpack.c.l.b16 %v191
  %v336 = vunpack.c.l.b16 %v192
  %v337 = vunpack.c.l.b16 %v193
  %v338 = vunpack.c.l.b16 %v194
  %v339 = vunpack.c.l.b16 %v195
  %v340 = vunpack.c.l.b16 %v196
  %v341 = vunpack.c.l.b16 %v197
  %v342 = vunpack.c.l.b16 %v198
  %v343 = vpack.c.b16 %v272, %v271
  %v344 = vpack.c.b16 %v274, %v273
  %v345 = vpack.c.b16 %v276, %v275
  %v346 = vpack.c.b16 %v278, %v277
  %v347 = vpack.c.b16 %v280, %v279
  %v348 = vpack.c.b16 %v282, %v281
  %v349 = vpack.c.b16 %v284, %v283
  %v350 = vpack.c.b16 %v286, %v285
  %v351 = vpack.c.b16 %v288, %v287
  %v352 = vpack.c.b16 %v290, %v289
  %v353 = vpack.c.b16 %v292, %v291
  %v354 = vpack.c.b16 %v294, %v293
  %v355 = vpack.c.b16 %v296, %v295
  %v356 = vpack.c.b16 %v298, %v297
  %v357 = vpack.c.b16 %v300, %v299
  %v358 = vpack.c.b16 %v302, %v301
  %v359 = vpack.c.b16 %v304, %v303
  %v360 = vpack.c.b16 %v306, %v305
  %v361 = vpack.c.b16 %v308, %v307
  %v362 = vpack.c.b16 %v310, %v309
  %v363 = vpack.c.b16 %v312, %v311
  %v364 = vpack.c.b16 %v314, %v313
  %v365 = vpack.c.b16 %v316, %v315
  %v366 = vpack.c.b16 %v318, %v317
  %v367 = vpack.c.b16 %v320, %v319
  %v368 = vpack.c.b16 %v322, %v321
  %v369 = vpack.c.b16 %v324, %v323
  %v370 = vpack.c.b16 %v326, %v325
  %v371 = vpack.c.b16 %v328, %v327
  %v372 = vpack.c.b16 %v330, %v329
  %v373 = vpack.c.b16 %v332, %v331
  %v374 = vpack.c.b16 %v334, %v333
  %v375 = vpack.c.b16 %v336, %v335
  %v376 = vpack.c.b16 %v338, %v337
  %v377 = vpack.c.b16 %v340, %v339
  %v378 = vpack.c.b16 %v342, %v341
  %v415 = vsel %vm34, %v111, 0
  %v417 = vsel %vm34, %v126, 0
  %419 = vmatprep.subr.bf16.mxu0 0
  %420 = vmatpush1.bf16.msra.mxu0 %v343
  %421 = vmatprep.subr.bf16.mxu0 0
  %422 = vmatpush1.bf16.msra.mxu0 %v344
  %423 = vmatprep.subr.bf16.mxu0 0
  %424 = vmatpush1.bf16.msra.mxu0 %v345
  %425 = vmatprep.subr.bf16.mxu0 0
  %426 = vmatpush1.bf16.msra.mxu0 %v346
  %427 = vmatprep.subr.bf16.mxu0 0
  %428 = vmatpush1.bf16.msra.mxu0 %v347
  %429 = vmatprep.subr.bf16.mxu0 0
  %430 = vmatpush1.bf16.msra.mxu0 %v348
  %431 = vmatprep.subr.bf16.mxu0 0
  %432 = vmatpush1.bf16.msra.mxu0 %v349
  %433 = vmatprep.subr.bf16.mxu0 0
  %434 = vmatpush1.bf16.msra.mxu0 %v350
  %435 = vmatprep.subr.bf16.mxu0 0
  %436 = vmatpush1.bf16.msra.mxu0 %v351
  %437 = vmatprep.subr.bf16.mxu0 0
  %438 = vmatpush1.bf16.msra.mxu0 %v352
  %439 = vmatprep.subr.bf16.mxu0 0
  %440 = vmatpush1.bf16.msra.mxu0 %v353
  %441 = vmatprep.subr.bf16.mxu0 0
  %442 = vmatpush1.bf16.msra.mxu0 %v354
  %443 = vmatprep.subr.bf16.mxu0 0
  %444 = vmatpush1.bf16.msra.mxu0 %v355
  %445 = vmatprep.subr.bf16.mxu0 0
  %446 = vmatpush1.bf16.msra.mxu0 %v356
  %447 = vmatprep.subr.bf16.mxu0 0
  %448 = vmatpush1.bf16.msra.mxu0 %v357
  %449 = vmatprep.subr.bf16.mxu0 0
  %450 = vmatpush1.bf16.msra.mxu0 %v358
  %451 = vmatprep.mubr.bf16.mxu0 %v102
  %452 = vmatmul.mubr.bf16.gmra.mrb[0].mxu0 %v99
  %v453 = vpop.f32.mrb[0].mxu0
  %v454 = vadd.f32 0.0, %v453
  %v455 = vpop.f32.mrb[0].mxu0
  %v456 = vpop.f32.mrb[0].mxu0
  %v457 = vadd.f32 0.0, %v456
  %v458 = vpop.f32.mrb[0].mxu0
  %459 = vmatprep.mubr.bf16.mxu0 %v116
  %460 = vmatmul.mubr.bf16.gmra.mrb[0].mxu0 %v113
  %v461 = vpop.f32.mrb[0].mxu0
  %v462 = vadd.f32 0.0, %v461
  %v463 = vpop.f32.mrb[0].mxu0
  %v464 = vpop.f32.mrb[0].mxu0
  %v465 = vadd.f32 0.0, %v464
  %v466 = vpop.f32.mrb[0].mxu0
  %467 = vdwg.mxu0
  %468 = vmatprep.subr.bf16.mxu0 0
  %469 = vmatpush1.bf16.msra.mxu0 %v359
  %470 = vmatprep.subr.bf16.mxu0 0
  %471 = vmatpush1.bf16.msra.mxu0 %v360
  %472 = vmatprep.subr.bf16.mxu0 0
  %473 = vmatpush1.bf16.msra.mxu0 %v361
  %474 = vmatprep.subr.bf16.mxu0 0
  %475 = vmatpush1.bf16.msra.mxu0 %v362
  %476 = vmatprep.subr.bf16.mxu0 0
  %477 = vmatpush1.bf16.msra.mxu0 %v363
  %478 = vmatprep.subr.bf16.mxu0 0
  %479 = vmatpush1.bf16.msra.mxu0 %v364
  %480 = vmatprep.subr.bf16.mxu0 0
  %481 = vmatpush1.bf16.msra.mxu0 %v365
  %482 = vmatprep.subr.bf16.mxu0 0
  %483 = vmatpush1.bf16.msra.mxu0 %v366
  %484 = vmatprep.subr.bf16.mxu0 0
  %485 = vmatpush1.bf16.msra.mxu0 %v367
  %486 = vmatprep.subr.bf16.mxu0 0
  %487 = vmatpush1.bf16.msra.mxu0 %v368
  %488 = vmatprep.subr.bf16.mxu0 0
  %489 = vmatpush1.bf16.msra.mxu0 %v369
  %490 = vmatprep.subr.bf16.mxu0 0
  %491 = vmatpush1.bf16.msra.mxu0 %v370
  %492 = vmatprep.subr.bf16.mxu0 0
  %493 = vmatpush1.bf16.msra.mxu0 %v371
  %494 = vmatprep.subr.bf16.mxu0 0
  %495 = vmatpush1.bf16.msra.mxu0 %v372
  %496 = vmatprep.subr.bf16.mxu0 0
  %497 = vmatpush1.bf16.msra.mxu0 %v373
  %498 = vmatprep.subr.bf16.mxu0 0
  %499 = vmatpush1.bf16.msra.mxu0 %v374
  %500 = vmatprep.mubr.bf16.mxu0 %v108
  %501 = vmatmul.mubr.bf16.gmra.mrb[0].mxu0 %v105
  %v502 = vpop.f32.mrb[0].mxu0
  %v503 = vadd.f32 %v454, %v502
  %v504 = vpop.f32.mrb[0].mxu0
  %v505 = vpop.f32.mrb[0].mxu0
  %v506 = vadd.f32 %v457, %v505
  %v507 = vpop.f32.mrb[0].mxu0
  %508 = vmatprep.mubr.bf16.mxu0 %v122
  %509 = vmatmul.mubr.bf16.gmra.mrb[0].mxu0 %v119
  %v510 = vpop.f32.mrb[0].mxu0
  %v511 = vadd.f32 %v462, %v510
  %v512 = vpop.f32.mrb[0].mxu0
  %v513 = vpop.f32.mrb[0].mxu0
  %v514 = vadd.f32 %v465, %v513
  %v515 = vpop.f32.mrb[0].mxu0
  %516 = vdwg.mxu0
  %517 = vmatprep.subr.bf16.mxu0 0
  %518 = vmatpush1.bf16.msra.mxu0 %v375
  %519 = vmatprep.subr.bf16.mxu0 0
  %520 = vmatpush1.bf16.msra.mxu0 %v376
  %521 = vmatprep.subr.bf16.mxu0 0
  %522 = vmatpush1.bf16.msra.mxu0 %v377
  %523 = vmatprep.subr.bf16.mxu0 0
  %524 = vmatpush1.bf16.msra.mxu0 %v378
  %525 = vmatprep.subr.bf16.mxu0 0
  %526 = vmatpush1.bf16.msra.mxu0 0
  %527 = vmatprep.subr.bf16.mxu0 0
  %528 = vmatpush1.bf16.msra.mxu0 0
  %529 = vmatprep.subr.bf16.mxu0 0
  %530 = vmatpush1.bf16.msra.mxu0 0
  %531 = vmatprep.subr.bf16.mxu0 0
  %532 = vmatpush1.bf16.msra.mxu0 0
  %533 = vmatprep.subr.bf16.mxu0 0
  %534 = vmatpush1.bf16.msra.mxu0 0
  %535 = vmatprep.subr.bf16.mxu0 0
  %536 = vmatpush1.bf16.msra.mxu0 0
  %537 = vmatprep.subr.bf16.mxu0 0
  %538 = vmatpush1.bf16.msra.mxu0 0
  %539 = vmatprep.subr.bf16.mxu0 0
  %540 = vmatpush1.bf16.msra.mxu0 0
  %541 = vmatprep.subr.bf16.mxu0 0
  %542 = vmatpush1.bf16.msra.mxu0 0
  %543 = vmatprep.subr.bf16.mxu0 0
  %544 = vmatpush1.bf16.msra.mxu0 0
  %545 = vmatprep.subr.bf16.mxu0 0
  %546 = vmatpush1.bf16.msra.mxu0 0
  %547 = vmatprep.subr.bf16.mxu0 0
  %548 = vmatpush1.bf16.msra.mxu0 0
  %549 = vmatprep.mubr.bf16.mxu0 0
  %550 = vmatmul.mubr.bf16.gmra.mrb[0].mxu0 %v415
  %v551 = vpop.f32.mrb[0].mxu0
  %v552 = vadd.f32 %v503, %v551
  %v553 = vpop.f32.mrb[0].mxu0
  %v554 = vpop.f32.mrb[0].mxu0
  %v555 = vadd.f32 %v506, %v554
  %v556 = vpop.f32.mrb[0].mxu0
  %557 = vmatprep.mubr.bf16.mxu0 0
  %558 = vmatmul.mubr.bf16.gmra.mrb[0].mxu0 %v417
  %v559 = vpop.f32.mrb[0].mxu0
  %v560 = vadd.f32 %v511, %v559
  %v561 = vpop.f32.mrb[0].mxu0
  %v562 = vpop.f32.mrb[0].mxu0
  %v563 = vadd.f32 %v514, %v562
  %v564 = vpop.f32.mrb[0].mxu0
  %565 = vdwg.mxu0
  %v566 = vmax.f32 %v552, %v555
  %v567 = vmax.f32 %v560, %v563
  %v568 = vmax.f32 %v566, %v567
  %v569 = vld [vmem:[%s2] sm:$0x1]
  %v571 = vlaneseq
  %v572 = vshrl.u32 %v571, 7
  %v573 = vsub.s32 0, %v572
  %v574 = vrot.slane %v569, %v573
  %v576 = vadd.f32 %v568, %v574
  %v577 = vmax.f32 %v576, 0.0
  %v578 = vpack.c.bf16 %v577, %v577
  %579 = vst [vmem:[%s3] sm:$0xf] %v578
  // Predicated region
  $region14: #{classifier_forward.5} parent=0 // pred_check
    _
  $region15: #{classifier_forward.5} parent=0 // pred_check_branch
    %581 = sbr.rel (0) target = $region17
  $region16: #{classifier_forward.5} parent=0 // pred_region
    _
  $region17: #{classifier_forward.5} parent=0 // pred_fallthru
    _
  // Predicated region
  $region18: #{classifier_forward.5} parent=0 // pred_check
    _
  $region19: #{classifier_forward.5} parent=0 // pred_check_branch
    %583 = sbr.rel (0) target = $region21
  $region20: #{classifier_forward.5} parent=0 // pred_region
    _
  $region21: #{classifier_forward.5} parent=0 // pred_fallthru
    _

// kernel: classifier_forward.6
$region0: #{classifier_forward.6}
  #allocation0 [shape = 'u32[]', space=smem, size = 0x4, offset = 0x4, fixed_abs, tag = 'smem constant byte address 0x4 - core index']
  #allocation1 [shape = 'u32[144,128]{1,0:T(1,128)}', space=vmem, size = 0x12000, scoped, tag = 'internal scratch']
  %s0 = inlined_call_operand.vmem [shape: bf16[8,2048], index: 0, kind: input, shape index: {}]
  %s1 = inlined_call_operand.vmem [shape: bf16[1152,256], index: 1, kind: input, shape index: {}]
  %s2 = inlined_call_operand.vmem [shape: f32[1,256], index: 2, kind: input, shape index: {}]
  %s3 = inlined_call_operand.vmem [shape: bf16[8,256], index: 3, kind: output, shape index: {}]
  %s4 = sld [smem:[#allocation0]]
  $region22: #{classifier_forward.6} parent=0
    _
  %s6 = ssub.s32 1, %s4
  %s7 = scalar_select 0, %s6, %s4
  // Predicated region
  $region2: #{classifier_forward.6} parent=0 // pred_check
    _
  $region3: #{classifier_forward.6} parent=0 // pred_check_branch
    %9 = sbr.rel (0) target = $region5
  $region4: #{classifier_forward.6} parent=0 // pred_region
    _
  $region5: #{classifier_forward.6} parent=0 // pred_fallthru
    _
  // Predicated region
  $region6: #{classifier_forward.6} parent=0 // pred_check
    _
  $region7: #{classifier_forward.6} parent=0 // pred_check_branch
    %11 = sbr.rel (0) target = $region9
  $region8: #{classifier_forward.6} parent=0 // pred_region
    _
  $region9: #{classifier_forward.6} parent=0 // pred_fallthru
    _
  // Predicated region
  $region10: #{classifier_forward.6} parent=0 // pred_check
    _
  $region11: #{classifier_forward.6} parent=0 // pred_check_branch
    %13 = sbr.rel (0) target = $region13
  $region12: #{classifier_forward.6} parent=0 // pred_region
    _
  $region13: #{classifier_forward.6} parent=0 // pred_fallthru
    _
  %v15 = vld [vmem:[%s0] sm:$0xff]
  %v16 = vld [vmem:[%s0 + $0x8] sm:$0xff]
  %v17 = vld [vmem:[%s0 + $0x10] sm:$0xff]
  %v18 = vld [vmem:[%s0 + $0x18] sm:$0xff]
  %v19 = vld [vmem:[%s0 + $0x20] sm:$0xff]
  %v20 = vld [vmem:[%s0 + $0x28] sm:$0xff]
  %v21 = vld [vmem:[%s0 + $0x30] sm:$0xff]
  %v22 = vld [vmem:[%s0 + $0x38] sm:$0xff]
  %v24 = vunpack.c.h.b16 %v15
  %v25 = vpack.c.b16 %v24, %v24
  %v27 = vunpack.c.h.b16 %v17
  %v28 = vpack.c.b16 %v27, %v27
  %v30 = vunpack.c.h.b16 %v19
  %v31 = vpack.c.b16 %v30, %v30
  %v33 = vunpack.c.h.b16 %v16
  %v34 = vpack.c.b16 %v33, %v33
  %v36 = vunpack.c.h.b16 %v18
  %v37 = vpack.c.b16 %v36, %v36
  %v39 = vunpack.c.h.b16 %v20
  %v40 = vpack.c.b16 %v39, %v39
  %v42 = vunpack.c.h.b16 %v21
  %v43 = vpack.c.b16 %v42, %v42
  %v45 = vunpack.c.h.b16 %v22
  %v46 = vpack.c.b16 %v45, %v45
  %v47 = vrot.slane %v25, 4
  %v48 = vrot.slane %v16, 4
  %v49 = vrot.slane %v34, 4
  %v50 = vrot.slane %v28, 4
  %v51 = vrot.slane %v18, 4
  %v52 = vrot.slane %v37, 4
  %v53 = vrot.slane %v31, 4
  %v54 = vrot.slane %v20, 4
  %v55 = vrot.slane %v40, 4
  %v56 = vrot.slane %v43, 4
  %v57 = vrot.slane %v22, 4
  %v58 = vrot.slane %v46, 4
  %vm59 = vcmask 1043456
  %v62 = vsel %vm59, %v15, %v47
  %v66 = vsel %vm59, %v25, %v48
  %v70 = vsel %vm59, %v16, %v49
  %v74 = vsel %vm59, %v17, %v50
  %v78 = vsel %vm59, %v28, %v51
  %v82 = vsel %vm59, %v18, %v52
  %v86 = vsel %vm59, %v19, %v53
  %v90 = vsel %vm59, %v31, %v54
  %v94 = vsel %vm59, %v20, %v55
  %v98 = vsel %vm59, %v21, %v56
  %v102 = vsel %vm59, %v43, %v57
  %v106 = vsel %vm59, %v22, %v58
  %v108 = vld [vmem:[%s1] sm:$0xff]
  %v109 = vld [vmem:[%s1 + $0x8] sm:$0xff]
  %v110 = vld [vmem:[%s1 + $0x10] sm:$0xff]
  %v111 = vld [vmem:[%s1 + $0x18] sm:$0xff]
  %v112 = vld [vmem:[%s1 + $0x20] sm:$0xff]
  %v113 = vld [vmem:[%s1 + $0x28] sm:$0xff]
  %v114 = vld [vmem:[%s1 + $0x30] sm:$0xff]
  %v115 = vld [vmem:[%s1 + $0x38] sm:$0xff]
  %v116 = vld [vmem:[%s1 + $0x40] sm:$0xff]
  %v117 = vld [vmem:[%s1 + $0x48] sm:$0xff]
  %v118 = vld [vmem:[%s1 + $0x50] sm:$0xff]
  %v119 = vld [vmem:[%s1 + $0x58] sm:$0xff]
  %v120 = vld [vmem:[%s1 + $0x60] sm:$0xff]
  %v121 = vld [vmem:[%s1 + $0x68] sm:$0xff]
  %v122 = vld [vmem:[%s1 + $0x70] sm:$0xff]
  %v123 = vld [vmem:[%s1 + $0x78] sm:$0xff]
  %v124 = vld [vmem:[%s1 + $0x80] sm:$0xff]
  %v125 = vld [vmem:[%s1 + $0x88] sm:$0xff]
  %v126 = vld [vmem:[%s1 + $0x90] sm:$0xff]
  %v127 = vld [vmem:[%s1 + $0x98] sm:$0xff]
  %v128 = vld [vmem:[%s1 + $0xa0] sm:$0xff]
  %v129 = vld [vmem:[%s1 + $0xa8] sm:$0xff]
  %v130 = vld [vmem:[%s1 + $0xb0] sm:$0xff]
  %v131 = vld [vmem:[%s1 + $0xb8] sm:$0xff]
  %v132 = vld [vmem:[%s1 + $0xc0] sm:$0xff]
  %v133 = vld [vmem:[%s1 + $0xc8] sm:$0xff]
  %v134 = vld [vmem:[%s1 + $0xd0] sm:$0xff]
  %v135 = vld [vmem:[%s1 + $0xd8] sm:$0xff]
  %v136 = vld [vmem:[%s1 + $0xe0] sm:$0xff]
  %v137 = vld [vmem:[%s1 + $0xe8] sm:$0xff]
  %v138 = vld [vmem:[%s1 + $0xf0] sm:$0xff]
  %v139 = vld [vmem:[%s1 + $0xf8] sm:$0xff]
  %v140 = vld [vmem:[%s1 + $0x100] sm:$0xff]
  %v141 = vld [vmem:[%s1 + $0x108] sm:$0xff]
  %v142 = vld [vmem:[%s1 + $0x110] sm:$0xff]
  %v143 = vld [vmem:[%s1 + $0x118] sm:$0xff]
  %v144 = vld [vmem:[%s1 + $0x120] sm:$0xff]
  %v145 = vld [vmem:[%s1 + $0x128] sm:$0xff]
  %v146 = vld [vmem:[%s1 + $0x130] sm:$0xff]
  %v147 = vld [vmem:[%s1 + $0x138] sm:$0xff]
  %v148 = vld [vmem:[%s1 + $0x140] sm:$0xff]
  %v149 = vld [vmem:[%s1 + $0x148] sm:$0xff]
  %v150 = vld [vmem:[%s1 + $0x150] sm:$0xff]
  %v151 = vld [vmem:[%s1 + $0x158] sm:$0xff]
  %v152 = vld [vmem:[%s1 + $0x160] sm:$0xff]
  %v153 = vld [vmem:[%s1 + $0x168] sm:$0xff]
  %v154 = vld [vmem:[%s1 + $0x170] sm:$0xff]
  %v155 = vld [vmem:[%s1 + $0x178] sm:$0xff]
  %v156 = vld [vmem:[%s1 + $0x180] sm:$0xff]
  %v157 = vld [vmem:[%s1 + $0x188] sm:$0xff]
  %v158 = vld [vmem:[%s1 + $0x190] sm:$0xff]
  %v159 = vld [vmem:[%s1 + $0x198] sm:$0xff]
  %v160 = vld [vmem:[%s1 + $0x1a0] sm:$0xff]
  %v161 = vld [vmem:[%s1 + $0x1a8] sm:$0xff]
  %v162 = vld [vmem:[%s1 + $0x1b0] sm:$0xff]
  %v163 = vld [vmem:[%s1 + $0x1b8] sm:$0xff]
  %v164 = vld [vmem:[%s1 + $0x1c0] sm:$0xff]
  %v165 = vld [vmem:[%s1 + $0x1c8] sm:$0xff]
  %v166 = vld [vmem:[%s1 + $0x1d0] sm:$0xff]
  %v167 = vld [vmem:[%s1 + $0x1d8] sm:$0xff]
  %v168 = vld [vmem:[%s1 + $0x1e0] sm:$0xff]
  %v169 = vld [vmem:[%s1 + $0x1e8] sm:$0xff]
  %v170 = vld [vmem:[%s1 + $0x1f0] sm:$0xff]
  %v171 = vld [vmem:[%s1 + $0x1f8] sm:$0xff]
  %v172 = vld [vmem:[%s1 + $0x200] sm:$0xff]
  %v173 = vld [vmem:[%s1 + $0x208] sm:$0xff]
  %v174 = vld [vmem:[%s1 + $0x210] sm:$0xff]
  %v175 = vld [vmem:[%s1 + $0x218] sm:$0xff]
  %v176 = vld [vmem:[%s1 + $0x220] sm:$0xff]
  %v177 = vld [vmem:[%s1 + $0x228] sm:$0xff]
  %v178 = vld [vmem:[%s1 + $0x230] sm:$0xff]
  %v179 = vld [vmem:[%s1 + $0x238] sm:$0xff]
  %v180 = vld [vmem:[%s1 + $0x240] sm:$0xff]
  %v181 = vld [vmem:[%s1 + $0x248] sm:$0xff]
  %v182 = vld [vmem:[%s1 + $0x250] sm:$0xff]
  %v183 = vld [vmem:[%s1 + $0x258] sm:$0xff]
  %v184 = vld [vmem:[%s1 + $0x260] sm:$0xff]
  %v185 = vld [vmem:[%s1 + $0x268] sm:$0xff]
  %v186 = vld [vmem:[%s1 + $0x270] sm:$0xff]
  %v187 = vld [vmem:[%s1 + $0x278] sm:$0xff]
  %v188 = vld [vmem:[%s1 + $0x280] sm:$0xff]
  %v189 = vld [vmem:[%s1 + $0x288] sm:$0xff]
  %v190 = vld [vmem:[%s1 + $0x290] sm:$0xff]
  %v191 = vld [vmem:[%s1 + $0x298] sm:$0xff]
  %v192 = vld [vmem:[%s1 + $0x2a0] sm:$0xff]
  %v193 = vld [vmem:[%s1 + $0x2a8] sm:$0xff]
  %v194 = vld [vmem:[%s1 + $0x2b0] sm:$0xff]
  %v195 = vld [vmem:[%s1 + $0x2b8] sm:$0xff]
  %v196 = vld [vmem:[%s1 + $0x2c0] sm:$0xff]
  %v197 = vld [vmem:[%s1 + $0x2c8] sm:$0xff]
  %v198 = vld [vmem:[%s1 + $0x2d0] sm:$0xff]
  %v199 = vld [vmem:[%s1 + $0x2d8] sm:$0xff]
  %v200 = vld [vmem:[%s1 + $0x2e0] sm:$0xff]
  %v201 = vld [vmem:[%s1 + $0x2e8] sm:$0xff]
  %v202 = vld [vmem:[%s1 + $0x2f0] sm:$0xff]
  %v203 = vld [vmem:[%s1 + $0x2f8] sm:$0xff]
  %v204 = vld [vmem:[%s1 + $0x300] sm:$0xff]
  %v205 = vld [vmem:[%s1 + $0x308] sm:$0xff]
  %v206 = vld [vmem:[%s1 + $0x310] sm:$0xff]
  %v207 = vld [vmem:[%s1 + $0x318] sm:$0xff]
  %v208 = vld [vmem:[%s1 + $0x320] sm:$0xff]
  %v209 = vld [vmem:[%s1 + $0x328] sm:$0xff]
  %v210 = vld [vmem:[%s1 + $0x330] sm:$0xff]
  %v211 = vld [vmem:[%s1 + $0x338] sm:$0xff]
  %v212 = vld [vmem:[%s1 + $0x340] sm:$0xff]
  %v213 = vld [vmem:[%s1 + $0x348] sm:$0xff]
  %v214 = vld [vmem:[%s1 + $0x350] sm:$0xff]
  %v215 = vld [vmem:[%s1 + $0x358] sm:$0xff]
  %v216 = vld [vmem:[%s1 + $0x360] sm:$0xff]
  %v217 = vld [vmem:[%s1 + $0x368] sm:$0xff]
  %v218 = vld [vmem:[%s1 + $0x370] sm:$0xff]
  %v219 = vld [vmem:[%s1 + $0x378] sm:$0xff]
  %v220 = vld [vmem:[%s1 + $0x380] sm:$0xff]
  %v221 = vld [vmem:[%s1 + $0x388] sm:$0xff]
  %v222 = vld [vmem:[%s1 + $0x390] sm:$0xff]
  %v223 = vld [vmem:[%s1 + $0x398] sm:$0xff]
  %v224 = vld [vmem:[%s1 + $0x3a0] sm:$0xff]
  %v225 = vld [vmem:[%s1 + $0x3a8] sm:$0xff]
  %v226 = vld [vmem:[%s1 + $0x3b0] sm:$0xff]
  %v227 = vld [vmem:[%s1 + $0x3b8] sm:$0xff]
  %v228 = vld [vmem:[%s1 + $0x3c0] sm:$0xff]
  %v229 = vld [vmem:[%s1 + $0x3c8] sm:$0xff]
  %v230 = vld [vmem:[%s1 + $0x3d0] sm:$0xff]
  %v231 = vld [vmem:[%s1 + $0x3d8] sm:$0xff]
  %v232 = vld [vmem:[%s1 + $0x3e0] sm:$0xff]
  %v233 = vld [vmem:[%s1 + $0x3e8] sm:$0xff]
  %v234 = vld [vmem:[%s1 + $0x3f0] sm:$0xff]
  %v235 = vld [vmem:[%s1 + $0x3f8] sm:$0xff]
  %v236 = vld [vmem:[%s1 + $0x400] sm:$0xff]
  %v237 = vld [vmem:[%s1 + $0x408] sm:$0xff]
  %v238 = vld [vmem:[%s1 + $0x410] sm:$0xff]
  %v239 = vld [vmem:[%s1 + $0x418] sm:$0xff]
  %v240 = vld [vmem:[%s1 + $0x420] sm:$0xff]
  %v241 = vld [vmem:[%s1 + $0x428] sm:$0xff]
  %v242 = vld [vmem:[%s1 + $0x430] sm:$0xff]
  %v243 = vld [vmem:[%s1 + $0x438] sm:$0xff]
  %v244 = vld [vmem:[%s1 + $0x440] sm:$0xff]
  %v245 = vld [vmem:[%s1 + $0x448] sm:$0xff]
  %v246 = vld [vmem:[%s1 + $0x450] sm:$0xff]
  %v247 = vld [vmem:[%s1 + $0x458] sm:$0xff]
  %v248 = vld [vmem:[%s1 + $0x460] sm:$0xff]
  %v249 = vld [vmem:[%s1 + $0x468] sm:$0xff]
  %v250 = vld [vmem:[%s1 + $0x470] sm:$0xff]
  %v251 = vld [vmem:[%s1 + $0x478] sm:$0xff]
  %v396 = vunpack.c.l.b16 %v108
  %v397 = vunpack.c.h.b16 %v108
  %v398 = vunpack.c.l.b16 %v109
  %v399 = vunpack.c.h.b16 %v109
  %v400 = vunpack.c.l.b16 %v110
  %v401 = vunpack.c.h.b16 %v110
  %v402 = vunpack.c.l.b16 %v111
  %v403 = vunpack.c.h.b16 %v111
  %v404 = vunpack.c.l.b16 %v112
  %v405 = vunpack.c.h.b16 %v112
  %v406 = vunpack.c.l.b16 %v113
  %v407 = vunpack.c.h.b16 %v113
  %v408 = vunpack.c.l.b16 %v114
  %v409 = vunpack.c.h.b16 %v114
  %v410 = vunpack.c.l.b16 %v115
  %v411 = vunpack.c.h.b16 %v115
  %v412 = vunpack.c.l.b16 %v116
  %v413 = vunpack.c.h.b16 %v116
  %v414 = vunpack.c.l.b16 %v117
  %v415 = vunpack.c.h.b16 %v117
  %v416 = vunpack.c.l.b16 %v118
  %v417 = vunpack.c.h.b16 %v118
  %v418 = vunpack.c.l.b16 %v119
  %v419 = vunpack.c.h.b16 %v119
  %v420 = vunpack.c.l.b16 %v120
  %v421 = vunpack.c.h.b16 %v120
  %v422 = vunpack.c.l.b16 %v121
  %v423 = vunpack.c.h.b16 %v121
  %v424 = vunpack.c.l.b16 %v122
  %v425 = vunpack.c.h.b16 %v122
  %v426 = vunpack.c.l.b16 %v123
  %v427 = vunpack.c.h.b16 %v123
  %v428 = vunpack.c.l.b16 %v124
  %v429 = vunpack.c.h.b16 %v124
  %v430 = vunpack.c.l.b16 %v125
  %v431 = vunpack.c.h.b16 %v125
  %v432 = vunpack.c.l.b16 %v126
  %v433 = vunpack.c.h.b16 %v126
  %v434 = vunpack.c.l.b16 %v127
  %v435 = vunpack.c.h.b16 %v127
  %v436 = vunpack.c.l.b16 %v128
  %v437 = vunpack.c.h.b16 %v128
  %v438 = vunpack.c.l.b16 %v129
  %v439 = vunpack.c.h.b16 %v129
  %v440 = vunpack.c.l.b16 %v130
  %v441 = vunpack.c.h.b16 %v130
  %v442 = vunpack.c.l.b16 %v131
  %v443 = vunpack.c.h.b16 %v131
  %v444 = vunpack.c.l.b16 %v132
  %v445 = vunpack.c.h.b16 %v132
  %v446 = vunpack.c.l.b16 %v133
  %v447 = vunpack.c.h.b16 %v133
  %v448 = vunpack.c.l.b16 %v134
  %v449 = vunpack.c.h.b16 %v134
  %v450 = vunpack.c.l.b16 %v135
  %v451 = vunpack.c.h.b16 %v135
  %v452 = vunpack.c.l.b16 %v136
  %v453 = vunpack.c.h.b16 %v136
  %v454 = vunpack.c.l.b16 %v137
  %v455 = vunpack.c.h.b16 %v137
  %v456 = vunpack.c.l.b16 %v138
  %v457 = vunpack.c.h.b16 %v138
  %v458 = vunpack.c.l.b16 %v139
  %v459 = vunpack.c.h.b16 %v139
  %v460 = vunpack.c.l.b16 %v140
  %v461 = vunpack.c.h.b16 %v140
  %v462 = vunpack.c.l.b16 %v141
  %v463 = vunpack.c.h.b16 %v141
  %v464 = vunpack.c.l.b16 %v142
  %v465 = vunpack.c.h.b16 %v142
  %v466 = vunpack.c.l.b16 %v143
  %v467 = vunpack.c.h.b16 %v143
  %v468 = vunpack.c.l.b16 %v144
  %v469 = vunpack.c.h.b16 %v144
  %v470 = vunpack.c.l.b16 %v145
  %v471 = vunpack.c.h.b16 %v145
  %v472 = vunpack.c.l.b16 %v146
  %v473 = vunpack.c.h.b16 %v146
  %v474 = vunpack.c.l.b16 %v147
  %v475 = vunpack.c.h.b16 %v147
  %v476 = vunpack.c.l.b16 %v148
  %v477 = vunpack.c.h.b16 %v148
  %v478 = vunpack.c.l.b16 %v149
  %v479 = vunpack.c.h.b16 %v149
  %v480 = vunpack.c.l.b16 %v150
  %v481 = vunpack.c.h.b16 %v150
  %v482 = vunpack.c.l.b16 %v151
  %v483 = vunpack.c.h.b16 %v151
  %v484 = vunpack.c.l.b16 %v152
  %v485 = vunpack.c.h.b16 %v152
  %v486 = vunpack.c.l.b16 %v153
  %v487 = vunpack.c.h.b16 %v153
  %v488 = vunpack.c.l.b16 %v154
  %v489 = vunpack.c.h.b16 %v154
  %v490 = vunpack.c.l.b16 %v155
  %v491 = vunpack.c.h.b16 %v155
  %v492 = vunpack.c.l.b16 %v156
  %v493 = vunpack.c.h.b16 %v156
  %v494 = vunpack.c.l.b16 %v157
  %v495 = vunpack.c.h.b16 %v157
  %v496 = vunpack.c.l.b16 %v158
  %v497 = vunpack.c.h.b16 %v158
  %v498 = vunpack.c.l.b16 %v159
  %v499 = vunpack.c.h.b16 %v159
  %v500 = vunpack.c.l.b16 %v160
  %v501 = vunpack.c.h.b16 %v160
  %v502 = vunpack.c.l.b16 %v161
  %v503 = vunpack.c.h.b16 %v161
  %v504 = vunpack.c.l.b16 %v162
  %v505 = vunpack.c.h.b16 %v162
  %v506 = vunpack.c.l.b16 %v163
  %v507 = vunpack.c.h.b16 %v163
  %v508 = vunpack.c.l.b16 %v164
  %v509 = vunpack.c.h.b16 %v164
  %v510 = vunpack.c.l.b16 %v165
  %v511 = vunpack.c.h.b16 %v165
  %v512 = vunpack.c.l.b16 %v166
  %v513 = vunpack.c.h.b16 %v166
  %v514 = vunpack.c.l.b16 %v167
  %v515 = vunpack.c.h.b16 %v167
  %v516 = vunpack.c.l.b16 %v168
  %v517 = vunpack.c.h.b16 %v168
  %v518 = vunpack.c.l.b16 %v169
  %v519 = vunpack.c.h.b16 %v169
  %v520 = vunpack.c.l.b16 %v170
  %v521 = vunpack.c.h.b16 %v170
  %v522 = vunpack.c.l.b16 %v171
  %v523 = vunpack.c.h.b16 %v171
  %v524 = vunpack.c.l.b16 %v172
  %v525 = vunpack.c.h.b16 %v172
  %v526 = vunpack.c.l.b16 %v173
  %v527 = vunpack.c.h.b16 %v173
  %v528 = vunpack.c.l.b16 %v174
  %v529 = vunpack.c.h.b16 %v174
  %v530 = vunpack.c.l.b16 %v175
  %v531 = vunpack.c.h.b16 %v175
  %v532 = vunpack.c.l.b16 %v176
  %v533 = vunpack.c.h.b16 %v176
  %v534 = vunpack.c.l.b16 %v177
  %v535 = vunpack.c.h.b16 %v177
  %v536 = vunpack.c.l.b16 %v178
  %v537 = vunpack.c.h.b16 %v178
  %v538 = vunpack.c.l.b16 %v179
  %v539 = vunpack.c.h.b16 %v179
  %v540 = vunpack.c.l.b16 %v180
  %v541 = vunpack.c.h.b16 %v180
  %v542 = vunpack.c.l.b16 %v181
  %v543 = vunpack.c.h.b16 %v181
  %v544 = vunpack.c.l.b16 %v182
  %v545 = vunpack.c.h.b16 %v182
  %v546 = vunpack.c.l.b16 %v183
  %v547 = vunpack.c.h.b16 %v183
  %v548 = vunpack.c.l.b16 %v184
  %v549 = vunpack.c.h.b16 %v184
  %v550 = vunpack.c.l.b16 %v185
  %v551 = vunpack.c.h.b16 %v185
  %v552 = vunpack.c.l.b16 %v186
  %v553 = vunpack.c.h.b16 %v186
  %v554 = vunpack.c.l.b16 %v187
  %v555 = vunpack.c.h.b16 %v187
  %v556 = vunpack.c.l.b16 %v188
  %v557 = vunpack.c.h.b16 %v188
  %v558 = vunpack.c.l.b16 %v189
  %v559 = vunpack.c.h.b16 %v189
  %v560 = vunpack.c.l.b16 %v190
  %v561 = vunpack.c.h.b16 %v190
  %v562 = vunpack.c.l.b16 %v191
  %v563 = vunpack.c.h.b16 %v191
  %v564 = vunpack.c.l.b16 %v192
  %v565 = vunpack.c.h.b16 %v192
  %v566 = vunpack.c.l.b16 %v193
  %v567 = vunpack.c.h.b16 %v193
  %v568 = vunpack.c.l.b16 %v194
  %v569 = vunpack.c.h.b16 %v194
  %v570 = vunpack.c.l.b16 %v195
  %v571 = vunpack.c.h.b16 %v195
  %v572 = vunpack.c.l.b16 %v196
  %v573 = vunpack.c.h.b16 %v196
  %v574 = vunpack.c.l.b16 %v197
  %v575 = vunpack.c.h.b16 %v197
  %v576 = vunpack.c.l.b16 %v198
  %v577 = vunpack.c.h.b16 %v198
  %v578 = vunpack.c.l.b16 %v199
  %v579 = vunpack.c.h.b16 %v199
  %v580 = vunpack.c.l.b16 %v200
  %v581 = vunpack.c.h.b16 %v200
  %v582 = vunpack.c.l.b16 %v201
  %v583 = vunpack.c.h.b16 %v201
  %v584 = vunpack.c.l.b16 %v202
  %v585 = vunpack.c.h.b16 %v202
  %v586 = vunpack.c.l.b16 %v203
  %v587 = vunpack.c.h.b16 %v203
  %v588 = vunpack.c.l.b16 %v204
  %v589 = vunpack.c.h.b16 %v204
  %v590 = vunpack.c.l.b16 %v205
  %v591 = vunpack.c.h.b16 %v205
  %v592 = vunpack.c.l.b16 %v206
  %v593 = vunpack.c.h.b16 %v206
  %v594 = vunpack.c.l.b16 %v207
  %v595 = vunpack.c.h.b16 %v207
  %v596 = vunpack.c.l.b16 %v208
  %v597 = vunpack.c.h.b16 %v208
  %v598 = vunpack.c.l.b16 %v209
  %v599 = vunpack.c.h.b16 %v209
  %v600 = vunpack.c.l.b16 %v210
  %v601 = vunpack.c.h.b16 %v210
  %v602 = vunpack.c.l.b16 %v211
  %v603 = vunpack.c.h.b16 %v211
  %v604 = vunpack.c.l.b16 %v212
  %v605 = vunpack.c.h.b16 %v212
  %v606 = vunpack.c.l.b16 %v213
  %v607 = vunpack.c.h.b16 %v213
  %v608 = vunpack.c.l.b16 %v214
  %v609 = vunpack.c.h.b16 %v214
  %v610 = vunpack.c.l.b16 %v215
  %v611 = vunpack.c.h.b16 %v215
  %v612 = vunpack.c.l.b16 %v216
  %v613 = vunpack.c.h.b16 %v216
  %v614 = vunpack.c.l.b16 %v217
  %v615 = vunpack.c.h.b16 %v217
  %v616 = vunpack.c.l.b16 %v218
  %v617 = vunpack.c.h.b16 %v218
  %v618 = vunpack.c.l.b16 %v219
  %v619 = vunpack.c.h.b16 %v219
  %v620 = vunpack.c.l.b16 %v220
  %v621 = vunpack.c.h.b16 %v220
  %v622 = vunpack.c.l.b16 %v221
  %v623 = vunpack.c.h.b16 %v221
  %v624 = vunpack.c.l.b16 %v222
  %v625 = vunpack.c.h.b16 %v222
  %v626 = vunpack.c.l.b16 %v223
  %v627 = vunpack.c.h.b16 %v223
  %v628 = vunpack.c.l.b16 %v224
  %v629 = vunpack.c.h.b16 %v224
  %v630 = vunpack.c.l.b16 %v225
  %v631 = vunpack.c.h.b16 %v225
  %v632 = vunpack.c.l.b16 %v226
  %v633 = vunpack.c.h.b16 %v226
  %v634 = vunpack.c.l.b16 %v227
  %v635 = vunpack.c.h.b16 %v227
  %v636 = vunpack.c.l.b16 %v228
  %v637 = vunpack.c.h.b16 %v228
  %v638 = vunpack.c.l.b16 %v229
  %v639 = vunpack.c.h.b16 %v229
  %v640 = vunpack.c.l.b16 %v230
  %v641 = vunpack.c.h.b16 %v230
  %v642 = vunpack.c.l.b16 %v231
  %v643 = vunpack.c.h.b16 %v231
  %v644 = vunpack.c.l.b16 %v232
  %v645 = vunpack.c.h.b16 %v232
  %v646 = vunpack.c.l.b16 %v233
  %v647 = vunpack.c.h.b16 %v233
  %v648 = vunpack.c.l.b16 %v234
  %v649 = vunpack.c.h.b16 %v234
  %v650 = vunpack.c.l.b16 %v235
  %v651 = vunpack.c.h.b16 %v235
  %v652 = vunpack.c.l.b16 %v236
  %v653 = vunpack.c.h.b16 %v236
  %v654 = vunpack.c.l.b16 %v237
  %v655 = vunpack.c.h.b16 %v237
  %v656 = vunpack.c.l.b16 %v238
  %v657 = vunpack.c.h.b16 %v238
  %v658 = vunpack.c.l.b16 %v239
  %v659 = vunpack.c.h.b16 %v239
  %v660 = vunpack.c.l.b16 %v240
  %v661 = vunpack.c.h.b16 %v240
  %v662 = vunpack.c.l.b16 %v241
  %v663 = vunpack.c.h.b16 %v241
  %v664 = vunpack.c.l.b16 %v242
  %v665 = vunpack.c.h.b16 %v242
  %v666 = vunpack.c.l.b16 %v243
  %v667 = vunpack.c.h.b16 %v243
  %v668 = vunpack.c.l.b16 %v244
  %v669 = vunpack.c.h.b16 %v244
  %v670 = vunpack.c.l.b16 %v245
  %v671 = vunpack.c.h.b16 %v245
  %v672 = vunpack.c.l.b16 %v246
  %v673 = vunpack.c.h.b16 %v246
  %v674 = vunpack.c.l.b16 %v247
  %v675 = vunpack.c.h.b16 %v247
  %v676 = vunpack.c.l.b16 %v248
  %v677 = vunpack.c.h.b16 %v248
  %v678 = vunpack.c.l.b16 %v249
  %v679 = vunpack.c.h.b16 %v249
  %v680 = vunpack.c.l.b16 %v250
  %v681 = vunpack.c.h.b16 %v250
  %v682 = vunpack.c.l.b16 %v251
  %v683 = vunpack.c.h.b16 %v251
  %v684 = vpack.c.b16 %v398, %v396
  %v685 = vpack.c.b16 %v399, %v397
  %v686 = vpack.c.b16 %v402, %v400
  %v687 = vpack.c.b16 %v403, %v401
  %v688 = vpack.c.b16 %v406, %v404
  %v689 = vpack.c.b16 %v407, %v405
  %v690 = vpack.c.b16 %v410, %v408
  %v691 = vpack.c.b16 %v411, %v409
  %v692 = vpack.c.b16 %v414, %v412
  %v693 = vpack.c.b16 %v415, %v413
  %v694 = vpack.c.b16 %v418, %v416
  %v695 = vpack.c.b16 %v419, %v417
  %v696 = vpack.c.b16 %v422, %v420
  %v697 = vpack.c.b16 %v423, %v421
  %v698 = vpack.c.b16 %v426, %v424
  %v699 = vpack.c.b16 %v427, %v425
  %v700 = vpack.c.b16 %v430, %v428
  %v701 = vpack.c.b16 %v431, %v429
  %v702 = vpack.c.b16 %v434, %v432
  %v703 = vpack.c.b16 %v435, %v433
  %v704 = vpack.c.b16 %v438, %v436
  %v705 = vpack.c.b16 %v439, %v437
  %v706 = vpack.c.b16 %v442, %v440
  %v707 = vpack.c.b16 %v443, %v441
  %v708 = vpack.c.b16 %v446, %v444
  %v709 = vpack.c.b16 %v447, %v445
  %v710 = vpack.c.b16 %v450, %v448
  %v711 = vpack.c.b16 %v451, %v449
  %v712 = vpack.c.b16 %v454, %v452
  %v713 = vpack.c.b16 %v455, %v453
  %v714 = vpack.c.b16 %v458, %v456
  %v715 = vpack.c.b16 %v459, %v457
  %v716 = vpack.c.b16 %v462, %v460
  %v717 = vpack.c.b16 %v463, %v461
  %v718 = vpack.c.b16 %v466, %v464
  %v719 = vpack.c.b16 %v467, %v465
  %v720 = vpack.c.b16 %v470, %v468
  %v721 = vpack.c.b16 %v471, %v469
  %v722 = vpack.c.b16 %v474, %v472
  %v723 = vpack.c.b16 %v475, %v473
  %v724 = vpack.c.b16 %v478, %v476
  %v725 = vpack.c.b16 %v479, %v477
  %v726 = vpack.c.b16 %v482, %v480
  %v727 = vpack.c.b16 %v483, %v481
  %v728 = vpack.c.b16 %v486, %v484
  %v729 = vpack.c.b16 %v487, %v485
  %v730 = vpack.c.b16 %v490, %v488
  %v731 = vpack.c.b16 %v491, %v489
  %v732 = vpack.c.b16 %v494, %v492
  %v733 = vpack.c.b16 %v495, %v493
  %v734 = vpack.c.b16 %v498, %v496
  %v735 = vpack.c.b16 %v499, %v497
  %v736 = vpack.c.b16 %v502, %v500
  %v737 = vpack.c.b16 %v503, %v501
  %v738 = vpack.c.b16 %v506, %v504
  %v739 = vpack.c.b16 %v507, %v505
  %v740 = vpack.c.b16 %v510, %v508
  %v741 = vpack.c.b16 %v511, %v509
  %v742 = vpack.c.b16 %v514, %v512
  %v743 = vpack.c.b16 %v515, %v513
  %v744 = vpack.c.b16 %v518, %v516
  %v745 = vpack.c.b16 %v519, %v517
  %v746 = vpack.c.b16 %v522, %v520
  %v747 = vpack.c.b16 %v523, %v521
  %v748 = vpack.c.b16 %v526, %v524
  %v749 = vpack.c.b16 %v527, %v525
  %v750 = vpack.c.b16 %v530, %v528
  %v751 = vpack.c.b16 %v531, %v529
  %v752 = vpack.c.b16 %v534, %v532
  %v753 = vpack.c.b16 %v535, %v533
  %v754 = vpack.c.b16 %v538, %v536
  %v755 = vpack.c.b16 %v539, %v537
  %v756 = vpack.c.b16 %v542, %v540
  %v757 = vpack.c.b16 %v543, %v541
  %v758 = vpack.c.b16 %v546, %v544
  %v759 = vpack.c.b16 %v547, %v545
  %v760 = vpack.c.b16 %v550, %v548
  %v761 = vpack.c.b16 %v551, %v549
  %v762 = vpack.c.b16 %v554, %v552
  %v763 = vpack.c.b16 %v555, %v553
  %v764 = vpack.c.b16 %v558, %v556
  %v765 = vpack.c.b16 %v559, %v557
  %v766 = vpack.c.b16 %v562, %v560
  %v767 = vpack.c.b16 %v563, %v561
  %v768 = vpack.c.b16 %v566, %v564
  %v769 = vpack.c.b16 %v567, %v565
  %v770 = vpack.c.b16 %v570, %v568
  %v771 = vpack.c.b16 %v571, %v569
  %v772 = vpack.c.b16 %v574, %v572
  %v773 = vpack.c.b16 %v575, %v573
  %v774 = vpack.c.b16 %v578, %v576
  %v775 = vpack.c.b16 %v579, %v577
  %v776 = vpack.c.b16 %v582, %v580
  %v777 = vpack.c.b16 %v583, %v581
  %v778 = vpack.c.b16 %v586, %v584
  %v779 = vpack.c.b16 %v587, %v585
  %v780 = vpack.c.b16 %v590, %v588
  %v781 = vpack.c.b16 %v591, %v589
  %v782 = vpack.c.b16 %v594, %v592
  %v783 = vpack.c.b16 %v595, %v593
  %v784 = vpack.c.b16 %v598, %v596
  %v785 = vpack.c.b16 %v599, %v597
  %v786 = vpack.c.b16 %v602, %v600
  %v787 = vpack.c.b16 %v603, %v601
  %v788 = vpack.c.b16 %v606, %v604
  %v789 = vpack.c.b16 %v607, %v605
  %v790 = vpack.c.b16 %v610, %v608
  %v791 = vpack.c.b16 %v611, %v609
  %v792 = vpack.c.b16 %v614, %v612
  %v793 = vpack.c.b16 %v615, %v613
  %v794 = vpack.c.b16 %v618, %v616
  %v795 = vpack.c.b16 %v619, %v617
  %v796 = vpack.c.b16 %v622, %v620
  %v797 = vpack.c.b16 %v623, %v621
  %v798 = vpack.c.b16 %v626, %v624
  %v799 = vpack.c.b16 %v627, %v625
  %v800 = vpack.c.b16 %v630, %v628
  %v801 = vpack.c.b16 %v631, %v629
  %v802 = vpack.c.b16 %v634, %v632
  %v803 = vpack.c.b16 %v635, %v633
  %v804 = vpack.c.b16 %v638, %v636
  %v805 = vpack.c.b16 %v639, %v637
  %v806 = vpack.c.b16 %v642, %v640
  %v807 = vpack.c.b16 %v643, %v641
  %v808 = vpack.c.b16 %v646, %v644
  %v809 = vpack.c.b16 %v647, %v645
  %v810 = vpack.c.b16 %v650, %v648
  %v811 = vpack.c.b16 %v651, %v649
  %v812 = vpack.c.b16 %v654, %v652
  %v813 = vpack.c.b16 %v655, %v653
  %v814 = vpack.c.b16 %v658, %v656
  %v815 = vpack.c.b16 %v659, %v657
  %v816 = vpack.c.b16 %v662, %v660
  %v817 = vpack.c.b16 %v663, %v661
  %v818 = vpack.c.b16 %v666, %v664
  %v819 = vpack.c.b16 %v667, %v665
  %v820 = vpack.c.b16 %v670, %v668
  %v821 = vpack.c.b16 %v671, %v669
  %v822 = vpack.c.b16 %v674, %v672
  %v823 = vpack.c.b16 %v675, %v673
  %v824 = vpack.c.b16 %v678, %v676
  %v825 = vpack.c.b16 %v679, %v677
  %v826 = vpack.c.b16 %v682, %v680
  %v827 = vpack.c.b16 %v683, %v681
  %972 = vmatprep.subr.bf16.mxu0 %v685
  %973 = vmatpush1.bf16.msra.mxu0 %v684
  %974 = vmatprep.subr.bf16.mxu0 %v687
  %975 = vmatpush1.bf16.msra.mxu0 %v686
  %976 = vmatprep.subr.bf16.mxu0 %v689
  %977 = vmatpush1.bf16.msra.mxu0 %v688
  %978 = vmatprep.subr.bf16.mxu0 %v691
  %979 = vmatpush1.bf16.msra.mxu0 %v690
  %980 = vmatprep.subr.bf16.mxu0 %v693
  %981 = vmatpush1.bf16.msra.mxu0 %v692
  %982 = vmatprep.subr.bf16.mxu0 %v695
  %983 = vmatpush1.bf16.msra.mxu0 %v694
  %984 = vmatprep.subr.bf16.mxu0 %v697
  %985 = vmatpush1.bf16.msra.mxu0 %v696
  %986 = vmatprep.subr.bf16.mxu0 %v699
  %987 = vmatpush1.bf16.msra.mxu0 %v698
  %988 = vmatprep.subr.bf16.mxu0 %v701
  %989 = vmatpush1.bf16.msra.mxu0 %v700
  %990 = vmatprep.subr.bf16.mxu0 %v703
  %991 = vmatpush1.bf16.msra.mxu0 %v702
  %992 = vmatprep.subr.bf16.mxu0 %v705
  %993 = vmatpush1.bf16.msra.mxu0 %v704
  %994 = vmatprep.subr.bf16.mxu0 %v707
  %995 = vmatpush1.bf16.msra.mxu0 %v706
  %996 = vmatprep.subr.bf16.mxu0 %v709
  %997 = vmatpush1.bf16.msra.mxu0 %v708
  %998 = vmatprep.subr.bf16.mxu0 %v711
  %999 = vmatpush1.bf16.msra.mxu0 %v710
  %1000 = vmatprep.subr.bf16.mxu0 %v713
  %1001 = vmatpush1.bf16.msra.mxu0 %v712
  %1002 = vmatprep.subr.bf16.mxu0 %v715
  %1003 = vmatpush1.bf16.msra.mxu0 %v714
  %1004 = vmatprep.mubr.bf16.mxu0 %v66
  %1005 = vmatmul.mubr.bf16.gmra.mrb[0].mxu0 %v62
  %v1006 = vpop.f32.mrb[0].mxu0
  %v1007 = vadd.f32 0.0, %v1006
  %v1008 = vpop.f32.mrb[0].mxu0
  %v1009 = vadd.f32 0.0, %v1008
  %v1010 = vpop.f32.mrb[0].mxu0
  %v1011 = vadd.f32 0.0, %v1010
  %v1012 = vpop.f32.mrb[0].mxu0
  %v1013 = vadd.f32 0.0, %v1012
  %1014 = vmatprep.mubr.bf16.mxu0 %v78
  %1015 = vmatmul.mubr.bf16.gmra.mrb[0].mxu0 %v74
  %v1016 = vpop.f32.mrb[0].mxu0
  %v1017 = vadd.f32 0.0, %v1016
  %v1018 = vpop.f32.mrb[0].mxu0
  %v1019 = vadd.f32 0.0, %v1018
  %v1020 = vpop.f32.mrb[0].mxu0
  %v1021 = vadd.f32 0.0, %v1020
  %v1022 = vpop.f32.mrb[0].mxu0
  %v1023 = vadd.f32 0.0, %v1022
  %1024 = vdwg.mxu0
  %1025 = vmatprep.subr.bf16.mxu0 %v717
  %1026 = vmatpush1.bf16.msra.mxu0 %v716
  %1027 = vmatprep.subr.bf16.mxu0 %v719
  %1028 = vmatpush1.bf16.msra.mxu0 %v718
  %1029 = vmatprep.subr.bf16.mxu0 %v721
  %1030 = vmatpush1.bf16.msra.mxu0 %v720
  %1031 = vmatprep.subr.bf16.mxu0 %v723
  %1032 = vmatpush1.bf16.msra.mxu0 %v722
  %1033 = vmatprep.subr.bf16.mxu0 %v725
  %1034 = vmatpush1.bf16.msra.mxu0 %v724
  %1035 = vmatprep.subr.bf16.mxu0 %v727
  %1036 = vmatpush1.bf16.msra.mxu0 %v726
  %1037 = vmatprep.subr.bf16.mxu0 %v729
  %1038 = vmatpush1.bf16.msra.mxu0 %v728
  %1039 = vmatprep.subr.bf16.mxu0 %v731
  %1040 = vmatpush1.bf16.msra.mxu0 %v730
  %1041 = vmatprep.subr.bf16.mxu0 %v733
  %1042 = vmatpush1.bf16.msra.mxu0 %v732
  %1043 = vmatprep.subr.bf16.mxu0 %v735
  %1044 = vmatpush1.bf16.msra.mxu0 %v734
  %1045 = vmatprep.subr.bf16.mxu0 %v737
  %1046 = vmatpush1.bf16.msra.mxu0 %v736
  %1047 = vmatprep.subr.bf16.mxu0 %v739
  %1048 = vmatpush1.bf16.msra.mxu0 %v738
  %1049 = vmatprep.subr.bf16.mxu0 %v741
  %1050 = vmatpush1.bf16.msra.mxu0 %v740
  %1051 = vmatprep.subr.bf16.mxu0 %v743
  %1052 = vmatpush1.bf16.msra.mxu0 %v742
  %1053 = vmatprep.subr.bf16.mxu0 %v745
  %1054 = vmatpush1.bf16.msra.mxu0 %v744
  %1055 = vmatprep.subr.bf16.mxu0 %v747
  %1056 = vmatpush1.bf16.msra.mxu0 %v746
  %1057 = vmatprep.mubr.bf16.mxu0 %v74
  %1058 = vmatmul.mubr.bf16.gmra.mrb[0].mxu0 %v70
  %v1059 = vpop.f32.mrb[0].mxu0
  %v1060 = vadd.f32 %v1007, %v1059
  %v1061 = vpop.f32.mrb[0].mxu0
  %v1062 = vadd.f32 %v1009, %v1061
  %v1063 = vpop.f32.mrb[0].mxu0
  %v1064 = vadd.f32 %v1011, %v1063
  %v1065 = vpop.f32.mrb[0].mxu0
  %v1066 = vadd.f32 %v1013, %v1065
  %1067 = vmatprep.mubr.bf16.mxu0 %v86
  %1068 = vmatmul.mubr.bf16.gmra.mrb[0].mxu0 %v82
  %v1069 = vpop.f32.mrb[0].mxu0
  %v1070 = vadd.f32 %v1017, %v1069
  %v1071 = vpop.f32.mrb[0].mxu0
  %v1072 = vadd.f32 %v1019, %v1071
  %v1073 = vpop.f32.mrb[0].mxu0
  %v1074 = vadd.f32 %v1021, %v1073
  %v1075 = vpop.f32.mrb[0].mxu0
  %v1076 = vadd.f32 %v1023, %v1075
  %1077 = vdwg.mxu0
  %1078 = vmatprep.subr.bf16.mxu0 %v749
  %1079 = vmatpush1.bf16.msra.mxu0 %v748
  %1080 = vmatprep.subr.bf16.mxu0 %v751
  %1081 = vmatpush1.bf16.msra.mxu0 %v750
  %1082 = vmatprep.subr.bf16.mxu0 %v753
  %1083 = vmatpush1.bf16.msra.mxu0 %v752
  %1084 = vmatprep.subr.bf16.mxu0 %v755
  %1085 = vmatpush1.bf16.msra.mxu0 %v754
  %1086 = vmatprep.subr.bf16.mxu0 %v757
  %1087 = vmatpush1.bf16.msra.mxu0 %v756
  %1088 = vmatprep.subr.bf16.mxu0 %v759
  %1089 = vmatpush1.bf16.msra.mxu0 %v758
  %1090 = vmatprep.subr.bf16.mxu0 %v761
  %1091 = vmatpush1.bf16.msra.mxu0 %v760
  %1092 = vmatprep.subr.bf16.mxu0 %v763
  %1093 = vmatpush1.bf16.msra.mxu0 %v762
  %1094 = vmatprep.subr.bf16.mxu0 %v765
  %1095 = vmatpush1.bf16.msra.mxu0 %v764
  %1096 = vmatprep.subr.bf16.mxu0 %v767
  %1097 = vmatpush1.bf16.msra.mxu0 %v766
  %1098 = vmatprep.subr.bf16.mxu0 %v769
  %1099 = vmatpush1.bf16.msra.mxu0 %v768
  %1100 = vmatprep.subr.bf16.mxu0 %v771
  %1101 = vmatpush1.bf16.msra.mxu0 %v770
  %1102 = vmatprep.subr.bf16.mxu0 %v773
  %1103 = vmatpush1.bf16.msra.mxu0 %v772
  %1104 = vmatprep.subr.bf16.mxu0 %v775
  %1105 = vmatpush1.bf16.msra.mxu0 %v774
  %1106 = vmatprep.subr.bf16.mxu0 %v777
  %1107 = vmatpush1.bf16.msra.mxu0 %v776
  %1108 = vmatprep.subr.bf16.mxu0 %v779
  %1109 = vmatpush1.bf16.msra.mxu0 %v778
  %1110 = vmatprep.mubr.bf16.mxu0 %v82
  %1111 = vmatmul.mubr.bf16.gmra.mrb[0].mxu0 %v78
  %v1112 = vpop.f32.mrb[0].mxu0
  %v1113 = vadd.f32 %v1060, %v1112
  %v1114 = vpop.f32.mrb[0].mxu0
  %v1115 = vadd.f32 %v1062, %v1114
  %v1116 = vpop.f32.mrb[0].mxu0
  %v1117 = vadd.f32 %v1064, %v1116
  %v1118 = vpop.f32.mrb[0].mxu0
  %v1119 = vadd.f32 %v1066, %v1118
  %1120 = vmatprep.mubr.bf16.mxu0 %v94
  %1121 = vmatmul.mubr.bf16.gmra.mrb[0].mxu0 %v90
  %v1122 = vpop.f32.mrb[0].mxu0
  %v1123 = vadd.f32 %v1070, %v1122
  %v1124 = vpop.f32.mrb[0].mxu0
  %v1125 = vadd.f32 %v1072, %v1124
  %v1126 = vpop.f32.mrb[0].mxu0
  %v1127 = vadd.f32 %v1074, %v1126
  %v1128 = vpop.f32.mrb[0].mxu0
  %v1129 = vadd.f32 %v1076, %v1128
  %1130 = vdwg.mxu0
  %1131 = vmatprep.subr.bf16.mxu0 %v781
  %1132 = vmatpush1.bf16.msra.mxu0 %v780
  %1133 = vmatprep.subr.bf16.mxu0 %v783
  %1134 = vmatpush1.bf16.msra.mxu0 %v782
  %1135 = vmatprep.subr.bf16.mxu0 %v785
  %1136 = vmatpush1.bf16.msra.mxu0 %v784
  %1137 = vmatprep.subr.bf16.mxu0 %v787
  %1138 = vmatpush1.bf16.msra.mxu0 %v786
  %1139 = vmatprep.subr.bf16.mxu0 %v789
  %1140 = vmatpush1.bf16.msra.mxu0 %v788
  %1141 = vmatprep.subr.bf16.mxu0 %v791
  %1142 = vmatpush1.bf16.msra.mxu0 %v790
  %1143 = vmatprep.subr.bf16.mxu0 %v793
  %1144 = vmatpush1.bf16.msra.mxu0 %v792
  %1145 = vmatprep.subr.bf16.mxu0 %v795
  %1146 = vmatpush1.bf16.msra.mxu0 %v794
  %1147 = vmatprep.subr.bf16.mxu0 %v797
  %1148 = vmatpush1.bf16.msra.mxu0 %v796
  %1149 = vmatprep.subr.bf16.mxu0 %v799
  %1150 = vmatpush1.bf16.msra.mxu0 %v798
  %1151 = vmatprep.subr.bf16.mxu0 %v801
  %1152 = vmatpush1.bf16.msra.mxu0 %v800
  %1153 = vmatprep.subr.bf16.mxu0 %v803
  %1154 = vmatpush1.bf16.msra.mxu0 %v802
  %1155 = vmatprep.subr.bf16.mxu0 %v805
  %1156 = vmatpush1.bf16.msra.mxu0 %v804
  %1157 = vmatprep.subr.bf16.mxu0 %v807
  %1158 = vmatpush1.bf16.msra.mxu0 %v806
  %1159 = vmatprep.subr.bf16.mxu0 %v809
  %1160 = vmatpush1.bf16.msra.mxu0 %v808
  %1161 = vmatprep.subr.bf16.mxu0 %v811
  %1162 = vmatpush1.bf16.msra.mxu0 %v810
  %1163 = vmatprep.mubr.bf16.mxu0 %v90
  %1164 = vmatmul.mubr.bf16.gmra.mrb[0].mxu0 %v86
  %v1165 = vpop.f32.mrb[0].mxu0
  %v1166 = vadd.f32 %v1113, %v1165
  %v1167 = vpop.f32.mrb[0].mxu0
  %v1168 = vadd.f32 %v1115, %v1167
  %v1169 = vpop.f32.mrb[0].mxu0
  %v1170 = vadd.f32 %v1117, %v1169
  %v1171 = vpop.f32.mrb[0].mxu0
  %v1172 = vadd.f32 %v1119, %v1171
  %1173 = vmatprep.mubr.bf16.mxu0 %v102
  %1174 = vmatmul.mubr.bf16.gmra.mrb[0].mxu0 %v98
  %v1175 = vpop.f32.mrb[0].mxu0
  %v1176 = vadd.f32 %v1123, %v1175
  %v1177 = vpop.f32.mrb[0].mxu0
  %v1178 = vadd.f32 %v1125, %v1177
  %v1179 = vpop.f32.mrb[0].mxu0
  %v1180 = vadd.f32 %v1127, %v1179
  %v1181 = vpop.f32.mrb[0].mxu0
  %v1182 = vadd.f32 %v1129, %v1181
  %1183 = vdwg.mxu0
  %1184 = vmatprep.subr.bf16.mxu0 %v813
  %1185 = vmatpush1.bf16.msra.mxu0 %v812
  %1186 = vmatprep.subr.bf16.mxu0 %v815
  %1187 = vmatpush1.bf16.msra.mxu0 %v814
  %1188 = vmatprep.subr.bf16.mxu0 %v817
  %1189 = vmatpush1.bf16.msra.mxu0 %v816
  %1190 = vmatprep.subr.bf16.mxu0 %v819
  %1191 = vmatpush1.bf16.msra.mxu0 %v818
  %1192 = vmatprep.subr.bf16.mxu0 %v821
  %1193 = vmatpush1.bf16.msra.mxu0 %v820
  %1194 = vmatprep.subr.bf16.mxu0 %v823
  %1195 = vmatpush1.bf16.msra.mxu0 %v822
  %1196 = vmatprep.subr.bf16.mxu0 %v825
  %1197 = vmatpush1.bf16.msra.mxu0 %v824
  %1198 = vmatprep.subr.bf16.mxu0 %v827
  %1199 = vmatpush1.bf16.msra.mxu0 %v826
  %1200 = vmatprep.subr.bf16.mxu0 0
  %1201 = vmatpush1.bf16.msra.mxu0 0
  %1202 = vmatprep.subr.bf16.mxu0 0
  %1203 = vmatpush1.bf16.msra.mxu0 0
  %1204 = vmatprep.subr.bf16.mxu0 0
  %1205 = vmatpush1.bf16.msra.mxu0 0
  %1206 = vmatprep.subr.bf16.mxu0 0
  %1207 = vmatpush1.bf16.msra.mxu0 0
  %1208 = vmatprep.subr.bf16.mxu0 0
  %1209 = vmatpush1.bf16.msra.mxu0 0
  %1210 = vmatprep.subr.bf16.mxu0 0
  %1211 = vmatpush1.bf16.msra.mxu0 0
  %1212 = vmatprep.subr.bf16.mxu0 0
  %1213 = vmatpush1.bf16.msra.mxu0 0
  %1214 = vmatprep.subr.bf16.mxu0 0
  %1215 = vmatpush1.bf16.msra.mxu0 0
  %1216 = vmatprep.mubr.bf16.mxu0 0
  %1217 = vmatmul.mubr.bf16.gmra.mrb[0].mxu0 %v94
  %v1218 = vpop.f32.mrb[0].mxu0
  %v1219 = vadd.f32 %v1166, %v1218
  %v1220 = vpop.f32.mrb[0].mxu0
  %v1221 = vadd.f32 %v1168, %v1220
  %v1222 = vpop.f32.mrb[0].mxu0
  %v1223 = vadd.f32 %v1170, %v1222
  %v1224 = vpop.f32.mrb[0].mxu0
  %v1225 = vadd.f32 %v1172, %v1224
  %1226 = vmatprep.mubr.bf16.mxu0 0
  %1227 = vmatmul.mubr.bf16.gmra.mrb[0].mxu0 %v106
  %v1228 = vpop.f32.mrb[0].mxu0
  %v1229 = vadd.f32 %v1176, %v1228
  %v1230 = vpop.f32.mrb[0].mxu0
  %v1231 = vadd.f32 %v1178, %v1230
  %v1232 = vpop.f32.mrb[0].mxu0
  %v1233 = vadd.f32 %v1180, %v1232
  %v1234 = vpop.f32.mrb[0].mxu0
  %v1235 = vadd.f32 %v1182, %v1234
  %1236 = vdwg.mxu0
  %v1237 = vmax.f32 %v1219, %v1223
  %v1238 = vmax.f32 %v1221, %v1225
  %v1239 = vmax.f32 %v1229, %v1233
  %v1240 = vmax.f32 %v1231, %v1235
  %v1241 = vmax.f32 %v1237, %v1239
  %v1242 = vmax.f32 %v1238, %v1240
  %v1243 = vld [vmem:[%s2] sm:$0x3]
  %v1245 = vlaneseq
  %v1246 = vshrl.u32 %v1245, 7
  %v1247 = vsub.s32 0, %v1246
  %v1248 = vrot.slane %v1243, %v1247
  %v1249 = vlaneseq
  %v1250 = vshrl.u32 %v1249, 7
  %v1251 = vsub.s32 1, %v1250
  %v1252 = vrot.slane %v1243, %v1251
  %v1255 = vadd.f32 %v1241, %v1248
  %v1256 = vadd.f32 %v1242, %v1252
  %v1257 = vmax.f32 %v1255, 0.0
  %v1258 = vmax.f32 %v1256, 0.0
  %v1259 = vpack.c.bf16 %v1257, %v1257
  %v1260 = vpack.c.bf16 %v1258, %v1258
  %v1263 = vunpack.c.l.b16 %v1259
  %v1264 = vunpack.c.l.b16 %v1260
  %v1265 = vpack.c.b16 %v1264, %v1263
  %1267 = vst [vmem:[%s3] sm:$0xff] %v1265
  // Predicated region
  $region14: #{classifier_forward.6} parent=0 // pred_check
    _
  $region15: #{classifier_forward.6} parent=0 // pred_check_branch
    %1269 = sbr.rel (0) target = $region17
  $region16: #{classifier_forward.6} parent=0 // pred_region
    _
  $region17: #{classifier_forward.6} parent=0 // pred_fallthru
    _
  // Predicated region
  $region18: #{classifier_forward.6} parent=0 // pred_check
    _
  $region19: #{classifier_forward.6} parent=0 // pred_check_branch
    %1271 = sbr.rel (0) target = $region21
  $region20: #{classifier_forward.6} parent=0 // pred_region
    _
  $region21: #{classifier_forward.6} parent=0 // pred_fallthru
    _

// kernel: classifier_forward.7
$region0: #{classifier_forward.7}
  #allocation0 [shape = 'u32[]', space=smem, size = 0x4, offset = 0x4, fixed_abs, tag = 'smem constant byte address 0x4 - core index']
  #allocation1 [shape = 'u32[144,128]{1,0:T(1,128)}', space=vmem, size = 0x12000, scoped, tag = 'internal scratch']
  #allocation2 [shape = 'f32[8,1024]{1,0:T(8,128)}', space=vmem, size = 0x8000, scoped, tag = 'scratch operand']
  %s0 = inlined_call_operand.vmem [shape: bf16[8,256], index: 0, kind: input, shape index: {}]
  %s1 = inlined_call_operand.vmem [shape: bf16[256,1024], index: 1, kind: input, shape index: {}]
  %s2 = inlined_call_operand.vmem [shape: f32[1,1024], index: 2, kind: input, shape index: {}]
  %s3 = inlined_call_operand.vmem [shape: f32[1024,128], index: 3, kind: input, shape index: {}]
  %s4 = inlined_call_operand.vmem [shape: f32[1,128], index: 4, kind: input, shape index: {}]
  %s5 = inlined_call_operand.vmem [shape: f32[8,128], index: 5, kind: output, shape index: {}]
  %s6 = sld [smem:[#allocation0]]
  $region38: #{classifier_forward.7} parent=0
    _
  %s8 = ssub.s32 1, %s6
  %s9 = scalar_select 0, %s8, %s6
  // Predicated region
  $region2: #{classifier_forward.7} parent=0 // pred_check
    _
  $region3: #{classifier_forward.7} parent=0 // pred_check_branch
    %11 = sbr.rel (0) target = $region5
  $region4: #{classifier_forward.7} parent=0 // pred_region
    _
  $region5: #{classifier_forward.7} parent=0 // pred_fallthru
    _
  // Predicated region
  $region6: #{classifier_forward.7} parent=0 // pred_check
    _
  $region7: #{classifier_forward.7} parent=0 // pred_check_branch
    %13 = sbr.rel (0) target = $region9
  $region8: #{classifier_forward.7} parent=0 // pred_region
    _
  $region9: #{classifier_forward.7} parent=0 // pred_fallthru
    _
  // Predicated region
  $region10: #{classifier_forward.7} parent=0 // pred_check
    _
  $region11: #{classifier_forward.7} parent=0 // pred_check_branch
    %15 = sbr.rel (0) target = $region13
  $region12: #{classifier_forward.7} parent=0 // pred_region
    _
  $region13: #{classifier_forward.7} parent=0 // pred_fallthru
    _
  // Predicated region
  $region14: #{classifier_forward.7} parent=0 // pred_check
    _
  $region15: #{classifier_forward.7} parent=0 // pred_check_branch
    %17 = sbr.rel (0) target = $region17
  $region16: #{classifier_forward.7} parent=0 // pred_region
    _
  $region17: #{classifier_forward.7} parent=0 // pred_fallthru
    _
  // Predicated region
  $region18: #{classifier_forward.7} parent=0 // pred_check
    _
  $region19: #{classifier_forward.7} parent=0 // pred_check_branch
    %19 = sbr.rel (0) target = $region21
  $region20: #{classifier_forward.7} parent=0 // pred_region
    _
  $region21: #{classifier_forward.7} parent=0 // pred_fallthru
    _
  %p20 = scmp.eq.s32.totalorder 0, 0
  // Predicated region
  $region22: #{classifier_forward.7} parent=0 // pred_check
    %p21 = pneg %p20
  $region23: #{classifier_forward.7} parent=0 // pred_check_branch
    %23 = sbr.rel (%p21) target = $region25
  $region24: #{classifier_forward.7} parent=0 // pred_region
    %24 = vst [vmem:[#allocation2] sm:$0xff] 0.0
    %25 = vst [vmem:[#allocation2 + $0x8] sm:$0xff] 0.0
    %26 = vst [vmem:[#allocation2 + $0x10] sm:$0xff] 0.0
    %27 = vst [vmem:[#allocation2 + $0x18] sm:$0xff] 0.0
    %28 = vst [vmem:[#allocation2 + $0x20] sm:$0xff] 0.0
    %29 = vst [vmem:[#allocation2 + $0x28] sm:$0xff] 0.0
    %30 = vst [vmem:[#allocation2 + $0x30] sm:$0xff] 0.0
    %31 = vst [vmem:[#allocation2 + $0x38] sm:$0xff] 0.0
  $region25: #{classifier_forward.7} parent=0 // pred_fallthru
    _
  %v32 = vld [vmem:[#allocation2] sm:$0xff]
  %v33 = vld [vmem:[#allocation2 + $0x8] sm:$0xff]
  %v34 = vld [vmem:[#allocation2 + $0x10] sm:$0xff]
  %v35 = vld [vmem:[#allocation2 + $0x18] sm:$0xff]
  %v36 = vld [vmem:[#allocation2 + $0x20] sm:$0xff]
  %v37 = vld [vmem:[#allocation2 + $0x28] sm:$0xff]
  %v38 = vld [vmem:[#allocation2 + $0x30] sm:$0xff]
  %v39 = vld [vmem:[#allocation2 + $0x38] sm:$0xff]
  %v40 = vld [vmem:[%s0] sm:$0xff]
  %v41 = vld [vmem:[%s1] sm:$0xff]
  %v42 = vld [vmem:[%s1 + $0x8] sm:$0xff]
  %v43 = vld [vmem:[%s1 + $0x10] sm:$0xff]
  %v44 = vld [vmem:[%s1 + $0x18] sm:$0xff]
  %v45 = vld [vmem:[%s1 + $0x20] sm:$0xff]
  %v46 = vld [vmem:[%s1 + $0x28] sm:$0xff]
  %v47 = vld [vmem:[%s1 + $0x30] sm:$0xff]
  %v48 = vld [vmem:[%s1 + $0x38] sm:$0xff]
  %v49 = vld [vmem:[%s1 + $0x40] sm:$0xff]
  %v50 = vld [vmem:[%s1 + $0x48] sm:$0xff]
  %v51 = vld [vmem:[%s1 + $0x50] sm:$0xff]
  %v52 = vld [vmem:[%s1 + $0x58] sm:$0xff]
  %v53 = vld [vmem:[%s1 + $0x60] sm:$0xff]
  %v54 = vld [vmem:[%s1 + $0x68] sm:$0xff]
  %v55 = vld [vmem:[%s1 + $0x70] sm:$0xff]
  %v56 = vld [vmem:[%s1 + $0x78] sm:$0xff]
  %v57 = vld [vmem:[%s1 + $0x80] sm:$0xff]
  %v58 = vld [vmem:[%s1 + $0x88] sm:$0xff]
  %v59 = vld [vmem:[%s1 + $0x90] sm:$0xff]
  %v60 = vld [vmem:[%s1 + $0x98] sm:$0xff]
  %v61 = vld [vmem:[%s1 + $0xa0] sm:$0xff]
  %v62 = vld [vmem:[%s1 + $0xa8] sm:$0xff]
  %v63 = vld [vmem:[%s1 + $0xb0] sm:$0xff]
  %v64 = vld [vmem:[%s1 + $0xb8] sm:$0xff]
  %v65 = vld [vmem:[%s1 + $0xc0] sm:$0xff]
  %v66 = vld [vmem:[%s1 + $0xc8] sm:$0xff]
  %v67 = vld [vmem:[%s1 + $0xd0] sm:$0xff]
  %v68 = vld [vmem:[%s1 + $0xd8] sm:$0xff]
  %v69 = vld [vmem:[%s1 + $0xe0] sm:$0xff]
  %v70 = vld [vmem:[%s1 + $0xe8] sm:$0xff]
  %v71 = vld [vmem:[%s1 + $0xf0] sm:$0xff]
  %v72 = vld [vmem:[%s1 + $0xf8] sm:$0xff]
  %v73 = vld [vmem:[%s1 + $0x100] sm:$0xff]
  %v74 = vld [vmem:[%s1 + $0x108] sm:$0xff]
  %v75 = vld [vmem:[%s1 + $0x110] sm:$0xff]
  %v76 = vld [vmem:[%s1 + $0x118] sm:$0xff]
  %v77 = vld [vmem:[%s1 + $0x120] sm:$0xff]
  %v78 = vld [vmem:[%s1 + $0x128] sm:$0xff]
  %v79 = vld [vmem:[%s1 + $0x130] sm:$0xff]
  %v80 = vld [vmem:[%s1 + $0x138] sm:$0xff]
  %v81 = vld [vmem:[%s1 + $0x140] sm:$0xff]
  %v82 = vld [vmem:[%s1 + $0x148] sm:$0xff]
  %v83 = vld [vmem:[%s1 + $0x150] sm:$0xff]
  %v84 = vld [vmem:[%s1 + $0x158] sm:$0xff]
  %v85 = vld [vmem:[%s1 + $0x160] sm:$0xff]
  %v86 = vld [vmem:[%s1 + $0x168] sm:$0xff]
  %v87 = vld [vmem:[%s1 + $0x170] sm:$0xff]
  %v88 = vld [vmem:[%s1 + $0x178] sm:$0xff]
  %v89 = vld [vmem:[%s1 + $0x180] sm:$0xff]
  %v90 = vld [vmem:[%s1 + $0x188] sm:$0xff]
  %v91 = vld [vmem:[%s1 + $0x190] sm:$0xff]
  %v92 = vld [vmem:[%s1 + $0x198] sm:$0xff]
  %v93 = vld [vmem:[%s1 + $0x1a0] sm:$0xff]
  %v94 = vld [vmem:[%s1 + $0x1a8] sm:$0xff]
  %v95 = vld [vmem:[%s1 + $0x1b0] sm:$0xff]
  %v96 = vld [vmem:[%s1 + $0x1b8] sm:$0xff]
  %v97 = vld [vmem:[%s1 + $0x1c0] sm:$0xff]
  %v98 = vld [vmem:[%s1 + $0x1c8] sm:$0xff]
  %v99 = vld [vmem:[%s1 + $0x1d0] sm:$0xff]
  %v100 = vld [vmem:[%s1 + $0x1d8] sm:$0xff]
  %v101 = vld [vmem:[%s1 + $0x1e0] sm:$0xff]
  %v102 = vld [vmem:[%s1 + $0x1e8] sm:$0xff]
  %v103 = vld [vmem:[%s1 + $0x1f0] sm:$0xff]
  %v104 = vld [vmem:[%s1 + $0x1f8] sm:$0xff]
  %v105 = vld [vmem:[%s1 + $0x200] sm:$0xff]
  %v106 = vld [vmem:[%s1 + $0x208] sm:$0xff]
  %v107 = vld [vmem:[%s1 + $0x210] sm:$0xff]
  %v108 = vld [vmem:[%s1 + $0x218] sm:$0xff]
  %v109 = vld [vmem:[%s1 + $0x220] sm:$0xff]
  %v110 = vld [vmem:[%s1 + $0x228] sm:$0xff]
  %v111 = vld [vmem:[%s1 + $0x230] sm:$0xff]
  %v112 = vld [vmem:[%s1 + $0x238] sm:$0xff]
  %v113 = vld [vmem:[%s1 + $0x240] sm:$0xff]
  %v114 = vld [vmem:[%s1 + $0x248] sm:$0xff]
  %v115 = vld [vmem:[%s1 + $0x250] sm:$0xff]
  %v116 = vld [vmem:[%s1 + $0x258] sm:$0xff]
  %v117 = vld [vmem:[%s1 + $0x260] sm:$0xff]
  %v118 = vld [vmem:[%s1 + $0x268] sm:$0xff]
  %v119 = vld [vmem:[%s1 + $0x270] sm:$0xff]
  %v120 = vld [vmem:[%s1 + $0x278] sm:$0xff]
  %v121 = vld [vmem:[%s1 + $0x280] sm:$0xff]
  %v122 = vld [vmem:[%s1 + $0x288] sm:$0xff]
  %v123 = vld [vmem:[%s1 + $0x290] sm:$0xff]
  %v124 = vld [vmem:[%s1 + $0x298] sm:$0xff]
  %v125 = vld [vmem:[%s1 + $0x2a0] sm:$0xff]
  %v126 = vld [vmem:[%s1 + $0x2a8] sm:$0xff]
  %v127 = vld [vmem:[%s1 + $0x2b0] sm:$0xff]
  %v128 = vld [vmem:[%s1 + $0x2b8] sm:$0xff]
  %v129 = vld [vmem:[%s1 + $0x2c0] sm:$0xff]
  %v130 = vld [vmem:[%s1 + $0x2c8] sm:$0xff]
  %v131 = vld [vmem:[%s1 + $0x2d0] sm:$0xff]
  %v132 = vld [vmem:[%s1 + $0x2d8] sm:$0xff]
  %v133 = vld [vmem:[%s1 + $0x2e0] sm:$0xff]
  %v134 = vld [vmem:[%s1 + $0x2e8] sm:$0xff]
  %v135 = vld [vmem:[%s1 + $0x2f0] sm:$0xff]
  %v136 = vld [vmem:[%s1 + $0x2f8] sm:$0xff]
  %v137 = vld [vmem:[%s1 + $0x300] sm:$0xff]
  %v138 = vld [vmem:[%s1 + $0x308] sm:$0xff]
  %v139 = vld [vmem:[%s1 + $0x310] sm:$0xff]
  %v140 = vld [vmem:[%s1 + $0x318] sm:$0xff]
  %v141 = vld [vmem:[%s1 + $0x320] sm:$0xff]
  %v142 = vld [vmem:[%s1 + $0x328] sm:$0xff]
  %v143 = vld [vmem:[%s1 + $0x330] sm:$0xff]
  %v144 = vld [vmem:[%s1 + $0x338] sm:$0xff]
  %v145 = vld [vmem:[%s1 + $0x340] sm:$0xff]
  %v146 = vld [vmem:[%s1 + $0x348] sm:$0xff]
  %v147 = vld [vmem:[%s1 + $0x350] sm:$0xff]
  %v148 = vld [vmem:[%s1 + $0x358] sm:$0xff]
  %v149 = vld [vmem:[%s1 + $0x360] sm:$0xff]
  %v150 = vld [vmem:[%s1 + $0x368] sm:$0xff]
  %v151 = vld [vmem:[%s1 + $0x370] sm:$0xff]
  %v152 = vld [vmem:[%s1 + $0x378] sm:$0xff]
  %v153 = vld [vmem:[%s1 + $0x380] sm:$0xff]
  %v154 = vld [vmem:[%s1 + $0x388] sm:$0xff]
  %v155 = vld [vmem:[%s1 + $0x390] sm:$0xff]
  %v156 = vld [vmem:[%s1 + $0x398] sm:$0xff]
  %v157 = vld [vmem:[%s1 + $0x3a0] sm:$0xff]
  %v158 = vld [vmem:[%s1 + $0x3a8] sm:$0xff]
  %v159 = vld [vmem:[%s1 + $0x3b0] sm:$0xff]
  %v160 = vld [vmem:[%s1 + $0x3b8] sm:$0xff]
  %v161 = vld [vmem:[%s1 + $0x3c0] sm:$0xff]
  %v162 = vld [vmem:[%s1 + $0x3c8] sm:$0xff]
  %v163 = vld [vmem:[%s1 + $0x3d0] sm:$0xff]
  %v164 = vld [vmem:[%s1 + $0x3d8] sm:$0xff]
  %v165 = vld [vmem:[%s1 + $0x3e0] sm:$0xff]
  %v166 = vld [vmem:[%s1 + $0x3e8] sm:$0xff]
  %v167 = vld [vmem:[%s1 + $0x3f0] sm:$0xff]
  %v168 = vld [vmem:[%s1 + $0x3f8] sm:$0xff]
  %v170 = vunpack.c.l.b16 %v40
  %v171 = vunpack.c.h.b16 %v40
  %v172 = vpack.c.b16 %v170, %v170
  %v173 = vpack.c.b16 %v171, %v171
  %v304 = vunpack.c.l.b16 %v41
  %v305 = vunpack.c.h.b16 %v41
  %v306 = vunpack.c.l.b16 %v42
  %v307 = vunpack.c.h.b16 %v42
  %v308 = vunpack.c.l.b16 %v43
  %v309 = vunpack.c.h.b16 %v43
  %v310 = vunpack.c.l.b16 %v44
  %v311 = vunpack.c.h.b16 %v44
  %v312 = vunpack.c.l.b16 %v45
  %v313 = vunpack.c.h.b16 %v45
  %v314 = vunpack.c.l.b16 %v46
  %v315 = vunpack.c.h.b16 %v46
  %v316 = vunpack.c.l.b16 %v47
  %v317 = vunpack.c.h.b16 %v47
  %v318 = vunpack.c.l.b16 %v48
  %v319 = vunpack.c.h.b16 %v48
  %v320 = vunpack.c.l.b16 %v49
  %v321 = vunpack.c.h.b16 %v49
  %v322 = vunpack.c.l.b16 %v50
  %v323 = vunpack.c.h.b16 %v50
  %v324 = vunpack.c.l.b16 %v51
  %v325 = vunpack.c.h.b16 %v51
  %v326 = vunpack.c.l.b16 %v52
  %v327 = vunpack.c.h.b16 %v52
  %v328 = vunpack.c.l.b16 %v53
  %v329 = vunpack.c.h.b16 %v53
  %v330 = vunpack.c.l.b16 %v54
  %v331 = vunpack.c.h.b16 %v54
  %v332 = vunpack.c.l.b16 %v55
  %v333 = vunpack.c.h.b16 %v55
  %v334 = vunpack.c.l.b16 %v56
  %v335 = vunpack.c.h.b16 %v56
  %v336 = vunpack.c.l.b16 %v57
  %v337 = vunpack.c.h.b16 %v57
  %v338 = vunpack.c.l.b16 %v58
  %v339 = vunpack.c.h.b16 %v58
  %v340 = vunpack.c.l.b16 %v59
  %v341 = vunpack.c.h.b16 %v59
  %v342 = vunpack.c.l.b16 %v60
  %v343 = vunpack.c.h.b16 %v60
  %v344 = vunpack.c.l.b16 %v61
  %v345 = vunpack.c.h.b16 %v61
  %v346 = vunpack.c.l.b16 %v62
  %v347 = vunpack.c.h.b16 %v62
  %v348 = vunpack.c.l.b16 %v63
  %v349 = vunpack.c.h.b16 %v63
  %v350 = vunpack.c.l.b16 %v64
  %v351 = vunpack.c.h.b16 %v64
  %v352 = vunpack.c.l.b16 %v65
  %v353 = vunpack.c.h.b16 %v65
  %v354 = vunpack.c.l.b16 %v66
  %v355 = vunpack.c.h.b16 %v66
  %v356 = vunpack.c.l.b16 %v67
  %v357 = vunpack.c.h.b16 %v67
  %v358 = vunpack.c.l.b16 %v68
  %v359 = vunpack.c.h.b16 %v68
  %v360 = vunpack.c.l.b16 %v69
  %v361 = vunpack.c.h.b16 %v69
  %v362 = vunpack.c.l.b16 %v70
  %v363 = vunpack.c.h.b16 %v70
  %v364 = vunpack.c.l.b16 %v71
  %v365 = vunpack.c.h.b16 %v71
  %v366 = vunpack.c.l.b16 %v72
  %v367 = vunpack.c.h.b16 %v72
  %v368 = vunpack.c.l.b16 %v73
  %v369 = vunpack.c.h.b16 %v73
  %v370 = vunpack.c.l.b16 %v74
  %v371 = vunpack.c.h.b16 %v74
  %v372 = vunpack.c.l.b16 %v75
  %v373 = vunpack.c.h.b16 %v75
  %v374 = vunpack.c.l.b16 %v76
  %v375 = vunpack.c.h.b16 %v76
  %v376 = vunpack.c.l.b16 %v77
  %v377 = vunpack.c.h.b16 %v77
  %v378 = vunpack.c.l.b16 %v78
  %v379 = vunpack.c.h.b16 %v78
  %v380 = vunpack.c.l.b16 %v79
  %v381 = vunpack.c.h.b16 %v79
  %v382 = vunpack.c.l.b16 %v80
  %v383 = vunpack.c.h.b16 %v80
  %v384 = vunpack.c.l.b16 %v81
  %v385 = vunpack.c.h.b16 %v81
  %v386 = vunpack.c.l.b16 %v82
  %v387 = vunpack.c.h.b16 %v82
  %v388 = vunpack.c.l.b16 %v83
  %v389 = vunpack.c.h.b16 %v83
  %v390 = vunpack.c.l.b16 %v84
  %v391 = vunpack.c.h.b16 %v84
  %v392 = vunpack.c.l.b16 %v85
  %v393 = vunpack.c.h.b16 %v85
  %v394 = vunpack.c.l.b16 %v86
  %v395 = vunpack.c.h.b16 %v86
  %v396 = vunpack.c.l.b16 %v87
  %v397 = vunpack.c.h.b16 %v87
  %v398 = vunpack.c.l.b16 %v88
  %v399 = vunpack.c.h.b16 %v88
  %v400 = vunpack.c.l.b16 %v89
  %v401 = vunpack.c.h.b16 %v89
  %v402 = vunpack.c.l.b16 %v90
  %v403 = vunpack.c.h.b16 %v90
  %v404 = vunpack.c.l.b16 %v91
  %v405 = vunpack.c.h.b16 %v91
  %v406 = vunpack.c.l.b16 %v92
  %v407 = vunpack.c.h.b16 %v92
  %v408 = vunpack.c.l.b16 %v93
  %v409 = vunpack.c.h.b16 %v93
  %v410 = vunpack.c.l.b16 %v94
  %v411 = vunpack.c.h.b16 %v94
  %v412 = vunpack.c.l.b16 %v95
  %v413 = vunpack.c.h.b16 %v95
  %v414 = vunpack.c.l.b16 %v96
  %v415 = vunpack.c.h.b16 %v96
  %v416 = vunpack.c.l.b16 %v97
  %v417 = vunpack.c.h.b16 %v97
  %v418 = vunpack.c.l.b16 %v98
  %v419 = vunpack.c.h.b16 %v98
  %v420 = vunpack.c.l.b16 %v99
  %v421 = vunpack.c.h.b16 %v99
  %v422 = vunpack.c.l.b16 %v100
  %v423 = vunpack.c.h.b16 %v100
  %v424 = vunpack.c.l.b16 %v101
  %v425 = vunpack.c.h.b16 %v101
  %v426 = vunpack.c.l.b16 %v102
  %v427 = vunpack.c.h.b16 %v102
  %v428 = vunpack.c.l.b16 %v103
  %v429 = vunpack.c.h.b16 %v103
  %v430 = vunpack.c.l.b16 %v104
  %v431 = vunpack.c.h.b16 %v104
  %v432 = vunpack.c.l.b16 %v105
  %v433 = vunpack.c.h.b16 %v105
  %v434 = vunpack.c.l.b16 %v106
  %v435 = vunpack.c.h.b16 %v106
  %v436 = vunpack.c.l.b16 %v107
  %v437 = vunpack.c.h.b16 %v107
  %v438 = vunpack.c.l.b16 %v108
  %v439 = vunpack.c.h.b16 %v108
  %v440 = vunpack.c.l.b16 %v109
  %v441 = vunpack.c.h.b16 %v109
  %v442 = vunpack.c.l.b16 %v110
  %v443 = vunpack.c.h.b16 %v110
  %v444 = vunpack.c.l.b16 %v111
  %v445 = vunpack.c.h.b16 %v111
  %v446 = vunpack.c.l.b16 %v112
  %v447 = vunpack.c.h.b16 %v112
  %v448 = vunpack.c.l.b16 %v113
  %v449 = vunpack.c.h.b16 %v113
  %v450 = vunpack.c.l.b16 %v114
  %v451 = vunpack.c.h.b16 %v114
  %v452 = vunpack.c.l.b16 %v115
  %v453 = vunpack.c.h.b16 %v115
  %v454 = vunpack.c.l.b16 %v116
  %v455 = vunpack.c.h.b16 %v116
  %v456 = vunpack.c.l.b16 %v117
  %v457 = vunpack.c.h.b16 %v117
  %v458 = vunpack.c.l.b16 %v118
  %v459 = vunpack.c.h.b16 %v118
  %v460 = vunpack.c.l.b16 %v119
  %v461 = vunpack.c.h.b16 %v119
  %v462 = vunpack.c.l.b16 %v120
  %v463 = vunpack.c.h.b16 %v120
  %v464 = vunpack.c.l.b16 %v121
  %v465 = vunpack.c.h.b16 %v121
  %v466 = vunpack.c.l.b16 %v122
  %v467 = vunpack.c.h.b16 %v122
  %v468 = vunpack.c.l.b16 %v123
  %v469 = vunpack.c.h.b16 %v123
  %v470 = vunpack.c.l.b16 %v124
  %v471 = vunpack.c.h.b16 %v124
  %v472 = vunpack.c.l.b16 %v125
  %v473 = vunpack.c.h.b16 %v125
  %v474 = vunpack.c.l.b16 %v126
  %v475 = vunpack.c.h.b16 %v126
  %v476 = vunpack.c.l.b16 %v127
  %v477 = vunpack.c.h.b16 %v127
  %v478 = vunpack.c.l.b16 %v128
  %v479 = vunpack.c.h.b16 %v128
  %v480 = vunpack.c.l.b16 %v129
  %v481 = vunpack.c.h.b16 %v129
  %v482 = vunpack.c.l.b16 %v130
  %v483 = vunpack.c.h.b16 %v130
  %v484 = vunpack.c.l.b16 %v131
  %v485 = vunpack.c.h.b16 %v131
  %v486 = vunpack.c.l.b16 %v132
  %v487 = vunpack.c.h.b16 %v132
  %v488 = vunpack.c.l.b16 %v133
  %v489 = vunpack.c.h.b16 %v133
  %v490 = vunpack.c.l.b16 %v134
  %v491 = vunpack.c.h.b16 %v134
  %v492 = vunpack.c.l.b16 %v135
  %v493 = vunpack.c.h.b16 %v135
  %v494 = vunpack.c.l.b16 %v136
  %v495 = vunpack.c.h.b16 %v136
  %v496 = vunpack.c.l.b16 %v137
  %v497 = vunpack.c.h.b16 %v137
  %v498 = vunpack.c.l.b16 %v138
  %v499 = vunpack.c.h.b16 %v138
  %v500 = vunpack.c.l.b16 %v139
  %v501 = vunpack.c.h.b16 %v139
  %v502 = vunpack.c.l.b16 %v140
  %v503 = vunpack.c.h.b16 %v140
  %v504 = vunpack.c.l.b16 %v141
  %v505 = vunpack.c.h.b16 %v141
  %v506 = vunpack.c.l.b16 %v142
  %v507 = vunpack.c.h.b16 %v142
  %v508 = vunpack.c.l.b16 %v143
  %v509 = vunpack.c.h.b16 %v143
  %v510 = vunpack.c.l.b16 %v144
  %v511 = vunpack.c.h.b16 %v144
  %v512 = vunpack.c.l.b16 %v145
  %v513 = vunpack.c.h.b16 %v145
  %v514 = vunpack.c.l.b16 %v146
  %v515 = vunpack.c.h.b16 %v146
  %v516 = vunpack.c.l.b16 %v147
  %v517 = vunpack.c.h.b16 %v147
  %v518 = vunpack.c.l.b16 %v148
  %v519 = vunpack.c.h.b16 %v148
  %v520 = vunpack.c.l.b16 %v149
  %v521 = vunpack.c.h.b16 %v149
  %v522 = vunpack.c.l.b16 %v150
  %v523 = vunpack.c.h.b16 %v150
  %v524 = vunpack.c.l.b16 %v151
  %v525 = vunpack.c.h.b16 %v151
  %v526 = vunpack.c.l.b16 %v152
  %v527 = vunpack.c.h.b16 %v152
  %v528 = vunpack.c.l.b16 %v153
  %v529 = vunpack.c.h.b16 %v153
  %v530 = vunpack.c.l.b16 %v154
  %v531 = vunpack.c.h.b16 %v154
  %v532 = vunpack.c.l.b16 %v155
  %v533 = vunpack.c.h.b16 %v155
  %v534 = vunpack.c.l.b16 %v156
  %v535 = vunpack.c.h.b16 %v156
  %v536 = vunpack.c.l.b16 %v157
  %v537 = vunpack.c.h.b16 %v157
  %v538 = vunpack.c.l.b16 %v158
  %v539 = vunpack.c.h.b16 %v158
  %v540 = vunpack.c.l.b16 %v159
  %v541 = vunpack.c.h.b16 %v159
  %v542 = vunpack.c.l.b16 %v160
  %v543 = vunpack.c.h.b16 %v160
  %v544 = vunpack.c.l.b16 %v161
  %v545 = vunpack.c.h.b16 %v161
  %v546 = vunpack.c.l.b16 %v162
  %v547 = vunpack.c.h.b16 %v162
  %v548 = vunpack.c.l.b16 %v163
  %v549 = vunpack.c.h.b16 %v163
  %v550 = vunpack.c.l.b16 %v164
  %v551 = vunpack.c.h.b16 %v164
  %v552 = vunpack.c.l.b16 %v165
  %v553 = vunpack.c.h.b16 %v165
  %v554 = vunpack.c.l.b16 %v166
  %v555 = vunpack.c.h.b16 %v166
  %v556 = vunpack.c.l.b16 %v167
  %v557 = vunpack.c.h.b16 %v167
  %v558 = vunpack.c.l.b16 %v168
  %v559 = vunpack.c.h.b16 %v168
  %v560 = vpack.c.b16 %v312, %v304
  %v561 = vpack.c.b16 %v313, %v305
  %v562 = vpack.c.b16 %v314, %v306
  %v563 = vpack.c.b16 %v315, %v307
  %v564 = vpack.c.b16 %v316, %v308
  %v565 = vpack.c.b16 %v317, %v309
  %v566 = vpack.c.b16 %v318, %v310
  %v567 = vpack.c.b16 %v319, %v311
  %v568 = vpack.c.b16 %v328, %v320
  %v569 = vpack.c.b16 %v329, %v321
  %v570 = vpack.c.b16 %v330, %v322
  %v571 = vpack.c.b16 %v331, %v323
  %v572 = vpack.c.b16 %v332, %v324
  %v573 = vpack.c.b16 %v333, %v325
  %v574 = vpack.c.b16 %v334, %v326
  %v575 = vpack.c.b16 %v335, %v327
  %v576 = vpack.c.b16 %v344, %v336
  %v577 = vpack.c.b16 %v345, %v337
  %v578 = vpack.c.b16 %v346, %v338
  %v579 = vpack.c.b16 %v347, %v339
  %v580 = vpack.c.b16 %v348, %v340
  %v581 = vpack.c.b16 %v349, %v341
  %v582 = vpack.c.b16 %v350, %v342
  %v583 = vpack.c.b16 %v351, %v343
  %v584 = vpack.c.b16 %v360, %v352
  %v585 = vpack.c.b16 %v361, %v353
  %v586 = vpack.c.b16 %v362, %v354
  %v587 = vpack.c.b16 %v363, %v355
  %v588 = vpack.c.b16 %v364, %v356
  %v589 = vpack.c.b16 %v365, %v357
  %v590 = vpack.c.b16 %v366, %v358
  %v591 = vpack.c.b16 %v367, %v359
  %v592 = vpack.c.b16 %v376, %v368
  %v593 = vpack.c.b16 %v377, %v369
  %v594 = vpack.c.b16 %v378, %v370
  %v595 = vpack.c.b16 %v379, %v371
  %v596 = vpack.c.b16 %v380, %v372
  %v597 = vpack.c.b16 %v381, %v373
  %v598 = vpack.c.b16 %v382, %v374
  %v599 = vpack.c.b16 %v383, %v375
  %v600 = vpack.c.b16 %v392, %v384
  %v601 = vpack.c.b16 %v393, %v385
  %v602 = vpack.c.b16 %v394, %v386
  %v603 = vpack.c.b16 %v395, %v387
  %v604 = vpack.c.b16 %v396, %v388
  %v605 = vpack.c.b16 %v397, %v389
  %v606 = vpack.c.b16 %v398, %v390
  %v607 = vpack.c.b16 %v399, %v391
  %v608 = vpack.c.b16 %v408, %v400
  %v609 = vpack.c.b16 %v409, %v401
  %v610 = vpack.c.b16 %v410, %v402
  %v611 = vpack.c.b16 %v411, %v403
  %v612 = vpack.c.b16 %v412, %v404
  %v613 = vpack.c.b16 %v413, %v405
  %v614 = vpack.c.b16 %v414, %v406
  %v615 = vpack.c.b16 %v415, %v407
  %v616 = vpack.c.b16 %v424, %v416
  %v617 = vpack.c.b16 %v425, %v417
  %v618 = vpack.c.b16 %v426, %v418
  %v619 = vpack.c.b16 %v427, %v419
  %v620 = vpack.c.b16 %v428, %v420
  %v621 = vpack.c.b16 %v429, %v421
  %v622 = vpack.c.b16 %v430, %v422
  %v623 = vpack.c.b16 %v431, %v423
  %v624 = vpack.c.b16 %v440, %v432
  %v625 = vpack.c.b16 %v441, %v433
  %v626 = vpack.c.b16 %v442, %v434
  %v627 = vpack.c.b16 %v443, %v435
  %v628 = vpack.c.b16 %v444, %v436
  %v629 = vpack.c.b16 %v445, %v437
  %v630 = vpack.c.b16 %v446, %v438
  %v631 = vpack.c.b16 %v447, %v439
  %v632 = vpack.c.b16 %v456, %v448
  %v633 = vpack.c.b16 %v457, %v449
  %v634 = vpack.c.b16 %v458, %v450
  %v635 = vpack.c.b16 %v459, %v451
  %v636 = vpack.c.b16 %v460, %v452
  %v637 = vpack.c.b16 %v461, %v453
  %v638 = vpack.c.b16 %v462, %v454
  %v639 = vpack.c.b16 %v463, %v455
  %v640 = vpack.c.b16 %v472, %v464
  %v641 = vpack.c.b16 %v473, %v465
  %v642 = vpack.c.b16 %v474, %v466
  %v643 = vpack.c.b16 %v475, %v467
  %v644 = vpack.c.b16 %v476, %v468
  %v645 = vpack.c.b16 %v477, %v469
  %v646 = vpack.c.b16 %v478, %v470
  %v647 = vpack.c.b16 %v479, %v471
  %v648 = vpack.c.b16 %v488, %v480
  %v649 = vpack.c.b16 %v489, %v481
  %v650 = vpack.c.b16 %v490, %v482
  %v651 = vpack.c.b16 %v491, %v483
  %v652 = vpack.c.b16 %v492, %v484
  %v653 = vpack.c.b16 %v493, %v485
  %v654 = vpack.c.b16 %v494, %v486
  %v655 = vpack.c.b16 %v495, %v487
  %v656 = vpack.c.b16 %v504, %v496
  %v657 = vpack.c.b16 %v505, %v497
  %v658 = vpack.c.b16 %v506, %v498
  %v659 = vpack.c.b16 %v507, %v499
  %v660 = vpack.c.b16 %v508, %v500
  %v661 = vpack.c.b16 %v509, %v501
  %v662 = vpack.c.b16 %v510, %v502
  %v663 = vpack.c.b16 %v511, %v503
  %v664 = vpack.c.b16 %v520, %v512
  %v665 = vpack.c.b16 %v521, %v513
  %v666 = vpack.c.b16 %v522, %v514
  %v667 = vpack.c.b16 %v523, %v515
  %v668 = vpack.c.b16 %v524, %v516
  %v669 = vpack.c.b16 %v525, %v517
  %v670 = vpack.c.b16 %v526, %v518
  %v671 = vpack.c.b16 %v527, %v519
  %v672 = vpack.c.b16 %v536, %v528
  %v673 = vpack.c.b16 %v537, %v529
  %v674 = vpack.c.b16 %v538, %v530
  %v675 = vpack.c.b16 %v539, %v531
  %v676 = vpack.c.b16 %v540, %v532
  %v677 = vpack.c.b16 %v541, %v533
  %v678 = vpack.c.b16 %v542, %v534
  %v679 = vpack.c.b16 %v543, %v535
  %v680 = vpack.c.b16 %v552, %v544
  %v681 = vpack.c.b16 %v553, %v545
  %v682 = vpack.c.b16 %v554, %v546
  %v683 = vpack.c.b16 %v555, %v547
  %v684 = vpack.c.b16 %v556, %v548
  %v685 = vpack.c.b16 %v557, %v549
  %v686 = vpack.c.b16 %v558, %v550
  %v687 = vpack.c.b16 %v559, %v551
  %816 = vmatprep.subr.bf16.mxu0 %v561
  %817 = vmatpush1.bf16.msra.mxu0 %v560
  %818 = vmatprep.subr.bf16.mxu0 %v569
  %819 = vmatpush1.bf16.msra.mxu0 %v568
  %820 = vmatprep.subr.bf16.mxu0 %v577
  %821 = vmatpush1.bf16.msra.mxu0 %v576
  %822 = vmatprep.subr.bf16.mxu0 %v585
  %823 = vmatpush1.bf16.msra.mxu0 %v584
  %824 = vmatprep.subr.bf16.mxu0 %v593
  %825 = vmatpush1.bf16.msra.mxu0 %v592
  %826 = vmatprep.subr.bf16.mxu0 %v601
  %827 = vmatpush1.bf16.msra.mxu0 %v600
  %828 = vmatprep.subr.bf16.mxu0 %v609
  %829 = vmatpush1.bf16.msra.mxu0 %v608
  %830 = vmatprep.subr.bf16.mxu0 %v617
  %831 = vmatpush1.bf16.msra.mxu0 %v616
  %832 = vmatprep.subr.bf16.mxu0 %v625
  %833 = vmatpush1.bf16.msra.mxu0 %v624
  %834 = vmatprep.subr.bf16.mxu0 %v633
  %835 = vmatpush1.bf16.msra.mxu0 %v632
  %836 = vmatprep.subr.bf16.mxu0 %v641
  %837 = vmatpush1.bf16.msra.mxu0 %v640
  %838 = vmatprep.subr.bf16.mxu0 %v649
  %839 = vmatpush1.bf16.msra.mxu0 %v648
  %840 = vmatprep.subr.bf16.mxu0 %v657
  %841 = vmatpush1.bf16.msra.mxu0 %v656
  %842 = vmatprep.subr.bf16.mxu0 %v665
  %843 = vmatpush1.bf16.msra.mxu0 %v664
  %844 = vmatprep.subr.bf16.mxu0 %v673
  %845 = vmatpush1.bf16.msra.mxu0 %v672
  %846 = vmatprep.subr.bf16.mxu0 %v681
  %847 = vmatpush1.bf16.msra.mxu0 %v680
  %848 = vmatprep.mubr.bf16.mxu0 %v173
  %849 = vmatmul.mubr.bf16.gmra.mrb[0].mxu0 %v172
  %v850 = vpop.f32.mrb[0].mxu0
  %v851 = vadd.f32 0.0, %v850
  %v852 = vpop.f32.mrb[0].mxu0
  %v853 = vadd.f32 0.0, %v852
  %v854 = vpop.f32.mrb[0].mxu0
  %v855 = vpop.f32.mrb[0].mxu0
  %856 = vdwg.mxu0
  %857 = vmatprep.subr.bf16.mxu0 %v563
  %858 = vmatpush1.bf16.msra.mxu0 %v562
  %859 = vmatprep.subr.bf16.mxu0 %v571
  %860 = vmatpush1.bf16.msra.mxu0 %v570
  %861 = vmatprep.subr.bf16.mxu0 %v579
  %862 = vmatpush1.bf16.msra.mxu0 %v578
  %863 = vmatprep.subr.bf16.mxu0 %v587
  %864 = vmatpush1.bf16.msra.mxu0 %v586
  %865 = vmatprep.subr.bf16.mxu0 %v595
  %866 = vmatpush1.bf16.msra.mxu0 %v594
  %867 = vmatprep.subr.bf16.mxu0 %v603
  %868 = vmatpush1.bf16.msra.mxu0 %v602
  %869 = vmatprep.subr.bf16.mxu0 %v611
  %870 = vmatpush1.bf16.msra.mxu0 %v610
  %871 = vmatprep.subr.bf16.mxu0 %v619
  %872 = vmatpush1.bf16.msra.mxu0 %v618
  %873 = vmatprep.subr.bf16.mxu0 %v627
  %874 = vmatpush1.bf16.msra.mxu0 %v626
  %875 = vmatprep.subr.bf16.mxu0 %v635
  %876 = vmatpush1.bf16.msra.mxu0 %v634
  %877 = vmatprep.subr.bf16.mxu0 %v643
  %878 = vmatpush1.bf16.msra.mxu0 %v642
  %879 = vmatprep.subr.bf16.mxu0 %v651
  %880 = vmatpush1.bf16.msra.mxu0 %v650
  %881 = vmatprep.subr.bf16.mxu0 %v659
  %882 = vmatpush1.bf16.msra.mxu0 %v658
  %883 = vmatprep.subr.bf16.mxu0 %v667
  %884 = vmatpush1.bf16.msra.mxu0 %v666
  %885 = vmatprep.subr.bf16.mxu0 %v675
  %886 = vmatpush1.bf16.msra.mxu0 %v674
  %887 = vmatprep.subr.bf16.mxu0 %v683
  %888 = vmatpush1.bf16.msra.mxu0 %v682
  %889 = vmatprep.mubr.bf16.mxu0 %v173
  %890 = vmatmul.mubr.bf16.gmra.mrb[0].mxu0 %v172
  %v891 = vpop.f32.mrb[0].mxu0
  %v892 = vadd.f32 0.0, %v891
  %v893 = vpop.f32.mrb[0].mxu0
  %v894 = vadd.f32 0.0, %v893
  %v895 = vpop.f32.mrb[0].mxu0
  %v896 = vpop.f32.mrb[0].mxu0
  %897 = vdwg.mxu0
  %898 = vmatprep.subr.bf16.mxu0 %v565
  %899 = vmatpush1.bf16.msra.mxu0 %v564
  %900 = vmatprep.subr.bf16.mxu0 %v573
  %901 = vmatpush1.bf16.msra.mxu0 %v572
  %902 = vmatprep.subr.bf16.mxu0 %v581
  %903 = vmatpush1.bf16.msra.mxu0 %v580
  %904 = vmatprep.subr.bf16.mxu0 %v589
  %905 = vmatpush1.bf16.msra.mxu0 %v588
  %906 = vmatprep.subr.bf16.mxu0 %v597
  %907 = vmatpush1.bf16.msra.mxu0 %v596
  %908 = vmatprep.subr.bf16.mxu0 %v605
  %909 = vmatpush1.bf16.msra.mxu0 %v604
  %910 = vmatprep.subr.bf16.mxu0 %v613
  %911 = vmatpush1.bf16.msra.mxu0 %v612
  %912 = vmatprep.subr.bf16.mxu0 %v621
  %913 = vmatpush1.bf16.msra.mxu0 %v620
  %914 = vmatprep.subr.bf16.mxu0 %v629
  %915 = vmatpush1.bf16.msra.mxu0 %v628
  %916 = vmatprep.subr.bf16.mxu0 %v637
  %917 = vmatpush1.bf16.msra.mxu0 %v636
  %918 = vmatprep.subr.bf16.mxu0 %v645
  %919 = vmatpush1.bf16.msra.mxu0 %v644
  %920 = vmatprep.subr.bf16.mxu0 %v653
  %921 = vmatpush1.bf16.msra.mxu0 %v652
  %922 = vmatprep.subr.bf16.mxu0 %v661
  %923 = vmatpush1.bf16.msra.mxu0 %v660
  %924 = vmatprep.subr.bf16.mxu0 %v669
  %925 = vmatpush1.bf16.msra.mxu0 %v668
  %926 = vmatprep.subr.bf16.mxu0 %v677
  %927 = vmatpush1.bf16.msra.mxu0 %v676
  %928 = vmatprep.subr.bf16.mxu0 %v685
  %929 = vmatpush1.bf16.msra.mxu0 %v684
  %930 = vmatprep.mubr.bf16.mxu0 %v173
  %931 = vmatmul.mubr.bf16.gmra.mrb[0].mxu0 %v172
  %v932 = vpop.f32.mrb[0].mxu0
  %v933 = vadd.f32 0.0, %v932
  %v934 = vpop.f32.mrb[0].mxu0
  %v935 = vadd.f32 0.0, %v934
  %v936 = vpop.f32.mrb[0].mxu0
  %v937 = vpop.f32.mrb[0].mxu0
  %938 = vdwg.mxu0
  %939 = vmatprep.subr.bf16.mxu0 %v567
  %940 = vmatpush1.bf16.msra.mxu0 %v566
  %941 = vmatprep.subr.bf16.mxu0 %v575
  %942 = vmatpush1.bf16.msra.mxu0 %v574
  %943 = vmatprep.subr.bf16.mxu0 %v583
  %944 = vmatpush1.bf16.msra.mxu0 %v582
  %945 = vmatprep.subr.bf16.mxu0 %v591
  %946 = vmatpush1.bf16.msra.mxu0 %v590
  %947 = vmatprep.subr.bf16.mxu0 %v599
  %948 = vmatpush1.bf16.msra.mxu0 %v598
  %949 = vmatprep.subr.bf16.mxu0 %v607
  %950 = vmatpush1.bf16.msra.mxu0 %v606
  %951 = vmatprep.subr.bf16.mxu0 %v615
  %952 = vmatpush1.bf16.msra.mxu0 %v614
  %953 = vmatprep.subr.bf16.mxu0 %v623
  %954 = vmatpush1.bf16.msra.mxu0 %v622
  %955 = vmatprep.subr.bf16.mxu0 %v631
  %956 = vmatpush1.bf16.msra.mxu0 %v630
  %957 = vmatprep.subr.bf16.mxu0 %v639
  %958 = vmatpush1.bf16.msra.mxu0 %v638
  %959 = vmatprep.subr.bf16.mxu0 %v647
  %960 = vmatpush1.bf16.msra.mxu0 %v646
  %961 = vmatprep.subr.bf16.mxu0 %v655
  %962 = vmatpush1.bf16.msra.mxu0 %v654
  %963 = vmatprep.subr.bf16.mxu0 %v663
  %964 = vmatpush1.bf16.msra.mxu0 %v662
  %965 = vmatprep.subr.bf16.mxu0 %v671
  %966 = vmatpush1.bf16.msra.mxu0 %v670
  %967 = vmatprep.subr.bf16.mxu0 %v679
  %968 = vmatpush1.bf16.msra.mxu0 %v678
  %969 = vmatprep.subr.bf16.mxu0 %v687
  %970 = vmatpush1.bf16.msra.mxu0 %v686
  %971 = vmatprep.mubr.bf16.mxu0 %v173
  %972 = vmatmul.mubr.bf16.gmra.mrb[0].mxu0 %v172
  %v973 = vpop.f32.mrb[0].mxu0
  %v974 = vadd.f32 0.0, %v973
  %v975 = vpop.f32.mrb[0].mxu0
  %v976 = vadd.f32 0.0, %v975
  %v977 = vpop.f32.mrb[0].mxu0
  %v978 = vpop.f32.mrb[0].mxu0
  %979 = vdwg.mxu0
  %v980 = vadd.f32 %v32, %v851
  %v981 = vadd.f32 %v33, %v853
  %v982 = vadd.f32 %v34, %v892
  %v983 = vadd.f32 %v35, %v894
  %v984 = vadd.f32 %v36, %v933
  %v985 = vadd.f32 %v37, %v935
  %v986 = vadd.f32 %v38, %v974
  %v987 = vadd.f32 %v39, %v976
  %988 = vst [vmem:[#allocation2] sm:$0xff] %v980
  %989 = vst [vmem:[#allocation2 + $0x8] sm:$0xff] %v981
  %990 = vst [vmem:[#allocation2 + $0x10] sm:$0xff] %v982
  %991 = vst [vmem:[#allocation2 + $0x18] sm:$0xff] %v983
  %992 = vst [vmem:[#allocation2 + $0x20] sm:$0xff] %v984
  %993 = vst [vmem:[#allocation2 + $0x28] sm:$0xff] %v985
  %994 = vst [vmem:[#allocation2 + $0x30] sm:$0xff] %v986
  %995 = vst [vmem:[#allocation2 + $0x38] sm:$0xff] %v987
  // Predicated region
  $region26: #{classifier_forward.7} parent=0 // pred_check
    %p996 = pneg %p20
  $region27: #{classifier_forward.7} parent=0 // pred_check_branch
    %998 = sbr.rel (%p996) target = $region29
  $region28: #{classifier_forward.7} parent=0 // pred_region
    %v999 = vld [vmem:[#allocation2] sm:$0xff]
    %v1000 = vld [vmem:[#allocation2 + $0x8] sm:$0xff]
    %v1001 = vld [vmem:[#allocation2 + $0x10] sm:$0xff]
    %v1002 = vld [vmem:[#allocation2 + $0x18] sm:$0xff]
    %v1003 = vld [vmem:[#allocation2 + $0x20] sm:$0xff]
    %v1004 = vld [vmem:[#allocation2 + $0x28] sm:$0xff]
    %v1005 = vld [vmem:[#allocation2 + $0x30] sm:$0xff]
    %v1006 = vld [vmem:[#allocation2 + $0x38] sm:$0xff]
    %v1007 = vld [vmem:[%s2] sm:$0xff]
    %v1009 = vlaneseq
    %v1010 = vshrl.u32 %v1009, 7
    %v1011 = vsub.s32 0, %v1010
    %v1012 = vrot.slane %v1007, %v1011
    %v1013 = vlaneseq
    %v1014 = vshrl.u32 %v1013, 7
    %v1015 = vsub.s32 1, %v1014
    %v1016 = vrot.slane %v1007, %v1015
    %v1017 = vlaneseq
    %v1018 = vshrl.u32 %v1017, 7
    %v1019 = vsub.s32 2, %v1018
    %v1020 = vrot.slane %v1007, %v1019
    %v1021 = vlaneseq
    %v1022 = vshrl.u32 %v1021, 7
    %v1023 = vsub.s32 3, %v1022
    %v1024 = vrot.slane %v1007, %v1023
    %v1025 = vlaneseq
    %v1026 = vshrl.u32 %v1025, 7
    %v1027 = vsub.s32 4, %v1026
    %v1028 = vrot.slane %v1007, %v1027
    %v1029 = vlaneseq
    %v1030 = vshrl.u32 %v1029, 7
    %v1031 = vsub.s32 5, %v1030
    %v1032 = vrot.slane %v1007, %v1031
    %v1033 = vlaneseq
    %v1034 = vshrl.u32 %v1033, 7
    %v1035 = vsub.s32 6, %v1034
    %v1036 = vrot.slane %v1007, %v1035
    %v1037 = vlaneseq
    %v1038 = vshrl.u32 %v1037, 7
    %v1039 = vsub.s32 7, %v1038
    %v1040 = vrot.slane %v1007, %v1039
    %v1049 = vadd.f32 %v999, %v1012
    %v1050 = vadd.f32 %v1000, %v1016
    %v1051 = vadd.f32 %v1001, %v1020
    %v1052 = vadd.f32 %v1002, %v1024
    %v1053 = vadd.f32 %v1003, %v1028
    %v1054 = vadd.f32 %v1004, %v1032
    %v1055 = vadd.f32 %v1005, %v1036
    %v1056 = vadd.f32 %v1006, %v1040
    %v1057 = vmax.f32 %v1049, 0.0
    %v1058 = vmax.f32 %v1050, 0.0
    %v1059 = vmax.f32 %v1051, 0.0
    %v1060 = vmax.f32 %v1052, 0.0
    %v1061 = vmax.f32 %v1053, 0.0
    %v1062 = vmax.f32 %v1054, 0.0
    %v1063 = vmax.f32 %v1055, 0.0
    %v1064 = vmax.f32 %v1056, 0.0
    %v1065 = vld [vmem:[%s3] sm:$0xff]
    %v1066 = vld [vmem:[%s3 + $0x8] sm:$0xff]
    %v1067 = vld [vmem:[%s3 + $0x10] sm:$0xff]
    %v1068 = vld [vmem:[%s3 + $0x18] sm:$0xff]
    %v1069 = vld [vmem:[%s3 + $0x20] sm:$0xff]
    %v1070 = vld [vmem:[%s3 + $0x28] sm:$0xff]
    %v1071 = vld [vmem:[%s3 + $0x30] sm:$0xff]
    %v1072 = vld [vmem:[%s3 + $0x38] sm:$0xff]
    %v1073 = vld [vmem:[%s3 + $0x40] sm:$0xff]
    %v1074 = vld [vmem:[%s3 + $0x48] sm:$0xff]
    %v1075 = vld [vmem:[%s3 + $0x50] sm:$0xff]
    %v1076 = vld [vmem:[%s3 + $0x58] sm:$0xff]
    %v1077 = vld [vmem:[%s3 + $0x60] sm:$0xff]
    %v1078 = vld [vmem:[%s3 + $0x68] sm:$0xff]
    %v1079 = vld [vmem:[%s3 + $0x70] sm:$0xff]
    %v1080 = vld [vmem:[%s3 + $0x78] sm:$0xff]
    %v1081 = vld [vmem:[%s3 + $0x80] sm:$0xff]
    %v1082 = vld [vmem:[%s3 + $0x88] sm:$0xff]
    %v1083 = vld [vmem:[%s3 + $0x90] sm:$0xff]
    %v1084 = vld [vmem:[%s3 + $0x98] sm:$0xff]
    %v1085 = vld [vmem:[%s3 + $0xa0] sm:$0xff]
    %v1086 = vld [vmem:[%s3 + $0xa8] sm:$0xff]
    %v1087 = vld [vmem:[%s3 + $0xb0] sm:$0xff]
    %v1088 = vld [vmem:[%s3 + $0xb8] sm:$0xff]
    %v1089 = vld [vmem:[%s3 + $0xc0] sm:$0xff]
    %v1090 = vld [vmem:[%s3 + $0xc8] sm:$0xff]
    %v1091 = vld [vmem:[%s3 + $0xd0] sm:$0xff]
    %v1092 = vld [vmem:[%s3 + $0xd8] sm:$0xff]
    %v1093 = vld [vmem:[%s3 + $0xe0] sm:$0xff]
    %v1094 = vld [vmem:[%s3 + $0xe8] sm:$0xff]
    %v1095 = vld [vmem:[%s3 + $0xf0] sm:$0xff]
    %v1096 = vld [vmem:[%s3 + $0xf8] sm:$0xff]
    %v1097 = vld [vmem:[%s3 + $0x100] sm:$0xff]
    %v1098 = vld [vmem:[%s3 + $0x108] sm:$0xff]
    %v1099 = vld [vmem:[%s3 + $0x110] sm:$0xff]
    %v1100 = vld [vmem:[%s3 + $0x118] sm:$0xff]
    %v1101 = vld [vmem:[%s3 + $0x120] sm:$0xff]
    %v1102 = vld [vmem:[%s3 + $0x128] sm:$0xff]
    %v1103 = vld [vmem:[%s3 + $0x130] sm:$0xff]
    %v1104 = vld [vmem:[%s3 + $0x138] sm:$0xff]
    %v1105 = vld [vmem:[%s3 + $0x140] sm:$0xff]
    %v1106 = vld [vmem:[%s3 + $0x148] sm:$0xff]
    %v1107 = vld [vmem:[%s3 + $0x150] sm:$0xff]
    %v1108 = vld [vmem:[%s3 + $0x158] sm:$0xff]
    %v1109 = vld [vmem:[%s3 + $0x160] sm:$0xff]
    %v1110 = vld [vmem:[%s3 + $0x168] sm:$0xff]
    %v1111 = vld [vmem:[%s3 + $0x170] sm:$0xff]
    %v1112 = vld [vmem:[%s3 + $0x178] sm:$0xff]
    %v1113 = vld [vmem:[%s3 + $0x180] sm:$0xff]
    %v1114 = vld [vmem:[%s3 + $0x188] sm:$0xff]
    %v1115 = vld [vmem:[%s3 + $0x190] sm:$0xff]
    %v1116 = vld [vmem:[%s3 + $0x198] sm:$0xff]
    %v1117 = vld [vmem:[%s3 + $0x1a0] sm:$0xff]
    %v1118 = vld [vmem:[%s3 + $0x1a8] sm:$0xff]
    %v1119 = vld [vmem:[%s3 + $0x1b0] sm:$0xff]
    %v1120 = vld [vmem:[%s3 + $0x1b8] sm:$0xff]
    %v1121 = vld [vmem:[%s3 + $0x1c0] sm:$0xff]
    %v1122 = vld [vmem:[%s3 + $0x1c8] sm:$0xff]
    %v1123 = vld [vmem:[%s3 + $0x1d0] sm:$0xff]
    %v1124 = vld [vmem:[%s3 + $0x1d8] sm:$0xff]
    %v1125 = vld [vmem:[%s3 + $0x1e0] sm:$0xff]
    %v1126 = vld [vmem:[%s3 + $0x1e8] sm:$0xff]
    %v1127 = vld [vmem:[%s3 + $0x1f0] sm:$0xff]
    %v1128 = vld [vmem:[%s3 + $0x1f8] sm:$0xff]
    %v1129 = vld [vmem:[%s3 + $0x200] sm:$0xff]
    %v1130 = vld [vmem:[%s3 + $0x208] sm:$0xff]
    %v1131 = vld [vmem:[%s3 + $0x210] sm:$0xff]
    %v1132 = vld [vmem:[%s3 + $0x218] sm:$0xff]
    %v1133 = vld [vmem:[%s3 + $0x220] sm:$0xff]
    %v1134 = vld [vmem:[%s3 + $0x228] sm:$0xff]
    %v1135 = vld [vmem:[%s3 + $0x230] sm:$0xff]
    %v1136 = vld [vmem:[%s3 + $0x238] sm:$0xff]
    %v1137 = vld [vmem:[%s3 + $0x240] sm:$0xff]
    %v1138 = vld [vmem:[%s3 + $0x248] sm:$0xff]
    %v1139 = vld [vmem:[%s3 + $0x250] sm:$0xff]
    %v1140 = vld [vmem:[%s3 + $0x258] sm:$0xff]
    %v1141 = vld [vmem:[%s3 + $0x260] sm:$0xff]
    %v1142 = vld [vmem:[%s3 + $0x268] sm:$0xff]
    %v1143 = vld [vmem:[%s3 + $0x270] sm:$0xff]
    %v1144 = vld [vmem:[%s3 + $0x278] sm:$0xff]
    %v1145 = vld [vmem:[%s3 + $0x280] sm:$0xff]
    %v1146 = vld [vmem:[%s3 + $0x288] sm:$0xff]
    %v1147 = vld [vmem:[%s3 + $0x290] sm:$0xff]
    %v1148 = vld [vmem:[%s3 + $0x298] sm:$0xff]
    %v1149 = vld [vmem:[%s3 + $0x2a0] sm:$0xff]
    %v1150 = vld [vmem:[%s3 + $0x2a8] sm:$0xff]
    %v1151 = vld [vmem:[%s3 + $0x2b0] sm:$0xff]
    %v1152 = vld [vmem:[%s3 + $0x2b8] sm:$0xff]
    %v1153 = vld [vmem:[%s3 + $0x2c0] sm:$0xff]
    %v1154 = vld [vmem:[%s3 + $0x2c8] sm:$0xff]
    %v1155 = vld [vmem:[%s3 + $0x2d0] sm:$0xff]
    %v1156 = vld [vmem:[%s3 + $0x2d8] sm:$0xff]
    %v1157 = vld [vmem:[%s3 + $0x2e0] sm:$0xff]
    %v1158 = vld [vmem:[%s3 + $0x2e8] sm:$0xff]
    %v1159 = vld [vmem:[%s3 + $0x2f0] sm:$0xff]
    %v1160 = vld [vmem:[%s3 + $0x2f8] sm:$0xff]
    %v1161 = vld [vmem:[%s3 + $0x300] sm:$0xff]
    %v1162 = vld [vmem:[%s3 + $0x308] sm:$0xff]
    %v1163 = vld [vmem:[%s3 + $0x310] sm:$0xff]
    %v1164 = vld [vmem:[%s3 + $0x318] sm:$0xff]
    %v1165 = vld [vmem:[%s3 + $0x320] sm:$0xff]
    %v1166 = vld [vmem:[%s3 + $0x328] sm:$0xff]
    %v1167 = vld [vmem:[%s3 + $0x330] sm:$0xff]
    %v1168 = vld [vmem:[%s3 + $0x338] sm:$0xff]
    %v1169 = vld [vmem:[%s3 + $0x340] sm:$0xff]
    %v1170 = vld [vmem:[%s3 + $0x348] sm:$0xff]
    %v1171 = vld [vmem:[%s3 + $0x350] sm:$0xff]
    %v1172 = vld [vmem:[%s3 + $0x358] sm:$0xff]
    %v1173 = vld [vmem:[%s3 + $0x360] sm:$0xff]
    %v1174 = vld [vmem:[%s3 + $0x368] sm:$0xff]
    %v1175 = vld [vmem:[%s3 + $0x370] sm:$0xff]
    %v1176 = vld [vmem:[%s3 + $0x378] sm:$0xff]
    %v1177 = vld [vmem:[%s3 + $0x380] sm:$0xff]
    %v1178 = vld [vmem:[%s3 + $0x388] sm:$0xff]
    %v1179 = vld [vmem:[%s3 + $0x390] sm:$0xff]
    %v1180 = vld [vmem:[%s3 + $0x398] sm:$0xff]
    %v1181 = vld [vmem:[%s3 + $0x3a0] sm:$0xff]
    %v1182 = vld [vmem:[%s3 + $0x3a8] sm:$0xff]
    %v1183 = vld [vmem:[%s3 + $0x3b0] sm:$0xff]
    %v1184 = vld [vmem:[%s3 + $0x3b8] sm:$0xff]
    %v1185 = vld [vmem:[%s3 + $0x3c0] sm:$0xff]
    %v1186 = vld [vmem:[%s3 + $0x3c8] sm:$0xff]
    %v1187 = vld [vmem:[%s3 + $0x3d0] sm:$0xff]
    %v1188 = vld [vmem:[%s3 + $0x3d8] sm:$0xff]
    %v1189 = vld [vmem:[%s3 + $0x3e0] sm:$0xff]
    %v1190 = vld [vmem:[%s3 + $0x3e8] sm:$0xff]
    %v1191 = vld [vmem:[%s3 + $0x3f0] sm:$0xff]
    %v1192 = vld [vmem:[%s3 + $0x3f8] sm:$0xff]
    %v1193 = vld [vmem:[%s4] sm:$0x1]
    %v1195 = vlaneseq
    %v1196 = vshrl.u32 %v1195, 7
    %v1197 = vsub.s32 0, %v1196
    %v1198 = vrot.slane %v1193, %v1197
    %1200 = vmatprep.subr.mxu0 0.0
    %1201 = vmatpush1.msra.mxu0 %v1065
    %1202 = vmatprep.subr.mxu0 0.0
    %1203 = vmatpush1.msra.mxu0 %v1066
    %1204 = vmatprep.subr.mxu0 0.0
    %1205 = vmatpush1.msra.mxu0 %v1067
    %1206 = vmatprep.subr.mxu0 0.0
    %1207 = vmatpush1.msra.mxu0 %v1068
    %1208 = vmatprep.subr.mxu0 0.0
    %1209 = vmatpush1.msra.mxu0 %v1069
    %1210 = vmatprep.subr.mxu0 0.0
    %1211 = vmatpush1.msra.mxu0 %v1070
    %1212 = vmatprep.subr.mxu0 0.0
    %1213 = vmatpush1.msra.mxu0 %v1071
    %1214 = vmatprep.subr.mxu0 0.0
    %1215 = vmatpush1.msra.mxu0 %v1072
    %1216 = vmatprep.subr.mxu0 0.0
    %1217 = vmatpush1.msra.mxu0 %v1073
    %1218 = vmatprep.subr.mxu0 0.0
    %1219 = vmatpush1.msra.mxu0 %v1074
    %1220 = vmatprep.subr.mxu0 0.0
    %1221 = vmatpush1.msra.mxu0 %v1075
    %1222 = vmatprep.subr.mxu0 0.0
    %1223 = vmatpush1.msra.mxu0 %v1076
    %1224 = vmatprep.subr.mxu0 0.0
    %1225 = vmatpush1.msra.mxu0 %v1077
    %1226 = vmatprep.subr.mxu0 0.0
    %1227 = vmatpush1.msra.mxu0 %v1078
    %1228 = vmatprep.subr.mxu0 0.0
    %1229 = vmatpush1.msra.mxu0 %v1079
    %1230 = vmatprep.subr.mxu0 0.0
    %1231 = vmatpush1.msra.mxu0 %v1080
    %1232 = vmatprep.subr.mxu0 0.0
    %1233 = vmatpush1.msra.mxu0 %v1081
    %1234 = vmatprep.subr.mxu0 0.0
    %1235 = vmatpush1.msra.mxu0 %v1082
    %1236 = vmatprep.subr.mxu0 0.0
    %1237 = vmatpush1.msra.mxu0 %v1083
    %1238 = vmatprep.subr.mxu0 0.0
    %1239 = vmatpush1.msra.mxu0 %v1084
    %1240 = vmatprep.subr.mxu0 0.0
    %1241 = vmatpush1.msra.mxu0 %v1085
    %1242 = vmatprep.subr.mxu0 0.0
    %1243 = vmatpush1.msra.mxu0 %v1086
    %1244 = vmatprep.subr.mxu0 0.0
    %1245 = vmatpush1.msra.mxu0 %v1087
    %1246 = vmatprep.subr.mxu0 0.0
    %1247 = vmatpush1.msra.mxu0 %v1088
    %1248 = vmatprep.subr.mxu0 0.0
    %1249 = vmatpush1.msra.mxu0 %v1089
    %1250 = vmatprep.subr.mxu0 0.0
    %1251 = vmatpush1.msra.mxu0 %v1090
    %1252 = vmatprep.subr.mxu0 0.0
    %1253 = vmatpush1.msra.mxu0 %v1091
    %1254 = vmatprep.subr.mxu0 0.0
    %1255 = vmatpush1.msra.mxu0 %v1092
    %1256 = vmatprep.subr.mxu0 0.0
    %1257 = vmatpush1.msra.mxu0 %v1093
    %1258 = vmatprep.subr.mxu0 0.0
    %1259 = vmatpush1.msra.mxu0 %v1094
    %1260 = vmatprep.subr.mxu0 0.0
    %1261 = vmatpush1.msra.mxu0 %v1095
    %1262 = vmatprep.subr.mxu0 0.0
    %1263 = vmatpush1.msra.mxu0 %v1096
    %1264 = vmatprep.mubr.f32.mxu0 %v1058
    %1265 = vmatmul.mubr.f32.gmra.mrb[0].mxu0 %v1057
    %v1266 = vpop.f32.mrb[0].mxu0
    %v1267 = vadd.f32 %v1198, %v1266
    %v1268 = vpop.f32.mrb[0].mxu0
    %1269 = vdwg.mxu0
    %1270 = vmatprep.subr.mxu0 0.0
    %1271 = vmatpush1.msra.mxu0 %v1097
    %1272 = vmatprep.subr.mxu0 0.0
    %1273 = vmatpush1.msra.mxu0 %v1098
    %1274 = vmatprep.subr.mxu0 0.0
    %1275 = vmatpush1.msra.mxu0 %v1099
    %1276 = vmatprep.subr.mxu0 0.0
    %1277 = vmatpush1.msra.mxu0 %v1100
    %1278 = vmatprep.subr.mxu0 0.0
    %1279 = vmatpush1.msra.mxu0 %v1101
    %1280 = vmatprep.subr.mxu0 0.0
    %1281 = vmatpush1.msra.mxu0 %v1102
    %1282 = vmatprep.subr.mxu0 0.0
    %1283 = vmatpush1.msra.mxu0 %v1103
    %1284 = vmatprep.subr.mxu0 0.0
    %1285 = vmatpush1.msra.mxu0 %v1104
    %1286 = vmatprep.subr.mxu0 0.0
    %1287 = vmatpush1.msra.mxu0 %v1105
    %1288 = vmatprep.subr.mxu0 0.0
    %1289 = vmatpush1.msra.mxu0 %v1106
    %1290 = vmatprep.subr.mxu0 0.0
    %1291 = vmatpush1.msra.mxu0 %v1107
    %1292 = vmatprep.subr.mxu0 0.0
    %1293 = vmatpush1.msra.mxu0 %v1108
    %1294 = vmatprep.subr.mxu0 0.0
    %1295 = vmatpush1.msra.mxu0 %v1109
    %1296 = vmatprep.subr.mxu0 0.0
    %1297 = vmatpush1.msra.mxu0 %v1110
    %1298 = vmatprep.subr.mxu0 0.0
    %1299 = vmatpush1.msra.mxu0 %v1111
    %1300 = vmatprep.subr.mxu0 0.0
    %1301 = vmatpush1.msra.mxu0 %v1112
    %1302 = vmatprep.subr.mxu0 0.0
    %1303 = vmatpush1.msra.mxu0 %v1113
    %1304 = vmatprep.subr.mxu0 0.0
    %1305 = vmatpush1.msra.mxu0 %v1114
    %1306 = vmatprep.subr.mxu0 0.0
    %1307 = vmatpush1.msra.mxu0 %v1115
    %1308 = vmatprep.subr.mxu0 0.0
    %1309 = vmatpush1.msra.mxu0 %v1116
    %1310 = vmatprep.subr.mxu0 0.0
    %1311 = vmatpush1.msra.mxu0 %v1117
    %1312 = vmatprep.subr.mxu0 0.0
    %1313 = vmatpush1.msra.mxu0 %v1118
    %1314 = vmatprep.subr.mxu0 0.0
    %1315 = vmatpush1.msra.mxu0 %v1119
    %1316 = vmatprep.subr.mxu0 0.0
    %1317 = vmatpush1.msra.mxu0 %v1120
    %1318 = vmatprep.subr.mxu0 0.0
    %1319 = vmatpush1.msra.mxu0 %v1121
    %1320 = vmatprep.subr.mxu0 0.0
    %1321 = vmatpush1.msra.mxu0 %v1122
    %1322 = vmatprep.subr.mxu0 0.0
    %1323 = vmatpush1.msra.mxu0 %v1123
    %1324 = vmatprep.subr.mxu0 0.0
    %1325 = vmatpush1.msra.mxu0 %v1124
    %1326 = vmatprep.subr.mxu0 0.0
    %1327 = vmatpush1.msra.mxu0 %v1125
    %1328 = vmatprep.subr.mxu0 0.0
    %1329 = vmatpush1.msra.mxu0 %v1126
    %1330 = vmatprep.subr.mxu0 0.0
    %1331 = vmatpush1.msra.mxu0 %v1127
    %1332 = vmatprep.subr.mxu0 0.0
    %1333 = vmatpush1.msra.mxu0 %v1128
    %1334 = vmatprep.mubr.f32.mxu0 %v1060
    %1335 = vmatmul.mubr.f32.gmra.mrb[0].mxu0 %v1059
    %v1336 = vpop.f32.mrb[0].mxu0
    %v1337 = vadd.f32 %v1267, %v1336
    %v1338 = vpop.f32.mrb[0].mxu0
    %1339 = vdwg.mxu0
    %1340 = vmatprep.subr.mxu0 0.0
    %1341 = vmatpush1.msra.mxu0 %v1129
    %1342 = vmatprep.subr.mxu0 0.0
    %1343 = vmatpush1.msra.mxu0 %v1130
    %1344 = vmatprep.subr.mxu0 0.0
    %1345 = vmatpush1.msra.mxu0 %v1131
    %1346 = vmatprep.subr.mxu0 0.0
    %1347 = vmatpush1.msra.mxu0 %v1132
    %1348 = vmatprep.subr.mxu0 0.0
    %1349 = vmatpush1.msra.mxu0 %v1133
    %1350 = vmatprep.subr.mxu0 0.0
    %1351 = vmatpush1.msra.mxu0 %v1134
    %1352 = vmatprep.subr.mxu0 0.0
    %1353 = vmatpush1.msra.mxu0 %v1135
    %1354 = vmatprep.subr.mxu0 0.0
    %1355 = vmatpush1.msra.mxu0 %v1136
    %1356 = vmatprep.subr.mxu0 0.0
    %1357 = vmatpush1.msra.mxu0 %v1137
    %1358 = vmatprep.subr.mxu0 0.0
    %1359 = vmatpush1.msra.mxu0 %v1138
    %1360 = vmatprep.subr.mxu0 0.0
    %1361 = vmatpush1.msra.mxu0 %v1139
    %1362 = vmatprep.subr.mxu0 0.0
    %1363 = vmatpush1.msra.mxu0 %v1140
    %1364 = vmatprep.subr.mxu0 0.0
    %1365 = vmatpush1.msra.mxu0 %v1141
    %1366 = vmatprep.subr.mxu0 0.0
    %1367 = vmatpush1.msra.mxu0 %v1142
    %1368 = vmatprep.subr.mxu0 0.0
    %1369 = vmatpush1.msra.mxu0 %v1143
    %1370 = vmatprep.subr.mxu0 0.0
    %1371 = vmatpush1.msra.mxu0 %v1144
    %1372 = vmatprep.subr.mxu0 0.0
    %1373 = vmatpush1.msra.mxu0 %v1145
    %1374 = vmatprep.subr.mxu0 0.0
    %1375 = vmatpush1.msra.mxu0 %v1146
    %1376 = vmatprep.subr.mxu0 0.0
    %1377 = vmatpush1.msra.mxu0 %v1147
    %1378 = vmatprep.subr.mxu0 0.0
    %1379 = vmatpush1.msra.mxu0 %v1148
    %1380 = vmatprep.subr.mxu0 0.0
    %1381 = vmatpush1.msra.mxu0 %v1149
    %1382 = vmatprep.subr.mxu0 0.0
    %1383 = vmatpush1.msra.mxu0 %v1150
    %1384 = vmatprep.subr.mxu0 0.0
    %1385 = vmatpush1.msra.mxu0 %v1151
    %1386 = vmatprep.subr.mxu0 0.0
    %1387 = vmatpush1.msra.mxu0 %v1152
    %1388 = vmatprep.subr.mxu0 0.0
    %1389 = vmatpush1.msra.mxu0 %v1153
    %1390 = vmatprep.subr.mxu0 0.0
    %1391 = vmatpush1.msra.mxu0 %v1154
    %1392 = vmatprep.subr.mxu0 0.0
    %1393 = vmatpush1.msra.mxu0 %v1155
    %1394 = vmatprep.subr.mxu0 0.0
    %1395 = vmatpush1.msra.mxu0 %v1156
    %1396 = vmatprep.subr.mxu0 0.0
    %1397 = vmatpush1.msra.mxu0 %v1157
    %1398 = vmatprep.subr.mxu0 0.0
    %1399 = vmatpush1.msra.mxu0 %v1158
    %1400 = vmatprep.subr.mxu0 0.0
    %1401 = vmatpush1.msra.mxu0 %v1159
    %1402 = vmatprep.subr.mxu0 0.0
    %1403 = vmatpush1.msra.mxu0 %v1160
    %1404 = vmatprep.mubr.f32.mxu0 %v1062
    %1405 = vmatmul.mubr.f32.gmra.mrb[0].mxu0 %v1061
    %v1406 = vpop.f32.mrb[0].mxu0
    %v1407 = vadd.f32 %v1337, %v1406
    %v1408 = vpop.f32.mrb[0].mxu0
    %1409 = vdwg.mxu0
    %1410 = vmatprep.subr.mxu0 0.0
    %1411 = vmatpush1.msra.mxu0 %v1161
    %1412 = vmatprep.subr.mxu0 0.0
    %1413 = vmatpush1.msra.mxu0 %v1162
    %1414 = vmatprep.subr.mxu0 0.0
    %1415 = vmatpush1.msra.mxu0 %v1163
    %1416 = vmatprep.subr.mxu0 0.0
    %1417 = vmatpush1.msra.mxu0 %v1164
    %1418 = vmatprep.subr.mxu0 0.0
    %1419 = vmatpush1.msra.mxu0 %v1165
    %1420 = vmatprep.subr.mxu0 0.0
    %1421 = vmatpush1.msra.mxu0 %v1166
    %1422 = vmatprep.subr.mxu0 0.0
    %1423 = vmatpush1.msra.mxu0 %v1167
    %1424 = vmatprep.subr.mxu0 0.0
    %1425 = vmatpush1.msra.mxu0 %v1168
    %1426 = vmatprep.subr.mxu0 0.0
    %1427 = vmatpush1.msra.mxu0 %v1169
    %1428 = vmatprep.subr.mxu0 0.0
    %1429 = vmatpush1.msra.mxu0 %v1170
    %1430 = vmatprep.subr.mxu0 0.0
    %1431 = vmatpush1.msra.mxu0 %v1171
    %1432 = vmatprep.subr.mxu0 0.0
    %1433 = vmatpush1.msra.mxu0 %v1172
    %1434 = vmatprep.subr.mxu0 0.0
    %1435 = vmatpush1.msra.mxu0 %v1173
    %1436 = vmatprep.subr.mxu0 0.0
    %1437 = vmatpush1.msra.mxu0 %v1174
    %1438 = vmatprep.subr.mxu0 0.0
    %1439 = vmatpush1.msra.mxu0 %v1175
    %1440 = vmatprep.subr.mxu0 0.0
    %1441 = vmatpush1.msra.mxu0 %v1176
    %1442 = vmatprep.subr.mxu0 0.0
    %1443 = vmatpush1.msra.mxu0 %v1177
    %1444 = vmatprep.subr.mxu0 0.0
    %1445 = vmatpush1.msra.mxu0 %v1178
    %1446 = vmatprep.subr.mxu0 0.0
    %1447 = vmatpush1.msra.mxu0 %v1179
    %1448 = vmatprep.subr.mxu0 0.0
    %1449 = vmatpush1.msra.mxu0 %v1180
    %1450 = vmatprep.subr.mxu0 0.0
    %1451 = vmatpush1.msra.mxu0 %v1181
    %1452 = vmatprep.subr.mxu0 0.0
    %1453 = vmatpush1.msra.mxu0 %v1182
    %1454 = vmatprep.subr.mxu0 0.0
    %1455 = vmatpush1.msra.mxu0 %v1183
    %1456 = vmatprep.subr.mxu0 0.0
    %1457 = vmatpush1.msra.mxu0 %v1184
    %1458 = vmatprep.subr.mxu0 0.0
    %1459 = vmatpush1.msra.mxu0 %v1185
    %1460 = vmatprep.subr.mxu0 0.0
    %1461 = vmatpush1.msra.mxu0 %v1186
    %1462 = vmatprep.subr.mxu0 0.0
    %1463 = vmatpush1.msra.mxu0 %v1187
    %1464 = vmatprep.subr.mxu0 0.0
    %1465 = vmatpush1.msra.mxu0 %v1188
    %1466 = vmatprep.subr.mxu0 0.0
    %1467 = vmatpush1.msra.mxu0 %v1189
    %1468 = vmatprep.subr.mxu0 0.0
    %1469 = vmatpush1.msra.mxu0 %v1190
    %1470 = vmatprep.subr.mxu0 0.0
    %1471 = vmatpush1.msra.mxu0 %v1191
    %1472 = vmatprep.subr.mxu0 0.0
    %1473 = vmatpush1.msra.mxu0 %v1192
    %1474 = vmatprep.mubr.f32.mxu0 %v1064
    %1475 = vmatmul.mubr.f32.gmra.mrb[0].mxu0 %v1063
    %v1476 = vpop.f32.mrb[0].mxu0
    %v1477 = vadd.f32 %v1407, %v1476
    %v1478 = vpop.f32.mrb[0].mxu0
    %1479 = vdwg.mxu0
    %1480 = vst [vmem:[%s5] sm:$0xff] %v1477
  $region29: #{classifier_forward.7} parent=0 // pred_fallthru
    _
  // Predicated region
  $region30: #{classifier_forward.7} parent=0 // pred_check
    _
  $region31: #{classifier_forward.7} parent=0 // pred_check_branch
    %1482 = sbr.rel (0) target = $region33
  $region32: #{classifier_forward.7} parent=0 // pred_region
    _
  $region33: #{classifier_forward.7} parent=0 // pred_fallthru
    _
  // Predicated region
  $region34: #{classifier_forward.7} parent=0 // pred_check
    _
  $region35: #{classifier_forward.7} parent=0 // pred_check_branch
    %1484 = sbr.rel (0) target = $region37
  $region36: #{classifier_forward.7} parent=0 // pred_region
    _
  $region37: #{classifier_forward.7} parent=0 // pred_fallthru
    _

</llo_original>
